<compile_context>
chip_gen: v5e
topology: v5e:2x2
jax: 0.10.0
libtpu: 0.0.40
codegen_flags: <defaults>
</compile_context>

<pallas_src>
import jax
import jax.numpy as jnp
from jax.experimental import pallas as pl
from jax.experimental.pallas import tpu as pltpu

F32 = jnp.float32
BF16 = jnp.bfloat16

# ------------------------- config (small, consistent with module) ------------
BATCH = 2          # batch_size
N_CHANNEL = 4      # stem input channels
SPATIAL = 8        # H = W
PADDED = 16        # sublane-aligned halo grid holding the (H+2)x(W+2) padded conv1 output
STEM_DIM = 32      # stem_dim
ATT_HIDDEN = 512   # hardcoded: StackedAttention(stem_dim, 512)
CLS_HIDDEN = 1024  # hardcoded: Linear(stem_dim, 1024)
N_ANSWERS = 7      # classifier outputs n_answers + 1 = 8
VOCAB_SIZE = 16    # len(vocab['question_token_to_idx'])
SEQ_LEN = 8        # question length (question_size)
EMB_DIM = 32       # word-vector dim of the (unshown) LstmEncoder


# ------------------------------- fused kernel --------------------------------
def san_fused_kernel(patches1_ref, mask1_ref, w1_ref, b1_ref, w2_ref, b2_ref,
                     xemb_ref, wih_ref, whh_ref, lb_ref, sel_ref,
                     wv_ref, bv_ref, wu_ref, bu_ref, wp_ref, bp_ref,
                     cw1_ref, cb1_ref, cw2_ref, cb2_ref,
                     out_ref):
    N, H, W, D = BATCH, SPATIAL, SPATIAL, STEM_DIM
    P, T, K = PADDED, SEQ_LEN, ATT_HIDDEN
    HW = H * W

    # ---- stem conv1: one matmul over wrapper-built im2col patches (halo grid).
    a1 = jnp.dot(patches1_ref[...], w1_ref[...], preferred_element_type=F32) + b1_ref[...]
    a1 = jnp.maximum(a1, 0.0) * mask1_ref[...]       # ring mask == zero padding for conv2
    a1 = a1.reshape(N, P, P, D)                      # padded conv1 activation, in VMEM only

    # ---- stem conv2: 9 shifted-window matmuls accumulated in f32 (stays in VMEM).
    acc = jnp.zeros((N * HW, D), F32)
    for dy in range(3):
        for dx in range(3):
            patch = a1[:, dy:dy + H, dx:dx + W, :].reshape(N * HW, D)
            acc = acc + jnp.dot(patch, w2_ref[dy * 3 + dx],
                                preferred_element_type=F32)
    v_flat = jnp.maximum(acc + b2_ref[...], 0.0)     # (N*HW, D), rows ordered (n, h, w)

    # ---- LSTM encoder: input projection hoisted out of the serial recurrence.
    # xemb_ref is (T*N, E) with rows ordered (t, n).
    gx = jnp.dot(xemb_ref[...], wih_ref[...], preferred_element_type=F32) + lb_ref[...]
    h = jnp.zeros((N, D), F32)
    c = jnp.zeros((N, D), F32)
    q = jnp.zeros((N, D), F32)                       # one-hot-selected last hidden state
    for t in range(T):
        g = gx[t * N:(t + 1) * N, :] + jnp.dot(h, whh_ref[...],
                                               preferred_element_type=F32)
        i_g = jax.nn.sigmoid(g[:, 0 * D:1 * D])
        f_g = jax.nn.sigmoid(g[:, 1 * D:2 * D])
        g_g = jnp.tanh(g[:, 2 * D:3 * D])
        o_g = jax.nn.sigmoid(g[:, 3 * D:4 * D])
        c = f_g * c + i_g * g_g
        h = o_g * jnp.tanh(c)
        q = q + sel_ref[:, t:t + 1] * h              # == h at the last non-NULL token

    # ---- stacked attention (3 hops, shared weights); Wv projection hoisted.
    v_proj = (jnp.dot(v_flat.astype(BF16), wv_ref[...], preferred_element_type=F32)
              + bv_ref[...]).reshape(N, HW, K)
    v3 = v_flat.reshape(N, HW, D)
    wp_b = wp_ref[...][None]                         # (1, 1, K) for the lane reduce
    bp = bp_ref[0, 0]                                # scalar bias from SMEM (cancels in softmax)
    for _ in range(3):
        u = jnp.dot(q.astype(BF16), wu_ref[...], preferred_element_type=F32) + bu_ref[...]
        hA = jnp.tanh(v_proj + u[:, None, :])        # (N, HW, K)
        # Wp has output width 1 -> VPU multiply + lane reduction instead of MXU matvec.
        logits = jnp.sum(hA * wp_b, axis=-1) + bp    # (N, HW)
        m = jnp.max(logits, axis=1, keepdims=True)
        e = jnp.exp(logits - m)
        p = e * pl.reciprocal(jnp.sum(e, axis=1, keepdims=True), approx=True)
        v_tilde = jnp.einsum('nqh,nhd->nqd', p[:, None, :], v3,
                             preferred_element_type=F32)[:, 0, :]   # (N, D)
        q = v_tilde + q

    # ---- classifier: Linear -> ReLU -> Linear
    h1 = jnp.maximum(jnp.dot(q.astype(BF16), cw1_ref[...],
                             preferred_element_type=F32) + cb1_ref[...], 0.0)
    out_ref[...] = jnp.dot(h1, cw2_ref[...], preferred_element_type=F32) + cb2_ref[...]


# ------------------------------- wrapper --------------------------------------
def _im2col_3x3(xpad, out_h, out_w):
    # xpad: (N, out_h+2, out_w+2, C) -> (N, out_h, out_w, 9*C); tap-major, channel-minor.
    cols = [xpad[:, dy:dy + out_h, dx:dx + out_w, :]
            for dy in range(3) for dx in range(3)]
    return jnp.concatenate(cols, axis=-1)


def san_forward(params, feats_nchw, question):
    N, H, W, D = BATCH, SPATIAL, SPATIAL, STEM_DIM
    P, T = PADDED, SEQ_LEN

    # layout: feats arrive NCHW (PyTorch convention); kernel runs NHWC.
    x = jnp.transpose(feats_nchw, (0, 2, 3, 1)).astype(F32)

    # conv1 im2col over a PxP halo grid: grid (i,j) == zero-padded conv1 output position
    # (i-1, j-1); the border ring (and the unused i,j >= H+2 region) is masked to zero.
    xpad = jnp.pad(x, ((0, 0), (2, P - H), (2, P - W), (0, 0)))       # (N, P+2, P+2, C)
    patches1 = _im2col_3x3(xpad, P, P).reshape(N * P * P, 9 * N_CHANNEL)
    rng = jnp.arange(P)
    inside = (rng >= 1) & (rng <= H)
    mask2d = (inside[:, None] & inside[None, :]).astype(F32)          # (P, P)
    mask1 = jnp.broadcast_to(mask2d[None, :, :, None], (N, P, P, 1)).reshape(N * P * P, 1)

    # LstmEncoder glue: index of last non-NULL token (NULL == 0), CLEVR-baseline logic,
    # turned into a one-hot selector so the kernel never materializes all hidden states.
    mask_q = (question[:, :-1] != 0) & (question[:, 1:] == 0)
    idx = jnp.where(jnp.any(mask_q, axis=1), jnp.argmax(mask_q, axis=1), T - 1)
    sel = (jnp.arange(T)[None, :] == idx[:, None]).astype(F32)        # (N, T)

    x_emb = params['embed'][question]                                 # (N, T, E) gather (glue)
    xemb_t = jnp.transpose(x_emb, (1, 0, 2)).reshape(T * N, EMB_DIM)  # time-major rows

    # weight plumbing / bf16 casts for the large MXU operands
    w1f = params['stem_w1'].reshape(9 * N_CHANNEL, D)                 # (36, 32)
    wv = params['att_wv'].astype(BF16)
    wu = params['att_wu'].astype(BF16)
    wp_row = params['att_wp'].reshape(1, ATT_HIDDEN)                  # (1, K)
    cw1 = params['cls_w1'].astype(BF16)

    vmem = pl.BlockSpec(memory_space=pltpu.MemorySpace.VMEM)
    smem = pl.BlockSpec(memory_space=pltpu.MemorySpace.SMEM)
    in_specs = [vmem] * 16 + [smem] + [vmem] * 4                      # att_bp scalar in SMEM

    out = pl.pallas_call(
        san_fused_kernel,
        out_shape=jax.ShapeDtypeStruct((N, N_ANSWERS + 1), F32),
        in_specs=in_specs,
        out_specs=pl.BlockSpec(memory_space=pltpu.MemorySpace.VMEM),
    )(patches1, mask1, w1f, params['stem_b1'], params['stem_w2'], params['stem_b2'],
      xemb_t, params['lstm_wih'], params['lstm_whh'], params['lstm_b'], sel,
      wv, params['att_bv'], wu, params['att_bu'], wp_row, params['att_bp'],
      cw1, params['cls_b1'], params['cls_w2'], params['cls_b2'])
    return out


def init_params(key):
    ks = jax.random.split(key, 12)
    s = 0.05
    D, K, E, Hc = STEM_DIM, ATT_HIDDEN, EMB_DIM, CLS_HIDDEN
    return {
        'stem_w1': s * jax.random.normal(ks[0], (9, N_CHANNEL, D), F32),
        'stem_b1': jnp.zeros((1, D), F32),
        'stem_w2': s * jax.random.normal(ks[1], (9, D, D), F32),
        'stem_b2': jnp.zeros((1, D), F32),
        'embed':   s * jax.random.normal(ks[2], (VOCAB_SIZE, E), F32),
        'lstm_wih': s * jax.random.normal(ks[3], (E, 4 * D), F32),
        'lstm_whh': s * jax.random.normal(ks[4], (D, 4 * D), F32),
        'lstm_b':   jnp.zeros((1, 4 * D), F32),
        'att_wv':  s * jax.random.normal(ks[5], (D, K), F32),
        'att_bv':  jnp.zeros((1, K), F32),
        'att_wu':  s * jax.random.normal(ks[6], (D, K), F32),
        'att_bu':  jnp.zeros((1, K), F32),
        'att_wp':  s * jax.random.normal(ks[7], (K, 1), F32),
        'att_bp':  jnp.zeros((1, 1), F32),
        'cls_w1':  s * jax.random.normal(ks[8], (D, Hc), F32),
        'cls_b1':  jnp.zeros((1, Hc), F32),
        'cls_w2':  s * jax.random.normal(ks[9], (Hc, N_ANSWERS + 1), F32),
        'cls_b2':  jnp.zeros((1, N_ANSWERS + 1), F32),
    }


if __name__ == "__main__":
    key = jax.random.PRNGKey(0)
    k_feats, k_tok, k_param = jax.random.split(key, 3)

    feats = jax.random.normal(k_feats, (BATCH, N_CHANNEL, SPATIAL, SPATIAL), F32)
    tokens = jax.random.randint(k_tok, (BATCH, SEQ_LEN), 1, VOCAB_SIZE, dtype=jnp.int32)
    lengths = jnp.array([5, SEQ_LEN], dtype=jnp.int32)        # second row has no padding
    pos = jnp.arange(SEQ_LEN, dtype=jnp.int32)[None, :]
    question = jnp.where(pos < lengths[:, None], tokens, 0)   # NULL-padded question

    params = init_params(k_param)
    out = jax.jit(san_forward)(params, feats, question)
    out = jax.block_until_ready(out)
    assert out.shape == (BATCH, N_ANSWERS + 1) and out.dtype == F32
    print("KERNEL_OK")
</pallas_src>

<mosaic_0001>
module attributes {stable_mosaic.version = 11 : i64} {
  func.func @san_fused_kernel(%arg0: memref<512x36xf32, #tpu.memory_space<vmem>>, %arg1: memref<512x1xf32, #tpu.memory_space<vmem>>, %arg2: memref<36x32xf32, #tpu.memory_space<vmem>>, %arg3: memref<1x32xf32, #tpu.memory_space<vmem>>, %arg4: memref<9x32x32xf32, #tpu.memory_space<vmem>>, %arg5: memref<1x32xf32, #tpu.memory_space<vmem>>, %arg6: memref<16x32xf32, #tpu.memory_space<vmem>>, %arg7: memref<32x128xf32, #tpu.memory_space<vmem>>, %arg8: memref<32x128xf32, #tpu.memory_space<vmem>>, %arg9: memref<1x128xf32, #tpu.memory_space<vmem>>, %arg10: memref<2x8xf32, #tpu.memory_space<vmem>>, %arg11: memref<32x512xbf16, #tpu.memory_space<vmem>>, %arg12: memref<1x512xf32, #tpu.memory_space<vmem>>, %arg13: memref<32x512xbf16, #tpu.memory_space<vmem>>, %arg14: memref<1x512xf32, #tpu.memory_space<vmem>>, %arg15: memref<1x512xf32, #tpu.memory_space<vmem>>, %arg16: memref<1x1xf32, #tpu.memory_space<smem>>, %arg17: memref<32x1024xbf16, #tpu.memory_space<vmem>>, %arg18: memref<1x1024xf32, #tpu.memory_space<vmem>>, %arg19: memref<1024x8xf32, #tpu.memory_space<vmem>>, %arg20: memref<1x8xf32, #tpu.memory_space<vmem>>, %arg21: memref<2x8xf32, #tpu.memory_space<vmem>>) attributes {dimension_semantics = [], scalar_prefetch = 0 : i64, scratch_operands = 0 : i64, tpu.core_type = #tpu.core_type<tc>} {
    %c0 = arith.constant 0 : index
    %c0_0 = arith.constant 0 : index
    %0 = vector.load %arg0[%c0, %c0_0] : memref<512x36xf32, #tpu.memory_space<vmem>>, vector<512x36xf32>
    %c0_1 = arith.constant 0 : index
    %c0_2 = arith.constant 0 : index
    %1 = vector.load %arg2[%c0_1, %c0_2] : memref<36x32xf32, #tpu.memory_space<vmem>>, vector<36x32xf32>
    %cst = arith.constant dense<0.000000e+00> : vector<512x32xf32>
    %2 = tpu.matmul %0, %1, %cst {dimension_numbers = #tpu.dot_dimension_numbers<[1], [0], [0], [1], [0, 0, 1, 1], [], []>} : vector<512x36xf32>, vector<36x32xf32>, vector<512x32xf32> -> vector<512x32xf32>
    %c0_3 = arith.constant 0 : index
    %c0_4 = arith.constant 0 : index
    %3 = vector.load %arg3[%c0_3, %c0_4] : memref<1x32xf32, #tpu.memory_space<vmem>>, vector<1x32xf32>
    %4 = vector.broadcast %3 : vector<1x32xf32> to vector<512x32xf32>
    %5 = arith.addf %2, %4 : vector<512x32xf32>
    %cst_5 = arith.constant 0.000000e+00 : f32
    %6 = vector.broadcast %cst_5 : f32 to vector<512x32xf32>
    %7 = arith.maximumf %5, %6 : vector<512x32xf32>
    %c0_6 = arith.constant 0 : index
    %c0_7 = arith.constant 0 : index
    %8 = vector.load %arg1[%c0_6, %c0_7] : memref<512x1xf32, #tpu.memory_space<vmem>>, vector<512x1xf32>
    %9 = vector.broadcast %8 : vector<512x1xf32> to vector<512x32xf32>
    %10 = arith.mulf %7, %9 : vector<512x32xf32>
    %11 = vector.shape_cast %10 : vector<512x32xf32> to vector<2x16x16x32xf32>
    %cst_8 = arith.constant 0.000000e+00 : f32
    %12 = vector.broadcast %cst_8 : f32 to vector<128x32xf32>
    %13 = vector.extract_strided_slice %11 {offsets = [0, 0, 0, 0], sizes = [2, 8, 8, 32], strides = [1, 1, 1, 1]} : vector<2x16x16x32xf32> to vector<2x8x8x32xf32>
    %14 = vector.shape_cast %13 : vector<2x8x8x32xf32> to vector<128x32xf32>
    %c0_9 = arith.constant 0 : index
    %c0_10 = arith.constant 0 : index
    %c0_11 = arith.constant 0 : index
    %15 = vector.load %arg4[%c0_9, %c0_10, %c0_11] : memref<9x32x32xf32, #tpu.memory_space<vmem>>, vector<1x32x32xf32>
    %16 = vector.shape_cast %15 : vector<1x32x32xf32> to vector<32x32xf32>
    %cst_12 = arith.constant dense<0.000000e+00> : vector<128x32xf32>
    %17 = tpu.matmul %14, %16, %cst_12 {dimension_numbers = #tpu.dot_dimension_numbers<[1], [0], [0], [1], [0, 0, 1, 1], [], []>} : vector<128x32xf32>, vector<32x32xf32>, vector<128x32xf32> -> vector<128x32xf32>
    %18 = arith.addf %12, %17 : vector<128x32xf32>
    %19 = vector.extract_strided_slice %11 {offsets = [0, 0, 1, 0], sizes = [2, 8, 8, 32], strides = [1, 1, 1, 1]} : vector<2x16x16x32xf32> to vector<2x8x8x32xf32>
    %20 = vector.shape_cast %19 : vector<2x8x8x32xf32> to vector<128x32xf32>
    %c1 = arith.constant 1 : index
    %c0_13 = arith.constant 0 : index
    %c0_14 = arith.constant 0 : index
    %21 = vector.load %arg4[%c1, %c0_13, %c0_14] : memref<9x32x32xf32, #tpu.memory_space<vmem>>, vector<1x32x32xf32>
    %22 = vector.shape_cast %21 : vector<1x32x32xf32> to vector<32x32xf32>
    %cst_15 = arith.constant dense<0.000000e+00> : vector<128x32xf32>
    %23 = tpu.matmul %20, %22, %cst_15 {dimension_numbers = #tpu.dot_dimension_numbers<[1], [0], [0], [1], [0, 0, 1, 1], [], []>} : vector<128x32xf32>, vector<32x32xf32>, vector<128x32xf32> -> vector<128x32xf32>
    %24 = arith.addf %18, %23 : vector<128x32xf32>
    %25 = vector.extract_strided_slice %11 {offsets = [0, 0, 2, 0], sizes = [2, 8, 8, 32], strides = [1, 1, 1, 1]} : vector<2x16x16x32xf32> to vector<2x8x8x32xf32>
    %26 = vector.shape_cast %25 : vector<2x8x8x32xf32> to vector<128x32xf32>
    %c2 = arith.constant 2 : index
    %c0_16 = arith.constant 0 : index
    %c0_17 = arith.constant 0 : index
    %27 = vector.load %arg4[%c2, %c0_16, %c0_17] : memref<9x32x32xf32, #tpu.memory_space<vmem>>, vector<1x32x32xf32>
    %28 = vector.shape_cast %27 : vector<1x32x32xf32> to vector<32x32xf32>
    %cst_18 = arith.constant dense<0.000000e+00> : vector<128x32xf32>
    %29 = tpu.matmul %26, %28, %cst_18 {dimension_numbers = #tpu.dot_dimension_numbers<[1], [0], [0], [1], [0, 0, 1, 1], [], []>} : vector<128x32xf32>, vector<32x32xf32>, vector<128x32xf32> -> vector<128x32xf32>
    %30 = arith.addf %24, %29 : vector<128x32xf32>
    %31 = vector.extract_strided_slice %11 {offsets = [0, 1, 0, 0], sizes = [2, 8, 8, 32], strides = [1, 1, 1, 1]} : vector<2x16x16x32xf32> to vector<2x8x8x32xf32>
    %32 = vector.shape_cast %31 : vector<2x8x8x32xf32> to vector<128x32xf32>
    %c3 = arith.constant 3 : index
    %c0_19 = arith.constant 0 : index
    %c0_20 = arith.constant 0 : index
    %33 = vector.load %arg4[%c3, %c0_19, %c0_20] : memref<9x32x32xf32, #tpu.memory_space<vmem>>, vector<1x32x32xf32>
    %34 = vector.shape_cast %33 : vector<1x32x32xf32> to vector<32x32xf32>
    %cst_21 = arith.constant dense<0.000000e+00> : vector<128x32xf32>
    %35 = tpu.matmul %32, %34, %cst_21 {dimension_numbers = #tpu.dot_dimension_numbers<[1], [0], [0], [1], [0, 0, 1, 1], [], []>} : vector<128x32xf32>, vector<32x32xf32>, vector<128x32xf32> -> vector<128x32xf32>
    %36 = arith.addf %30, %35 : vector<128x32xf32>
    %37 = vector.extract_strided_slice %11 {offsets = [0, 1, 1, 0], sizes = [2, 8, 8, 32], strides = [1, 1, 1, 1]} : vector<2x16x16x32xf32> to vector<2x8x8x32xf32>
    %38 = vector.shape_cast %37 : vector<2x8x8x32xf32> to vector<128x32xf32>
    %c4 = arith.constant 4 : index
    %c0_22 = arith.constant 0 : index
    %c0_23 = arith.constant 0 : index
    %39 = vector.load %arg4[%c4, %c0_22, %c0_23] : memref<9x32x32xf32, #tpu.memory_space<vmem>>, vector<1x32x32xf32>
    %40 = vector.shape_cast %39 : vector<1x32x32xf32> to vector<32x32xf32>
    %cst_24 = arith.constant dense<0.000000e+00> : vector<128x32xf32>
    %41 = tpu.matmul %38, %40, %cst_24 {dimension_numbers = #tpu.dot_dimension_numbers<[1], [0], [0], [1], [0, 0, 1, 1], [], []>} : vector<128x32xf32>, vector<32x32xf32>, vector<128x32xf32> -> vector<128x32xf32>
    %42 = arith.addf %36, %41 : vector<128x32xf32>
    %43 = vector.extract_strided_slice %11 {offsets = [0, 1, 2, 0], sizes = [2, 8, 8, 32], strides = [1, 1, 1, 1]} : vector<2x16x16x32xf32> to vector<2x8x8x32xf32>
    %44 = vector.shape_cast %43 : vector<2x8x8x32xf32> to vector<128x32xf32>
    %c5 = arith.constant 5 : index
    %c0_25 = arith.constant 0 : index
    %c0_26 = arith.constant 0 : index
    %45 = vector.load %arg4[%c5, %c0_25, %c0_26] : memref<9x32x32xf32, #tpu.memory_space<vmem>>, vector<1x32x32xf32>
    %46 = vector.shape_cast %45 : vector<1x32x32xf32> to vector<32x32xf32>
    %cst_27 = arith.constant dense<0.000000e+00> : vector<128x32xf32>
    %47 = tpu.matmul %44, %46, %cst_27 {dimension_numbers = #tpu.dot_dimension_numbers<[1], [0], [0], [1], [0, 0, 1, 1], [], []>} : vector<128x32xf32>, vector<32x32xf32>, vector<128x32xf32> -> vector<128x32xf32>
    %48 = arith.addf %42, %47 : vector<128x32xf32>
    %49 = vector.extract_strided_slice %11 {offsets = [0, 2, 0, 0], sizes = [2, 8, 8, 32], strides = [1, 1, 1, 1]} : vector<2x16x16x32xf32> to vector<2x8x8x32xf32>
    %50 = vector.shape_cast %49 : vector<2x8x8x32xf32> to vector<128x32xf32>
    %c6 = arith.constant 6 : index
    %c0_28 = arith.constant 0 : index
    %c0_29 = arith.constant 0 : index
    %51 = vector.load %arg4[%c6, %c0_28, %c0_29] : memref<9x32x32xf32, #tpu.memory_space<vmem>>, vector<1x32x32xf32>
    %52 = vector.shape_cast %51 : vector<1x32x32xf32> to vector<32x32xf32>
    %cst_30 = arith.constant dense<0.000000e+00> : vector<128x32xf32>
    %53 = tpu.matmul %50, %52, %cst_30 {dimension_numbers = #tpu.dot_dimension_numbers<[1], [0], [0], [1], [0, 0, 1, 1], [], []>} : vector<128x32xf32>, vector<32x32xf32>, vector<128x32xf32> -> vector<128x32xf32>
    %54 = arith.addf %48, %53 : vector<128x32xf32>
    %55 = vector.extract_strided_slice %11 {offsets = [0, 2, 1, 0], sizes = [2, 8, 8, 32], strides = [1, 1, 1, 1]} : vector<2x16x16x32xf32> to vector<2x8x8x32xf32>
    %56 = vector.shape_cast %55 : vector<2x8x8x32xf32> to vector<128x32xf32>
    %c7 = arith.constant 7 : index
    %c0_31 = arith.constant 0 : index
    %c0_32 = arith.constant 0 : index
    %57 = vector.load %arg4[%c7, %c0_31, %c0_32] : memref<9x32x32xf32, #tpu.memory_space<vmem>>, vector<1x32x32xf32>
    %58 = vector.shape_cast %57 : vector<1x32x32xf32> to vector<32x32xf32>
    %cst_33 = arith.constant dense<0.000000e+00> : vector<128x32xf32>
    %59 = tpu.matmul %56, %58, %cst_33 {dimension_numbers = #tpu.dot_dimension_numbers<[1], [0], [0], [1], [0, 0, 1, 1], [], []>} : vector<128x32xf32>, vector<32x32xf32>, vector<128x32xf32> -> vector<128x32xf32>
    %60 = arith.addf %54, %59 : vector<128x32xf32>
    %61 = vector.extract_strided_slice %11 {offsets = [0, 2, 2, 0], sizes = [2, 8, 8, 32], strides = [1, 1, 1, 1]} : vector<2x16x16x32xf32> to vector<2x8x8x32xf32>
    %62 = vector.shape_cast %61 : vector<2x8x8x32xf32> to vector<128x32xf32>
    %c8 = arith.constant 8 : index
    %c0_34 = arith.constant 0 : index
    %c0_35 = arith.constant 0 : index
    %63 = vector.load %arg4[%c8, %c0_34, %c0_35] : memref<9x32x32xf32, #tpu.memory_space<vmem>>, vector<1x32x32xf32>
    %64 = vector.shape_cast %63 : vector<1x32x32xf32> to vector<32x32xf32>
    %cst_36 = arith.constant dense<0.000000e+00> : vector<128x32xf32>
    %65 = tpu.matmul %62, %64, %cst_36 {dimension_numbers = #tpu.dot_dimension_numbers<[1], [0], [0], [1], [0, 0, 1, 1], [], []>} : vector<128x32xf32>, vector<32x32xf32>, vector<128x32xf32> -> vector<128x32xf32>
    %66 = arith.addf %60, %65 : vector<128x32xf32>
    %c0_37 = arith.constant 0 : index
    %c0_38 = arith.constant 0 : index
    %67 = vector.load %arg5[%c0_37, %c0_38] : memref<1x32xf32, #tpu.memory_space<vmem>>, vector<1x32xf32>
    %68 = vector.broadcast %67 : vector<1x32xf32> to vector<128x32xf32>
    %69 = arith.addf %66, %68 : vector<128x32xf32>
    %cst_39 = arith.constant 0.000000e+00 : f32
    %70 = vector.broadcast %cst_39 : f32 to vector<128x32xf32>
    %71 = arith.maximumf %69, %70 : vector<128x32xf32>
    %c0_40 = arith.constant 0 : index
    %c0_41 = arith.constant 0 : index
    %72 = vector.load %arg6[%c0_40, %c0_41] : memref<16x32xf32, #tpu.memory_space<vmem>>, vector<16x32xf32>
    %c0_42 = arith.constant 0 : index
    %c0_43 = arith.constant 0 : index
    %73 = vector.load %arg7[%c0_42, %c0_43] : memref<32x128xf32, #tpu.memory_space<vmem>>, vector<32x128xf32>
    %cst_44 = arith.constant dense<0.000000e+00> : vector<16x128xf32>
    %74 = tpu.matmul %72, %73, %cst_44 {dimension_numbers = #tpu.dot_dimension_numbers<[1], [0], [0], [1], [0, 0, 1, 1], [], []>} : vector<16x32xf32>, vector<32x128xf32>, vector<16x128xf32> -> vector<16x128xf32>
    %c0_45 = arith.constant 0 : index
    %c0_46 = arith.constant 0 : index
    %75 = vector.load %arg9[%c0_45, %c0_46] : memref<1x128xf32, #tpu.memory_space<vmem>>, vector<1x128xf32>
    %76 = vector.broadcast %75 : vector<1x128xf32> to vector<16x128xf32>
    %77 = arith.addf %74, %76 : vector<16x128xf32>
    %cst_47 = arith.constant 0.000000e+00 : f32
    %78 = vector.broadcast %cst_47 : f32 to vector<2x32xf32>
    %cst_48 = arith.constant 0.000000e+00 : f32
    %79 = vector.broadcast %cst_48 : f32 to vector<2x32xf32>
    %cst_49 = arith.constant 0.000000e+00 : f32
    %80 = vector.broadcast %cst_49 : f32 to vector<2x32xf32>
    %81 = vector.extract_strided_slice %77 {offsets = [0, 0], sizes = [2, 128], strides = [1, 1]} : vector<16x128xf32> to vector<2x128xf32>
    %c0_50 = arith.constant 0 : index
    %c0_51 = arith.constant 0 : index
    %82 = vector.load %arg8[%c0_50, %c0_51] : memref<32x128xf32, #tpu.memory_space<vmem>>, vector<32x128xf32>
    %cst_52 = arith.constant dense<0.000000e+00> : vector<2x128xf32>
    %83 = tpu.matmul %78, %82, %cst_52 {dimension_numbers = #tpu.dot_dimension_numbers<[1], [0], [0], [1], [0, 0, 1, 1], [], []>} : vector<2x32xf32>, vector<32x128xf32>, vector<2x128xf32> -> vector<2x128xf32>
    %84 = arith.addf %81, %83 : vector<2x128xf32>
    %85 = vector.extract_strided_slice %84 {offsets = [0, 0], sizes = [2, 32], strides = [1, 1]} : vector<2x128xf32> to vector<2x32xf32>
    %86 = arith.negf %85 : vector<2x32xf32>
    %87 = math.exp %86 : vector<2x32xf32>
    %cst_53 = arith.constant 1.000000e+00 : f32
    %88 = vector.broadcast %cst_53 : f32 to vector<2x32xf32>
    %89 = arith.addf %88, %87 : vector<2x32xf32>
    %90 = arith.divf %88, %89 : vector<2x32xf32>
    %91 = vector.extract_strided_slice %84 {offsets = [0, 32], sizes = [2, 32], strides = [1, 1]} : vector<2x128xf32> to vector<2x32xf32>
    %92 = arith.negf %91 : vector<2x32xf32>
    %93 = math.exp %92 : vector<2x32xf32>
    %cst_54 = arith.constant 1.000000e+00 : f32
    %94 = vector.broadcast %cst_54 : f32 to vector<2x32xf32>
    %95 = arith.addf %94, %93 : vector<2x32xf32>
    %96 = arith.divf %94, %95 : vector<2x32xf32>
    %97 = vector.extract_strided_slice %84 {offsets = [0, 64], sizes = [2, 32], strides = [1, 1]} : vector<2x128xf32> to vector<2x32xf32>
    %98 = math.tanh %97 : vector<2x32xf32>
    %99 = vector.extract_strided_slice %84 {offsets = [0, 96], sizes = [2, 32], strides = [1, 1]} : vector<2x128xf32> to vector<2x32xf32>
    %100 = arith.negf %99 : vector<2x32xf32>
    %101 = math.exp %100 : vector<2x32xf32>
    %cst_55 = arith.constant 1.000000e+00 : f32
    %102 = vector.broadcast %cst_55 : f32 to vector<2x32xf32>
    %103 = arith.addf %102, %101 : vector<2x32xf32>
    %104 = arith.divf %102, %103 : vector<2x32xf32>
    %105 = arith.mulf %96, %79 : vector<2x32xf32>
    %106 = arith.mulf %90, %98 : vector<2x32xf32>
    %107 = arith.addf %105, %106 : vector<2x32xf32>
    %108 = math.tanh %107 : vector<2x32xf32>
    %109 = arith.mulf %104, %108 : vector<2x32xf32>
    %c0_56 = arith.constant 0 : index
    %c0_57 = arith.constant 0 : index
    %110 = vector.load %arg10[%c0_56, %c0_57] : memref<2x8xf32, #tpu.memory_space<vmem>>, vector<2x1xf32>
    %111 = vector.broadcast %110 : vector<2x1xf32> to vector<2x32xf32>
    %112 = arith.mulf %111, %109 : vector<2x32xf32>
    %113 = arith.addf %80, %112 : vector<2x32xf32>
    %114 = vector.extract_strided_slice %77 {offsets = [2, 0], sizes = [2, 128], strides = [1, 1]} : vector<16x128xf32> to vector<2x128xf32>
    %c0_58 = arith.constant 0 : index
    %c0_59 = arith.constant 0 : index
    %115 = vector.load %arg8[%c0_58, %c0_59] : memref<32x128xf32, #tpu.memory_space<vmem>>, vector<32x128xf32>
    %cst_60 = arith.constant dense<0.000000e+00> : vector<2x128xf32>
    %116 = tpu.matmul %109, %115, %cst_60 {dimension_numbers = #tpu.dot_dimension_numbers<[1], [0], [0], [1], [0, 0, 1, 1], [], []>} : vector<2x32xf32>, vector<32x128xf32>, vector<2x128xf32> -> vector<2x128xf32>
    %117 = arith.addf %114, %116 : vector<2x128xf32>
    %118 = vector.extract_strided_slice %117 {offsets = [0, 0], sizes = [2, 32], strides = [1, 1]} : vector<2x128xf32> to vector<2x32xf32>
    %119 = arith.negf %118 : vector<2x32xf32>
    %120 = math.exp %119 : vector<2x32xf32>
    %cst_61 = arith.constant 1.000000e+00 : f32
    %121 = vector.broadcast %cst_61 : f32 to vector<2x32xf32>
    %122 = arith.addf %121, %120 : vector<2x32xf32>
    %123 = arith.divf %121, %122 : vector<2x32xf32>
    %124 = vector.extract_strided_slice %117 {offsets = [0, 32], sizes = [2, 32], strides = [1, 1]} : vector<2x128xf32> to vector<2x32xf32>
    %125 = arith.negf %124 : vector<2x32xf32>
    %126 = math.exp %125 : vector<2x32xf32>
    %cst_62 = arith.constant 1.000000e+00 : f32
    %127 = vector.broadcast %cst_62 : f32 to vector<2x32xf32>
    %128 = arith.addf %127, %126 : vector<2x32xf32>
    %129 = arith.divf %127, %128 : vector<2x32xf32>
    %130 = vector.extract_strided_slice %117 {offsets = [0, 64], sizes = [2, 32], strides = [1, 1]} : vector<2x128xf32> to vector<2x32xf32>
    %131 = math.tanh %130 : vector<2x32xf32>
    %132 = vector.extract_strided_slice %117 {offsets = [0, 96], sizes = [2, 32], strides = [1, 1]} : vector<2x128xf32> to vector<2x32xf32>
    %133 = arith.negf %132 : vector<2x32xf32>
    %134 = math.exp %133 : vector<2x32xf32>
    %cst_63 = arith.constant 1.000000e+00 : f32
    %135 = vector.broadcast %cst_63 : f32 to vector<2x32xf32>
    %136 = arith.addf %135, %134 : vector<2x32xf32>
    %137 = arith.divf %135, %136 : vector<2x32xf32>
    %138 = arith.mulf %129, %107 : vector<2x32xf32>
    %139 = arith.mulf %123, %131 : vector<2x32xf32>
    %140 = arith.addf %138, %139 : vector<2x32xf32>
    %141 = math.tanh %140 : vector<2x32xf32>
    %142 = arith.mulf %137, %141 : vector<2x32xf32>
    %c0_64 = arith.constant 0 : index
    %c1_65 = arith.constant 1 : index
    %143 = vector.load %arg10[%c0_64, %c1_65] : memref<2x8xf32, #tpu.memory_space<vmem>>, vector<2x1xf32>
    %144 = vector.broadcast %143 : vector<2x1xf32> to vector<2x32xf32>
    %145 = arith.mulf %144, %142 : vector<2x32xf32>
    %146 = arith.addf %113, %145 : vector<2x32xf32>
    %147 = vector.extract_strided_slice %77 {offsets = [4, 0], sizes = [2, 128], strides = [1, 1]} : vector<16x128xf32> to vector<2x128xf32>
    %c0_66 = arith.constant 0 : index
    %c0_67 = arith.constant 0 : index
    %148 = vector.load %arg8[%c0_66, %c0_67] : memref<32x128xf32, #tpu.memory_space<vmem>>, vector<32x128xf32>
    %cst_68 = arith.constant dense<0.000000e+00> : vector<2x128xf32>
    %149 = tpu.matmul %142, %148, %cst_68 {dimension_numbers = #tpu.dot_dimension_numbers<[1], [0], [0], [1], [0, 0, 1, 1], [], []>} : vector<2x32xf32>, vector<32x128xf32>, vector<2x128xf32> -> vector<2x128xf32>
    %150 = arith.addf %147, %149 : vector<2x128xf32>
    %151 = vector.extract_strided_slice %150 {offsets = [0, 0], sizes = [2, 32], strides = [1, 1]} : vector<2x128xf32> to vector<2x32xf32>
    %152 = arith.negf %151 : vector<2x32xf32>
    %153 = math.exp %152 : vector<2x32xf32>
    %cst_69 = arith.constant 1.000000e+00 : f32
    %154 = vector.broadcast %cst_69 : f32 to vector<2x32xf32>
    %155 = arith.addf %154, %153 : vector<2x32xf32>
    %156 = arith.divf %154, %155 : vector<2x32xf32>
    %157 = vector.extract_strided_slice %150 {offsets = [0, 32], sizes = [2, 32], strides = [1, 1]} : vector<2x128xf32> to vector<2x32xf32>
    %158 = arith.negf %157 : vector<2x32xf32>
    %159 = math.exp %158 : vector<2x32xf32>
    %cst_70 = arith.constant 1.000000e+00 : f32
    %160 = vector.broadcast %cst_70 : f32 to vector<2x32xf32>
    %161 = arith.addf %160, %159 : vector<2x32xf32>
    %162 = arith.divf %160, %161 : vector<2x32xf32>
    %163 = vector.extract_strided_slice %150 {offsets = [0, 64], sizes = [2, 32], strides = [1, 1]} : vector<2x128xf32> to vector<2x32xf32>
    %164 = math.tanh %163 : vector<2x32xf32>
    %165 = vector.extract_strided_slice %150 {offsets = [0, 96], sizes = [2, 32], strides = [1, 1]} : vector<2x128xf32> to vector<2x32xf32>
    %166 = arith.negf %165 : vector<2x32xf32>
    %167 = math.exp %166 : vector<2x32xf32>
    %cst_71 = arith.constant 1.000000e+00 : f32
    %168 = vector.broadcast %cst_71 : f32 to vector<2x32xf32>
    %169 = arith.addf %168, %167 : vector<2x32xf32>
    %170 = arith.divf %168, %169 : vector<2x32xf32>
    %171 = arith.mulf %162, %140 : vector<2x32xf32>
    %172 = arith.mulf %156, %164 : vector<2x32xf32>
    %173 = arith.addf %171, %172 : vector<2x32xf32>
    %174 = math.tanh %173 : vector<2x32xf32>
    %175 = arith.mulf %170, %174 : vector<2x32xf32>
    %c0_72 = arith.constant 0 : index
    %c2_73 = arith.constant 2 : index
    %176 = vector.load %arg10[%c0_72, %c2_73] : memref<2x8xf32, #tpu.memory_space<vmem>>, vector<2x1xf32>
    %177 = vector.broadcast %176 : vector<2x1xf32> to vector<2x32xf32>
    %178 = arith.mulf %177, %175 : vector<2x32xf32>
    %179 = arith.addf %146, %178 : vector<2x32xf32>
    %180 = vector.extract_strided_slice %77 {offsets = [6, 0], sizes = [2, 128], strides = [1, 1]} : vector<16x128xf32> to vector<2x128xf32>
    %c0_74 = arith.constant 0 : index
    %c0_75 = arith.constant 0 : index
    %181 = vector.load %arg8[%c0_74, %c0_75] : memref<32x128xf32, #tpu.memory_space<vmem>>, vector<32x128xf32>
    %cst_76 = arith.constant dense<0.000000e+00> : vector<2x128xf32>
    %182 = tpu.matmul %175, %181, %cst_76 {dimension_numbers = #tpu.dot_dimension_numbers<[1], [0], [0], [1], [0, 0, 1, 1], [], []>} : vector<2x32xf32>, vector<32x128xf32>, vector<2x128xf32> -> vector<2x128xf32>
    %183 = arith.addf %180, %182 : vector<2x128xf32>
    %184 = vector.extract_strided_slice %183 {offsets = [0, 0], sizes = [2, 32], strides = [1, 1]} : vector<2x128xf32> to vector<2x32xf32>
    %185 = arith.negf %184 : vector<2x32xf32>
    %186 = math.exp %185 : vector<2x32xf32>
    %cst_77 = arith.constant 1.000000e+00 : f32
    %187 = vector.broadcast %cst_77 : f32 to vector<2x32xf32>
    %188 = arith.addf %187, %186 : vector<2x32xf32>
    %189 = arith.divf %187, %188 : vector<2x32xf32>
    %190 = vector.extract_strided_slice %183 {offsets = [0, 32], sizes = [2, 32], strides = [1, 1]} : vector<2x128xf32> to vector<2x32xf32>
    %191 = arith.negf %190 : vector<2x32xf32>
    %192 = math.exp %191 : vector<2x32xf32>
    %cst_78 = arith.constant 1.000000e+00 : f32
    %193 = vector.broadcast %cst_78 : f32 to vector<2x32xf32>
    %194 = arith.addf %193, %192 : vector<2x32xf32>
    %195 = arith.divf %193, %194 : vector<2x32xf32>
    %196 = vector.extract_strided_slice %183 {offsets = [0, 64], sizes = [2, 32], strides = [1, 1]} : vector<2x128xf32> to vector<2x32xf32>
    %197 = math.tanh %196 : vector<2x32xf32>
    %198 = vector.extract_strided_slice %183 {offsets = [0, 96], sizes = [2, 32], strides = [1, 1]} : vector<2x128xf32> to vector<2x32xf32>
    %199 = arith.negf %198 : vector<2x32xf32>
    %200 = math.exp %199 : vector<2x32xf32>
    %cst_79 = arith.constant 1.000000e+00 : f32
    %201 = vector.broadcast %cst_79 : f32 to vector<2x32xf32>
    %202 = arith.addf %201, %200 : vector<2x32xf32>
    %203 = arith.divf %201, %202 : vector<2x32xf32>
    %204 = arith.mulf %195, %173 : vector<2x32xf32>
    %205 = arith.mulf %189, %197 : vector<2x32xf32>
    %206 = arith.addf %204, %205 : vector<2x32xf32>
    %207 = math.tanh %206 : vector<2x32xf32>
    %208 = arith.mulf %203, %207 : vector<2x32xf32>
    %c0_80 = arith.constant 0 : index
    %c3_81 = arith.constant 3 : index
    %209 = vector.load %arg10[%c0_80, %c3_81] : memref<2x8xf32, #tpu.memory_space<vmem>>, vector<2x1xf32>
    %210 = vector.broadcast %209 : vector<2x1xf32> to vector<2x32xf32>
    %211 = arith.mulf %210, %208 : vector<2x32xf32>
    %212 = arith.addf %179, %211 : vector<2x32xf32>
    %213 = vector.extract_strided_slice %77 {offsets = [8, 0], sizes = [2, 128], strides = [1, 1]} : vector<16x128xf32> to vector<2x128xf32>
    %c0_82 = arith.constant 0 : index
    %c0_83 = arith.constant 0 : index
    %214 = vector.load %arg8[%c0_82, %c0_83] : memref<32x128xf32, #tpu.memory_space<vmem>>, vector<32x128xf32>
    %cst_84 = arith.constant dense<0.000000e+00> : vector<2x128xf32>
    %215 = tpu.matmul %208, %214, %cst_84 {dimension_numbers = #tpu.dot_dimension_numbers<[1], [0], [0], [1], [0, 0, 1, 1], [], []>} : vector<2x32xf32>, vector<32x128xf32>, vector<2x128xf32> -> vector<2x128xf32>
    %216 = arith.addf %213, %215 : vector<2x128xf32>
    %217 = vector.extract_strided_slice %216 {offsets = [0, 0], sizes = [2, 32], strides = [1, 1]} : vector<2x128xf32> to vector<2x32xf32>
    %218 = arith.negf %217 : vector<2x32xf32>
    %219 = math.exp %218 : vector<2x32xf32>
    %cst_85 = arith.constant 1.000000e+00 : f32
    %220 = vector.broadcast %cst_85 : f32 to vector<2x32xf32>
    %221 = arith.addf %220, %219 : vector<2x32xf32>
    %222 = arith.divf %220, %221 : vector<2x32xf32>
    %223 = vector.extract_strided_slice %216 {offsets = [0, 32], sizes = [2, 32], strides = [1, 1]} : vector<2x128xf32> to vector<2x32xf32>
    %224 = arith.negf %223 : vector<2x32xf32>
    %225 = math.exp %224 : vector<2x32xf32>
    %cst_86 = arith.constant 1.000000e+00 : f32
    %226 = vector.broadcast %cst_86 : f32 to vector<2x32xf32>
    %227 = arith.addf %226, %225 : vector<2x32xf32>
    %228 = arith.divf %226, %227 : vector<2x32xf32>
    %229 = vector.extract_strided_slice %216 {offsets = [0, 64], sizes = [2, 32], strides = [1, 1]} : vector<2x128xf32> to vector<2x32xf32>
    %230 = math.tanh %229 : vector<2x32xf32>
    %231 = vector.extract_strided_slice %216 {offsets = [0, 96], sizes = [2, 32], strides = [1, 1]} : vector<2x128xf32> to vector<2x32xf32>
    %232 = arith.negf %231 : vector<2x32xf32>
    %233 = math.exp %232 : vector<2x32xf32>
    %cst_87 = arith.constant 1.000000e+00 : f32
    %234 = vector.broadcast %cst_87 : f32 to vector<2x32xf32>
    %235 = arith.addf %234, %233 : vector<2x32xf32>
    %236 = arith.divf %234, %235 : vector<2x32xf32>
    %237 = arith.mulf %228, %206 : vector<2x32xf32>
    %238 = arith.mulf %222, %230 : vector<2x32xf32>
    %239 = arith.addf %237, %238 : vector<2x32xf32>
    %240 = math.tanh %239 : vector<2x32xf32>
    %241 = arith.mulf %236, %240 : vector<2x32xf32>
    %c0_88 = arith.constant 0 : index
    %c4_89 = arith.constant 4 : index
    %242 = vector.load %arg10[%c0_88, %c4_89] : memref<2x8xf32, #tpu.memory_space<vmem>>, vector<2x1xf32>
    %243 = vector.broadcast %242 : vector<2x1xf32> to vector<2x32xf32>
    %244 = arith.mulf %243, %241 : vector<2x32xf32>
    %245 = arith.addf %212, %244 : vector<2x32xf32>
    %246 = vector.extract_strided_slice %77 {offsets = [10, 0], sizes = [2, 128], strides = [1, 1]} : vector<16x128xf32> to vector<2x128xf32>
    %c0_90 = arith.constant 0 : index
    %c0_91 = arith.constant 0 : index
    %247 = vector.load %arg8[%c0_90, %c0_91] : memref<32x128xf32, #tpu.memory_space<vmem>>, vector<32x128xf32>
    %cst_92 = arith.constant dense<0.000000e+00> : vector<2x128xf32>
    %248 = tpu.matmul %241, %247, %cst_92 {dimension_numbers = #tpu.dot_dimension_numbers<[1], [0], [0], [1], [0, 0, 1, 1], [], []>} : vector<2x32xf32>, vector<32x128xf32>, vector<2x128xf32> -> vector<2x128xf32>
    %249 = arith.addf %246, %248 : vector<2x128xf32>
    %250 = vector.extract_strided_slice %249 {offsets = [0, 0], sizes = [2, 32], strides = [1, 1]} : vector<2x128xf32> to vector<2x32xf32>
    %251 = arith.negf %250 : vector<2x32xf32>
    %252 = math.exp %251 : vector<2x32xf32>
    %cst_93 = arith.constant 1.000000e+00 : f32
    %253 = vector.broadcast %cst_93 : f32 to vector<2x32xf32>
    %254 = arith.addf %253, %252 : vector<2x32xf32>
    %255 = arith.divf %253, %254 : vector<2x32xf32>
    %256 = vector.extract_strided_slice %249 {offsets = [0, 32], sizes = [2, 32], strides = [1, 1]} : vector<2x128xf32> to vector<2x32xf32>
    %257 = arith.negf %256 : vector<2x32xf32>
    %258 = math.exp %257 : vector<2x32xf32>
    %cst_94 = arith.constant 1.000000e+00 : f32
    %259 = vector.broadcast %cst_94 : f32 to vector<2x32xf32>
    %260 = arith.addf %259, %258 : vector<2x32xf32>
    %261 = arith.divf %259, %260 : vector<2x32xf32>
    %262 = vector.extract_strided_slice %249 {offsets = [0, 64], sizes = [2, 32], strides = [1, 1]} : vector<2x128xf32> to vector<2x32xf32>
    %263 = math.tanh %262 : vector<2x32xf32>
    %264 = vector.extract_strided_slice %249 {offsets = [0, 96], sizes = [2, 32], strides = [1, 1]} : vector<2x128xf32> to vector<2x32xf32>
    %265 = arith.negf %264 : vector<2x32xf32>
    %266 = math.exp %265 : vector<2x32xf32>
    %cst_95 = arith.constant 1.000000e+00 : f32
    %267 = vector.broadcast %cst_95 : f32 to vector<2x32xf32>
    %268 = arith.addf %267, %266 : vector<2x32xf32>
    %269 = arith.divf %267, %268 : vector<2x32xf32>
    %270 = arith.mulf %261, %239 : vector<2x32xf32>
    %271 = arith.mulf %255, %263 : vector<2x32xf32>
    %272 = arith.addf %270, %271 : vector<2x32xf32>
    %273 = math.tanh %272 : vector<2x32xf32>
    %274 = arith.mulf %269, %273 : vector<2x32xf32>
    %c0_96 = arith.constant 0 : index
    %c5_97 = arith.constant 5 : index
    %275 = vector.load %arg10[%c0_96, %c5_97] : memref<2x8xf32, #tpu.memory_space<vmem>>, vector<2x1xf32>
    %276 = vector.broadcast %275 : vector<2x1xf32> to vector<2x32xf32>
    %277 = arith.mulf %276, %274 : vector<2x32xf32>
    %278 = arith.addf %245, %277 : vector<2x32xf32>
    %279 = vector.extract_strided_slice %77 {offsets = [12, 0], sizes = [2, 128], strides = [1, 1]} : vector<16x128xf32> to vector<2x128xf32>
    %c0_98 = arith.constant 0 : index
    %c0_99 = arith.constant 0 : index
    %280 = vector.load %arg8[%c0_98, %c0_99] : memref<32x128xf32, #tpu.memory_space<vmem>>, vector<32x128xf32>
    %cst_100 = arith.constant dense<0.000000e+00> : vector<2x128xf32>
    %281 = tpu.matmul %274, %280, %cst_100 {dimension_numbers = #tpu.dot_dimension_numbers<[1], [0], [0], [1], [0, 0, 1, 1], [], []>} : vector<2x32xf32>, vector<32x128xf32>, vector<2x128xf32> -> vector<2x128xf32>
    %282 = arith.addf %279, %281 : vector<2x128xf32>
    %283 = vector.extract_strided_slice %282 {offsets = [0, 0], sizes = [2, 32], strides = [1, 1]} : vector<2x128xf32> to vector<2x32xf32>
    %284 = arith.negf %283 : vector<2x32xf32>
    %285 = math.exp %284 : vector<2x32xf32>
    %cst_101 = arith.constant 1.000000e+00 : f32
    %286 = vector.broadcast %cst_101 : f32 to vector<2x32xf32>
    %287 = arith.addf %286, %285 : vector<2x32xf32>
    %288 = arith.divf %286, %287 : vector<2x32xf32>
    %289 = vector.extract_strided_slice %282 {offsets = [0, 32], sizes = [2, 32], strides = [1, 1]} : vector<2x128xf32> to vector<2x32xf32>
    %290 = arith.negf %289 : vector<2x32xf32>
    %291 = math.exp %290 : vector<2x32xf32>
    %cst_102 = arith.constant 1.000000e+00 : f32
    %292 = vector.broadcast %cst_102 : f32 to vector<2x32xf32>
    %293 = arith.addf %292, %291 : vector<2x32xf32>
    %294 = arith.divf %292, %293 : vector<2x32xf32>
    %295 = vector.extract_strided_slice %282 {offsets = [0, 64], sizes = [2, 32], strides = [1, 1]} : vector<2x128xf32> to vector<2x32xf32>
    %296 = math.tanh %295 : vector<2x32xf32>
    %297 = vector.extract_strided_slice %282 {offsets = [0, 96], sizes = [2, 32], strides = [1, 1]} : vector<2x128xf32> to vector<2x32xf32>
    %298 = arith.negf %297 : vector<2x32xf32>
    %299 = math.exp %298 : vector<2x32xf32>
    %cst_103 = arith.constant 1.000000e+00 : f32
    %300 = vector.broadcast %cst_103 : f32 to vector<2x32xf32>
    %301 = arith.addf %300, %299 : vector<2x32xf32>
    %302 = arith.divf %300, %301 : vector<2x32xf32>
    %303 = arith.mulf %294, %272 : vector<2x32xf32>
    %304 = arith.mulf %288, %296 : vector<2x32xf32>
    %305 = arith.addf %303, %304 : vector<2x32xf32>
    %306 = math.tanh %305 : vector<2x32xf32>
    %307 = arith.mulf %302, %306 : vector<2x32xf32>
    %c0_104 = arith.constant 0 : index
    %c6_105 = arith.constant 6 : index
    %308 = vector.load %arg10[%c0_104, %c6_105] : memref<2x8xf32, #tpu.memory_space<vmem>>, vector<2x1xf32>
    %309 = vector.broadcast %308 : vector<2x1xf32> to vector<2x32xf32>
    %310 = arith.mulf %309, %307 : vector<2x32xf32>
    %311 = arith.addf %278, %310 : vector<2x32xf32>
    %312 = vector.extract_strided_slice %77 {offsets = [14, 0], sizes = [2, 128], strides = [1, 1]} : vector<16x128xf32> to vector<2x128xf32>
    %c0_106 = arith.constant 0 : index
    %c0_107 = arith.constant 0 : index
    %313 = vector.load %arg8[%c0_106, %c0_107] : memref<32x128xf32, #tpu.memory_space<vmem>>, vector<32x128xf32>
    %cst_108 = arith.constant dense<0.000000e+00> : vector<2x128xf32>
    %314 = tpu.matmul %307, %313, %cst_108 {dimension_numbers = #tpu.dot_dimension_numbers<[1], [0], [0], [1], [0, 0, 1, 1], [], []>} : vector<2x32xf32>, vector<32x128xf32>, vector<2x128xf32> -> vector<2x128xf32>
    %315 = arith.addf %312, %314 : vector<2x128xf32>
    %316 = vector.extract_strided_slice %315 {offsets = [0, 0], sizes = [2, 32], strides = [1, 1]} : vector<2x128xf32> to vector<2x32xf32>
    %317 = arith.negf %316 : vector<2x32xf32>
    %318 = math.exp %317 : vector<2x32xf32>
    %cst_109 = arith.constant 1.000000e+00 : f32
    %319 = vector.broadcast %cst_109 : f32 to vector<2x32xf32>
    %320 = arith.addf %319, %318 : vector<2x32xf32>
    %321 = arith.divf %319, %320 : vector<2x32xf32>
    %322 = vector.extract_strided_slice %315 {offsets = [0, 32], sizes = [2, 32], strides = [1, 1]} : vector<2x128xf32> to vector<2x32xf32>
    %323 = arith.negf %322 : vector<2x32xf32>
    %324 = math.exp %323 : vector<2x32xf32>
    %cst_110 = arith.constant 1.000000e+00 : f32
    %325 = vector.broadcast %cst_110 : f32 to vector<2x32xf32>
    %326 = arith.addf %325, %324 : vector<2x32xf32>
    %327 = arith.divf %325, %326 : vector<2x32xf32>
    %328 = vector.extract_strided_slice %315 {offsets = [0, 64], sizes = [2, 32], strides = [1, 1]} : vector<2x128xf32> to vector<2x32xf32>
    %329 = math.tanh %328 : vector<2x32xf32>
    %330 = vector.extract_strided_slice %315 {offsets = [0, 96], sizes = [2, 32], strides = [1, 1]} : vector<2x128xf32> to vector<2x32xf32>
    %331 = arith.negf %330 : vector<2x32xf32>
    %332 = math.exp %331 : vector<2x32xf32>
    %cst_111 = arith.constant 1.000000e+00 : f32
    %333 = vector.broadcast %cst_111 : f32 to vector<2x32xf32>
    %334 = arith.addf %333, %332 : vector<2x32xf32>
    %335 = arith.divf %333, %334 : vector<2x32xf32>
    %336 = arith.mulf %327, %305 : vector<2x32xf32>
    %337 = arith.mulf %321, %329 : vector<2x32xf32>
    %338 = arith.addf %336, %337 : vector<2x32xf32>
    %339 = math.tanh %338 : vector<2x32xf32>
    %340 = arith.mulf %335, %339 : vector<2x32xf32>
    %c0_112 = arith.constant 0 : index
    %c7_113 = arith.constant 7 : index
    %341 = vector.load %arg10[%c0_112, %c7_113] : memref<2x8xf32, #tpu.memory_space<vmem>>, vector<2x1xf32>
    %342 = vector.broadcast %341 : vector<2x1xf32> to vector<2x32xf32>
    %343 = arith.mulf %342, %340 : vector<2x32xf32>
    %344 = arith.addf %311, %343 : vector<2x32xf32>
    %345 = arith.truncf %71 : vector<128x32xf32> to vector<128x32xbf16>
    %c0_114 = arith.constant 0 : index
    %c0_115 = arith.constant 0 : index
    %346 = vector.load %arg11[%c0_114, %c0_115] : memref<32x512xbf16, #tpu.memory_space<vmem>>, vector<32x512xbf16>
    %cst_116 = arith.constant dense<0.000000e+00> : vector<128x512xf32>
    %347 = tpu.matmul %345, %346, %cst_116 {dimension_numbers = #tpu.dot_dimension_numbers<[1], [0], [0], [1], [0, 0, 1, 1], [], []>} : vector<128x32xbf16>, vector<32x512xbf16>, vector<128x512xf32> -> vector<128x512xf32>
    %c0_117 = arith.constant 0 : index
    %c0_118 = arith.constant 0 : index
    %348 = vector.load %arg12[%c0_117, %c0_118] : memref<1x512xf32, #tpu.memory_space<vmem>>, vector<1x512xf32>
    %349 = vector.broadcast %348 : vector<1x512xf32> to vector<128x512xf32>
    %350 = arith.addf %347, %349 : vector<128x512xf32>
    %351 = vector.shape_cast %350 : vector<128x512xf32> to vector<2x64x512xf32>
    %352 = vector.shape_cast %71 : vector<128x32xf32> to vector<2x64x32xf32>
    %c0_119 = arith.constant 0 : index
    %c0_120 = arith.constant 0 : index
    %353 = vector.load %arg15[%c0_119, %c0_120] : memref<1x512xf32, #tpu.memory_space<vmem>>, vector<1x512xf32>
    %354 = vector.shape_cast %353 : vector<1x512xf32> to vector<1x1x512xf32>
    %c0_121 = arith.constant 0 : index
    %c0_122 = arith.constant 0 : index
    %355 = memref.load %arg16[%c0_121, %c0_122] : memref<1x1xf32, #tpu.memory_space<smem>>
    %356 = arith.truncf %344 : vector<2x32xf32> to vector<2x32xbf16>
    %c0_123 = arith.constant 0 : index
    %c0_124 = arith.constant 0 : index
    %357 = vector.load %arg13[%c0_123, %c0_124] : memref<32x512xbf16, #tpu.memory_space<vmem>>, vector<32x512xbf16>
    %cst_125 = arith.constant dense<0.000000e+00> : vector<2x512xf32>
    %358 = tpu.matmul %356, %357, %cst_125 {dimension_numbers = #tpu.dot_dimension_numbers<[1], [0], [0], [1], [0, 0, 1, 1], [], []>} : vector<2x32xbf16>, vector<32x512xbf16>, vector<2x512xf32> -> vector<2x512xf32>
    %c0_126 = arith.constant 0 : index
    %c0_127 = arith.constant 0 : index
    %359 = vector.load %arg14[%c0_126, %c0_127] : memref<1x512xf32, #tpu.memory_space<vmem>>, vector<1x512xf32>
    %360 = vector.broadcast %359 : vector<1x512xf32> to vector<2x512xf32>
    %361 = arith.addf %358, %360 : vector<2x512xf32>
    %362 = vector.shape_cast %361 : vector<2x512xf32> to vector<2x1x512xf32>
    %363 = vector.broadcast %362 : vector<2x1x512xf32> to vector<2x64x512xf32>
    %364 = arith.addf %351, %363 : vector<2x64x512xf32>
    %365 = math.tanh %364 : vector<2x64x512xf32>
    %366 = vector.broadcast %354 : vector<1x1x512xf32> to vector<2x64x512xf32>
    %367 = arith.mulf %365, %366 : vector<2x64x512xf32>
    %cst_128 = arith.constant dense<0.000000e+00> : vector<2x64xf32>
    %368 = vector.multi_reduction <add>, %367, %cst_128 [2] : vector<2x64x512xf32> to vector<2x64xf32>
    %369 = vector.broadcast %355 : f32 to vector<2x64xf32>
    %370 = arith.addf %368, %369 : vector<2x64xf32>
    %cst_129 = arith.constant dense<0xFF800000> : vector<2xf32>
    %371 = vector.multi_reduction <maximumf>, %370, %cst_129 [1] : vector<2x64xf32> to vector<2xf32>
    %372 = vector.shape_cast %371 : vector<2xf32> to vector<2x1xf32>
    %373 = vector.broadcast %372 : vector<2x1xf32> to vector<2x64xf32>
    %374 = arith.subf %370, %373 : vector<2x64xf32>
    %375 = math.exp %374 : vector<2x64xf32>
    %cst_130 = arith.constant dense<0.000000e+00> : vector<2xf32>
    %376 = vector.multi_reduction <add>, %375, %cst_130 [1] : vector<2x64xf32> to vector<2xf32>
    %377 = vector.shape_cast %376 : vector<2xf32> to vector<2x1xf32>
    %378 = tpu.reciprocal %377 {approx = true} : vector<2x1xf32> -> vector<2x1xf32>
    %379 = vector.broadcast %378 : vector<2x1xf32> to vector<2x64xf32>
    %380 = arith.mulf %375, %379 : vector<2x64xf32>
    %381 = vector.shape_cast %380 : vector<2x64xf32> to vector<2x1x64xf32>
    "tpu.trace_start"() <{level = 10 : i32, message = "nqh,nhd->nqd"}> : () -> ()
    %cst_131 = arith.constant dense<0.000000e+00> : vector<2x1x32xf32>
    %382 = tpu.matmul %381, %352, %cst_131 {dimension_numbers = #tpu.dot_dimension_numbers<[2], [1], [1], [2], [0, 0, 0, 1, 1, 2], [0], [0]>} : vector<2x1x64xf32>, vector<2x64x32xf32>, vector<2x1x32xf32> -> vector<2x1x32xf32>
    "tpu.trace_stop"() : () -> ()
    %383 = vector.shape_cast %382 : vector<2x1x32xf32> to vector<2x32xf32>
    %384 = arith.addf %383, %344 : vector<2x32xf32>
    %385 = arith.truncf %384 : vector<2x32xf32> to vector<2x32xbf16>
    %c0_132 = arith.constant 0 : index
    %c0_133 = arith.constant 0 : index
    %386 = vector.load %arg13[%c0_132, %c0_133] : memref<32x512xbf16, #tpu.memory_space<vmem>>, vector<32x512xbf16>
    %cst_134 = arith.constant dense<0.000000e+00> : vector<2x512xf32>
    %387 = tpu.matmul %385, %386, %cst_134 {dimension_numbers = #tpu.dot_dimension_numbers<[1], [0], [0], [1], [0, 0, 1, 1], [], []>} : vector<2x32xbf16>, vector<32x512xbf16>, vector<2x512xf32> -> vector<2x512xf32>
    %c0_135 = arith.constant 0 : index
    %c0_136 = arith.constant 0 : index
    %388 = vector.load %arg14[%c0_135, %c0_136] : memref<1x512xf32, #tpu.memory_space<vmem>>, vector<1x512xf32>
    %389 = vector.broadcast %388 : vector<1x512xf32> to vector<2x512xf32>
    %390 = arith.addf %387, %389 : vector<2x512xf32>
    %391 = vector.shape_cast %390 : vector<2x512xf32> to vector<2x1x512xf32>
    %392 = vector.broadcast %391 : vector<2x1x512xf32> to vector<2x64x512xf32>
    %393 = arith.addf %351, %392 : vector<2x64x512xf32>
    %394 = math.tanh %393 : vector<2x64x512xf32>
    %395 = vector.broadcast %354 : vector<1x1x512xf32> to vector<2x64x512xf32>
    %396 = arith.mulf %394, %395 : vector<2x64x512xf32>
    %cst_137 = arith.constant dense<0.000000e+00> : vector<2x64xf32>
    %397 = vector.multi_reduction <add>, %396, %cst_137 [2] : vector<2x64x512xf32> to vector<2x64xf32>
    %398 = vector.broadcast %355 : f32 to vector<2x64xf32>
    %399 = arith.addf %397, %398 : vector<2x64xf32>
    %cst_138 = arith.constant dense<0xFF800000> : vector<2xf32>
    %400 = vector.multi_reduction <maximumf>, %399, %cst_138 [1] : vector<2x64xf32> to vector<2xf32>
    %401 = vector.shape_cast %400 : vector<2xf32> to vector<2x1xf32>
    %402 = vector.broadcast %401 : vector<2x1xf32> to vector<2x64xf32>
    %403 = arith.subf %399, %402 : vector<2x64xf32>
    %404 = math.exp %403 : vector<2x64xf32>
    %cst_139 = arith.constant dense<0.000000e+00> : vector<2xf32>
    %405 = vector.multi_reduction <add>, %404, %cst_139 [1] : vector<2x64xf32> to vector<2xf32>
    %406 = vector.shape_cast %405 : vector<2xf32> to vector<2x1xf32>
    %407 = tpu.reciprocal %406 {approx = true} : vector<2x1xf32> -> vector<2x1xf32>
    %408 = vector.broadcast %407 : vector<2x1xf32> to vector<2x64xf32>
    %409 = arith.mulf %404, %408 : vector<2x64xf32>
    %410 = vector.shape_cast %409 : vector<2x64xf32> to vector<2x1x64xf32>
    "tpu.trace_start"() <{level = 10 : i32, message = "nqh,nhd->nqd"}> : () -> ()
    %cst_140 = arith.constant dense<0.000000e+00> : vector<2x1x32xf32>
    %411 = tpu.matmul %410, %352, %cst_140 {dimension_numbers = #tpu.dot_dimension_numbers<[2], [1], [1], [2], [0, 0, 0, 1, 1, 2], [0], [0]>} : vector<2x1x64xf32>, vector<2x64x32xf32>, vector<2x1x32xf32> -> vector<2x1x32xf32>
    "tpu.trace_stop"() : () -> ()
    %412 = vector.shape_cast %411 : vector<2x1x32xf32> to vector<2x32xf32>
    %413 = arith.addf %412, %384 : vector<2x32xf32>
    %414 = arith.truncf %413 : vector<2x32xf32> to vector<2x32xbf16>
    %c0_141 = arith.constant 0 : index
    %c0_142 = arith.constant 0 : index
    %415 = vector.load %arg13[%c0_141, %c0_142] : memref<32x512xbf16, #tpu.memory_space<vmem>>, vector<32x512xbf16>
    %cst_143 = arith.constant dense<0.000000e+00> : vector<2x512xf32>
    %416 = tpu.matmul %414, %415, %cst_143 {dimension_numbers = #tpu.dot_dimension_numbers<[1], [0], [0], [1], [0, 0, 1, 1], [], []>} : vector<2x32xbf16>, vector<32x512xbf16>, vector<2x512xf32> -> vector<2x512xf32>
    %c0_144 = arith.constant 0 : index
    %c0_145 = arith.constant 0 : index
    %417 = vector.load %arg14[%c0_144, %c0_145] : memref<1x512xf32, #tpu.memory_space<vmem>>, vector<1x512xf32>
    %418 = vector.broadcast %417 : vector<1x512xf32> to vector<2x512xf32>
    %419 = arith.addf %416, %418 : vector<2x512xf32>
    %420 = vector.shape_cast %419 : vector<2x512xf32> to vector<2x1x512xf32>
    %421 = vector.broadcast %420 : vector<2x1x512xf32> to vector<2x64x512xf32>
    %422 = arith.addf %351, %421 : vector<2x64x512xf32>
    %423 = math.tanh %422 : vector<2x64x512xf32>
    %424 = vector.broadcast %354 : vector<1x1x512xf32> to vector<2x64x512xf32>
    %425 = arith.mulf %423, %424 : vector<2x64x512xf32>
    %cst_146 = arith.constant dense<0.000000e+00> : vector<2x64xf32>
    %426 = vector.multi_reduction <add>, %425, %cst_146 [2] : vector<2x64x512xf32> to vector<2x64xf32>
    %427 = vector.broadcast %355 : f32 to vector<2x64xf32>
    %428 = arith.addf %426, %427 : vector<2x64xf32>
    %cst_147 = arith.constant dense<0xFF800000> : vector<2xf32>
    %429 = vector.multi_reduction <maximumf>, %428, %cst_147 [1] : vector<2x64xf32> to vector<2xf32>
    %430 = vector.shape_cast %429 : vector<2xf32> to vector<2x1xf32>
    %431 = vector.broadcast %430 : vector<2x1xf32> to vector<2x64xf32>
    %432 = arith.subf %428, %431 : vector<2x64xf32>
    %433 = math.exp %432 : vector<2x64xf32>
    %cst_148 = arith.constant dense<0.000000e+00> : vector<2xf32>
    %434 = vector.multi_reduction <add>, %433, %cst_148 [1] : vector<2x64xf32> to vector<2xf32>
    %435 = vector.shape_cast %434 : vector<2xf32> to vector<2x1xf32>
    %436 = tpu.reciprocal %435 {approx = true} : vector<2x1xf32> -> vector<2x1xf32>
    %437 = vector.broadcast %436 : vector<2x1xf32> to vector<2x64xf32>
    %438 = arith.mulf %433, %437 : vector<2x64xf32>
    %439 = vector.shape_cast %438 : vector<2x64xf32> to vector<2x1x64xf32>
    "tpu.trace_start"() <{level = 10 : i32, message = "nqh,nhd->nqd"}> : () -> ()
    %cst_149 = arith.constant dense<0.000000e+00> : vector<2x1x32xf32>
    %440 = tpu.matmul %439, %352, %cst_149 {dimension_numbers = #tpu.dot_dimension_numbers<[2], [1], [1], [2], [0, 0, 0, 1, 1, 2], [0], [0]>} : vector<2x1x64xf32>, vector<2x64x32xf32>, vector<2x1x32xf32> -> vector<2x1x32xf32>
    "tpu.trace_stop"() : () -> ()
    %441 = vector.shape_cast %440 : vector<2x1x32xf32> to vector<2x32xf32>
    %442 = arith.addf %441, %413 : vector<2x32xf32>
    %443 = arith.truncf %442 : vector<2x32xf32> to vector<2x32xbf16>
    %c0_150 = arith.constant 0 : index
    %c0_151 = arith.constant 0 : index
    %444 = vector.load %arg17[%c0_150, %c0_151] : memref<32x1024xbf16, #tpu.memory_space<vmem>>, vector<32x1024xbf16>
    %cst_152 = arith.constant dense<0.000000e+00> : vector<2x1024xf32>
    %445 = tpu.matmul %443, %444, %cst_152 {dimension_numbers = #tpu.dot_dimension_numbers<[1], [0], [0], [1], [0, 0, 1, 1], [], []>} : vector<2x32xbf16>, vector<32x1024xbf16>, vector<2x1024xf32> -> vector<2x1024xf32>
    %c0_153 = arith.constant 0 : index
    %c0_154 = arith.constant 0 : index
    %446 = vector.load %arg18[%c0_153, %c0_154] : memref<1x1024xf32, #tpu.memory_space<vmem>>, vector<1x1024xf32>
    %447 = vector.broadcast %446 : vector<1x1024xf32> to vector<2x1024xf32>
    %448 = arith.addf %445, %447 : vector<2x1024xf32>
    %cst_155 = arith.constant 0.000000e+00 : f32
    %449 = vector.broadcast %cst_155 : f32 to vector<2x1024xf32>
    %450 = arith.maximumf %448, %449 : vector<2x1024xf32>
    %c0_156 = arith.constant 0 : index
    %c0_157 = arith.constant 0 : index
    %451 = vector.load %arg19[%c0_156, %c0_157] : memref<1024x8xf32, #tpu.memory_space<vmem>>, vector<1024x8xf32>
    %cst_158 = arith.constant dense<0.000000e+00> : vector<2x8xf32>
    %452 = tpu.matmul %450, %451, %cst_158 {dimension_numbers = #tpu.dot_dimension_numbers<[1], [0], [0], [1], [0, 0, 1, 1], [], []>} : vector<2x1024xf32>, vector<1024x8xf32>, vector<2x8xf32> -> vector<2x8xf32>
    %c0_159 = arith.constant 0 : index
    %c0_160 = arith.constant 0 : index
    %453 = vector.load %arg20[%c0_159, %c0_160] : memref<1x8xf32, #tpu.memory_space<vmem>>, vector<1x8xf32>
    %454 = vector.broadcast %453 : vector<1x8xf32> to vector<2x8xf32>
    %455 = arith.addf %452, %454 : vector<2x8xf32>
    %c0_161 = arith.constant 0 : index
    %c0_162 = arith.constant 0 : index
    %456 = vector.load %arg21[%c0_161, %c0_162] : memref<2x8xf32, #tpu.memory_space<vmem>>, vector<2x8xf32>
    tpu.vector_store %arg21[%c0_161, %c0_162], %455 {strides = array<i32>} : memref<2x8xf32, #tpu.memory_space<vmem>>, vector<2x8xf32>,
    return
  }
}

</mosaic_0001>

<llo_original>
// kernel: san_forward.1
$region0: #{san_forward.1}
  #allocation0 [shape = 'u32[]', space=smem, size = 0x4, offset = 0x4, fixed_abs, tag = 'smem constant byte address 0x4 - core index']
  #allocation1 [shape = 'u32[72,128]{1,0:T(1,128)}', space=vmem, size = 0x9000, scoped, tag = 'internal scratch']
  #allocation2 [shape = 'f32[1,1]{1,0:T(1,128)S(6)}', space=smem, size = 0x200, scoped, tag = 'scoped memory for san_forward.1']
  %s0 = inlined_call_operand.vmem [shape: f32[512,36], index: 0, kind: input, shape index: {}]
  %s1 = inlined_call_operand.vmem [shape: f32[512,1], index: 1, kind: input, shape index: {}]
  %s2 = inlined_call_operand.vmem [shape: f32[36,32], index: 2, kind: input, shape index: {}]
  %s3 = inlined_call_operand.vmem [shape: f32[1,32], index: 3, kind: input, shape index: {}]
  %s4 = inlined_call_operand.vmem [shape: f32[9,32,32], index: 4, kind: input, shape index: {}]
  %s5 = inlined_call_operand.vmem [shape: f32[1,32], index: 5, kind: input, shape index: {}]
  %s6 = inlined_call_operand.vmem [shape: f32[16,32], index: 6, kind: input, shape index: {}]
  %s7 = inlined_call_operand.vmem [shape: f32[32,128], index: 7, kind: input, shape index: {}]
  %s8 = inlined_call_operand.vmem [shape: f32[32,128], index: 8, kind: input, shape index: {}]
  %s9 = inlined_call_operand.vmem [shape: f32[1,128], index: 9, kind: input, shape index: {}]
  %s10 = inlined_call_operand.vmem [shape: f32[2,8], index: 10, kind: input, shape index: {}]
  %s11 = inlined_call_operand.vmem [shape: bf16[32,512], index: 11, kind: input, shape index: {}]
  %s12 = inlined_call_operand.vmem [shape: f32[1,512], index: 12, kind: input, shape index: {}]
  %s13 = inlined_call_operand.vmem [shape: bf16[32,512], index: 13, kind: input, shape index: {}]
  %s14 = inlined_call_operand.vmem [shape: f32[1,512], index: 14, kind: input, shape index: {}]
  %s15 = inlined_call_operand.vmem [shape: f32[1,512], index: 15, kind: input, shape index: {}]
  %s16 = inlined_call_operand.<no memory space> [shape: f32[1,1], index: 16, kind: input, shape index: {}]
  %s17 = inlined_call_operand.vmem [shape: bf16[32,1024], index: 17, kind: input, shape index: {}]
  %s18 = inlined_call_operand.vmem [shape: f32[1,1024], index: 18, kind: input, shape index: {}]
  %s19 = inlined_call_operand.vmem [shape: f32[1024,8], index: 19, kind: input, shape index: {}]
  %s20 = inlined_call_operand.vmem [shape: f32[1,8], index: 20, kind: input, shape index: {}]
  %s21 = inlined_call_operand.hbm [shape: f32[2,8], index: 21, kind: output, shape index: {}]
  %s22 = sld [smem:[#allocation0]]
  $region94: #{san_forward.1} parent=0
    _
  %s24 = ssub.s32 1, %s22
  %s25 = scalar_select 0, %s24, %s22
  %26 = sst [smem:[#allocation2]] %s16
  $region1: #{san_forward.1} parent=0
    #allocation3 [shape = 'u8[1024]{0}', space=vmem, size = 0x400, scoped, tag = 'output window, operand 0, single buffered']
    #allocation4 [shape = 's32[1]{0}', space=sflag, size = 0x4, scoped, tag = 'scoped memory for san_forward.1']
    %27 = vsyncpa [#allocation4], 0
    // Predicated region
    $region2: #{san_forward.1} parent=1 // pred_check
      _
    $region3: #{san_forward.1} parent=1 // pred_check_branch
      %29 = sbr.rel (0) target = $region5
    $region4: #{san_forward.1} parent=1 // pred_region
      _
    $region5: #{san_forward.1} parent=1 // pred_fallthru
      _
    // Predicated region
    $region6: #{san_forward.1} parent=1 // pred_check
      _
    $region7: #{san_forward.1} parent=1 // pred_check_branch
      %31 = sbr.rel (0) target = $region9
    $region8: #{san_forward.1} parent=1 // pred_region
      _
    $region9: #{san_forward.1} parent=1 // pred_fallthru
      _
    // Predicated region
    $region10: #{san_forward.1} parent=1 // pred_check
      _
    $region11: #{san_forward.1} parent=1 // pred_check_branch
      %33 = sbr.rel (0) target = $region13
    $region12: #{san_forward.1} parent=1 // pred_region
      _
    $region13: #{san_forward.1} parent=1 // pred_fallthru
      _
    // Predicated region
    $region14: #{san_forward.1} parent=1 // pred_check
      _
    $region15: #{san_forward.1} parent=1 // pred_check_branch
      %35 = sbr.rel (0) target = $region17
    $region16: #{san_forward.1} parent=1 // pred_region
      _
    $region17: #{san_forward.1} parent=1 // pred_fallthru
      _
    // Predicated region
    $region18: #{san_forward.1} parent=1 // pred_check
      _
    $region19: #{san_forward.1} parent=1 // pred_check_branch
      %37 = sbr.rel (0) target = $region21
    $region20: #{san_forward.1} parent=1 // pred_region
      _
    $region21: #{san_forward.1} parent=1 // pred_fallthru
      _
    // Predicated region
    $region22: #{san_forward.1} parent=1 // pred_check
      _
    $region23: #{san_forward.1} parent=1 // pred_check_branch
      %39 = sbr.rel (0) target = $region25
    $region24: #{san_forward.1} parent=1 // pred_region
      _
    $region25: #{san_forward.1} parent=1 // pred_fallthru
      _
    // Predicated region
    $region26: #{san_forward.1} parent=1 // pred_check
      _
    $region27: #{san_forward.1} parent=1 // pred_check_branch
      %41 = sbr.rel (0) target = $region29
    $region28: #{san_forward.1} parent=1 // pred_region
      _
    $region29: #{san_forward.1} parent=1 // pred_fallthru
      _
    // Predicated region
    $region30: #{san_forward.1} parent=1 // pred_check
      _
    $region31: #{san_forward.1} parent=1 // pred_check_branch
      %43 = sbr.rel (0) target = $region33
    $region32: #{san_forward.1} parent=1 // pred_region
      _
    $region33: #{san_forward.1} parent=1 // pred_fallthru
      _
    // Predicated region
    $region34: #{san_forward.1} parent=1 // pred_check
      _
    $region35: #{san_forward.1} parent=1 // pred_check_branch
      %45 = sbr.rel (0) target = $region37
    $region36: #{san_forward.1} parent=1 // pred_region
      _
    $region37: #{san_forward.1} parent=1 // pred_fallthru
      _
    // Predicated region
    $region38: #{san_forward.1} parent=1 // pred_check
      _
    $region39: #{san_forward.1} parent=1 // pred_check_branch
      %47 = sbr.rel (0) target = $region41
    $region40: #{san_forward.1} parent=1 // pred_region
      _
    $region41: #{san_forward.1} parent=1 // pred_fallthru
      _
    // Predicated region
    $region42: #{san_forward.1} parent=1 // pred_check
      _
    $region43: #{san_forward.1} parent=1 // pred_check_branch
      %49 = sbr.rel (0) target = $region45
    $region44: #{san_forward.1} parent=1 // pred_region
      _
    $region45: #{san_forward.1} parent=1 // pred_fallthru
      _
    // Predicated region
    $region46: #{san_forward.1} parent=1 // pred_check
      _
    $region47: #{san_forward.1} parent=1 // pred_check_branch
      %51 = sbr.rel (0) target = $region49
    $region48: #{san_forward.1} parent=1 // pred_region
      _
    $region49: #{san_forward.1} parent=1 // pred_fallthru
      _
    // Predicated region
    $region50: #{san_forward.1} parent=1 // pred_check
      _
    $region51: #{san_forward.1} parent=1 // pred_check_branch
      %53 = sbr.rel (0) target = $region53
    $region52: #{san_forward.1} parent=1 // pred_region
      _
    $region53: #{san_forward.1} parent=1 // pred_fallthru
      _
    // Predicated region
    $region54: #{san_forward.1} parent=1 // pred_check
      _
    $region55: #{san_forward.1} parent=1 // pred_check_branch
      %55 = sbr.rel (0) target = $region57
    $region56: #{san_forward.1} parent=1 // pred_region
      _
    $region57: #{san_forward.1} parent=1 // pred_fallthru
      _
    // Predicated region
    $region58: #{san_forward.1} parent=1 // pred_check
      _
    $region59: #{san_forward.1} parent=1 // pred_check_branch
      %57 = sbr.rel (0) target = $region61
    $region60: #{san_forward.1} parent=1 // pred_region
      _
    $region61: #{san_forward.1} parent=1 // pred_fallthru
      _
    // Predicated region
    $region62: #{san_forward.1} parent=1 // pred_check
      _
    $region63: #{san_forward.1} parent=1 // pred_check_branch
      %59 = sbr.rel (0) target = $region65
    $region64: #{san_forward.1} parent=1 // pred_region
      _
    $region65: #{san_forward.1} parent=1 // pred_fallthru
      _
    // Predicated region
    $region66: #{san_forward.1} parent=1 // pred_check
      _
    $region67: #{san_forward.1} parent=1 // pred_check_branch
      %61 = sbr.rel (0) target = $region69
    $region68: #{san_forward.1} parent=1 // pred_region
      _
    $region69: #{san_forward.1} parent=1 // pred_fallthru
      _
    // Predicated region
    $region70: #{san_forward.1} parent=1 // pred_check
      _
    $region71: #{san_forward.1} parent=1 // pred_check_branch
      %63 = sbr.rel (0) target = $region73
    $region72: #{san_forward.1} parent=1 // pred_region
      _
    $region73: #{san_forward.1} parent=1 // pred_fallthru
      _
    // Predicated region
    $region74: #{san_forward.1} parent=1 // pred_check
      _
    $region75: #{san_forward.1} parent=1 // pred_check_branch
      %65 = sbr.rel (0) target = $region77
    $region76: #{san_forward.1} parent=1 // pred_region
      _
    $region77: #{san_forward.1} parent=1 // pred_fallthru
      _
    // Predicated region
    $region78: #{san_forward.1} parent=1 // pred_check
      _
    $region79: #{san_forward.1} parent=1 // pred_check_branch
      %67 = sbr.rel (0) target = $region81
    $region80: #{san_forward.1} parent=1 // pred_region
      _
    $region81: #{san_forward.1} parent=1 // pred_fallthru
      _
    // Predicated region
    $region82: #{san_forward.1} parent=1 // pred_check
      _
    $region83: #{san_forward.1} parent=1 // pred_check_branch
      %69 = sbr.rel (0) target = $region85
    $region84: #{san_forward.1} parent=1 // pred_region
      _
    $region85: #{san_forward.1} parent=1 // pred_fallthru
      _
    %v71 = vld [vmem:[%s0] sm:$0xff]
    %v72 = vld [vmem:[%s0 + $0x8] sm:$0xff]
    %v73 = vld [vmem:[%s0 + $0x10] sm:$0xff]
    %v74 = vld [vmem:[%s0 + $0x18] sm:$0xff]
    %v75 = vld [vmem:[%s0 + $0x20] sm:$0xff]
    %v76 = vld [vmem:[%s0 + $0x28] sm:$0xff]
    %v77 = vld [vmem:[%s0 + $0x30] sm:$0xff]
    %v78 = vld [vmem:[%s0 + $0x38] sm:$0xff]
    %v79 = vld [vmem:[%s0 + $0x40] sm:$0xff]
    %v80 = vld [vmem:[%s0 + $0x48] sm:$0xff]
    %v81 = vld [vmem:[%s0 + $0x50] sm:$0xff]
    %v82 = vld [vmem:[%s0 + $0x58] sm:$0xff]
    %v83 = vld [vmem:[%s0 + $0x60] sm:$0xff]
    %v84 = vld [vmem:[%s0 + $0x68] sm:$0xff]
    %v85 = vld [vmem:[%s0 + $0x70] sm:$0xff]
    %v86 = vld [vmem:[%s0 + $0x78] sm:$0xff]
    %v87 = vld [vmem:[%s0 + $0x80] sm:$0xff]
    %v88 = vld [vmem:[%s0 + $0x88] sm:$0xff]
    %v89 = vld [vmem:[%s0 + $0x90] sm:$0xff]
    %v90 = vld [vmem:[%s0 + $0x98] sm:$0xff]
    %v91 = vld [vmem:[%s0 + $0xa0] sm:$0xff]
    %v92 = vld [vmem:[%s0 + $0xa8] sm:$0xff]
    %v93 = vld [vmem:[%s0 + $0xb0] sm:$0xff]
    %v94 = vld [vmem:[%s0 + $0xb8] sm:$0xff]
    %v95 = vld [vmem:[%s0 + $0xc0] sm:$0xff]
    %v96 = vld [vmem:[%s0 + $0xc8] sm:$0xff]
    %v97 = vld [vmem:[%s0 + $0xd0] sm:$0xff]
    %v98 = vld [vmem:[%s0 + $0xd8] sm:$0xff]
    %v99 = vld [vmem:[%s0 + $0xe0] sm:$0xff]
    %v100 = vld [vmem:[%s0 + $0xe8] sm:$0xff]
    %v101 = vld [vmem:[%s0 + $0xf0] sm:$0xff]
    %v102 = vld [vmem:[%s0 + $0xf8] sm:$0xff]
    %v103 = vld [vmem:[%s0 + $0x100] sm:$0xff]
    %v104 = vld [vmem:[%s0 + $0x108] sm:$0xff]
    %v105 = vld [vmem:[%s0 + $0x110] sm:$0xff]
    %v106 = vld [vmem:[%s0 + $0x118] sm:$0xff]
    %v107 = vld [vmem:[%s0 + $0x120] sm:$0xff]
    %v108 = vld [vmem:[%s0 + $0x128] sm:$0xff]
    %v109 = vld [vmem:[%s0 + $0x130] sm:$0xff]
    %v110 = vld [vmem:[%s0 + $0x138] sm:$0xff]
    %v111 = vld [vmem:[%s0 + $0x140] sm:$0xff]
    %v112 = vld [vmem:[%s0 + $0x148] sm:$0xff]
    %v113 = vld [vmem:[%s0 + $0x150] sm:$0xff]
    %v114 = vld [vmem:[%s0 + $0x158] sm:$0xff]
    %v115 = vld [vmem:[%s0 + $0x160] sm:$0xff]
    %v116 = vld [vmem:[%s0 + $0x168] sm:$0xff]
    %v117 = vld [vmem:[%s0 + $0x170] sm:$0xff]
    %v118 = vld [vmem:[%s0 + $0x178] sm:$0xff]
    %v119 = vld [vmem:[%s0 + $0x180] sm:$0xff]
    %v120 = vld [vmem:[%s0 + $0x188] sm:$0xff]
    %v121 = vld [vmem:[%s0 + $0x190] sm:$0xff]
    %v122 = vld [vmem:[%s0 + $0x198] sm:$0xff]
    %v123 = vld [vmem:[%s0 + $0x1a0] sm:$0xff]
    %v124 = vld [vmem:[%s0 + $0x1a8] sm:$0xff]
    %v125 = vld [vmem:[%s0 + $0x1b0] sm:$0xff]
    %v126 = vld [vmem:[%s0 + $0x1b8] sm:$0xff]
    %v127 = vld [vmem:[%s0 + $0x1c0] sm:$0xff]
    %v128 = vld [vmem:[%s0 + $0x1c8] sm:$0xff]
    %v129 = vld [vmem:[%s0 + $0x1d0] sm:$0xff]
    %v130 = vld [vmem:[%s0 + $0x1d8] sm:$0xff]
    %v131 = vld [vmem:[%s0 + $0x1e0] sm:$0xff]
    %v132 = vld [vmem:[%s0 + $0x1e8] sm:$0xff]
    %v133 = vld [vmem:[%s0 + $0x1f0] sm:$0xff]
    %v134 = vld [vmem:[%s0 + $0x1f8] sm:$0xff]
    %v135 = vld [vmem:[%s2] sm:$0xff]
    %v136 = vld [vmem:[%s2 + $0x8] sm:$0xff]
    %v137 = vld [vmem:[%s2 + $0x10] sm:$0xff]
    %v138 = vld [vmem:[%s2 + $0x18] sm:$0xff]
    %v139 = vld [vmem:[%s2 + $0x20] sm:$0xf]
    %v140 = vld [vmem:[%s3] sm:$0x1]
    %v142 = vperm.slane %v140, 0
    %vm144 = vcmask 293888
    %v146 = vsel %vm144, %v71, 0
    %v149 = vsel %vm144, %v72, 0
    %v152 = vsel %vm144, %v73, 0
    %v155 = vsel %vm144, %v74, 0
    %v158 = vsel %vm144, %v75, 0
    %v161 = vsel %vm144, %v76, 0
    %v164 = vsel %vm144, %v77, 0
    %v167 = vsel %vm144, %v78, 0
    %v170 = vsel %vm144, %v79, 0
    %v173 = vsel %vm144, %v80, 0
    %v176 = vsel %vm144, %v81, 0
    %v179 = vsel %vm144, %v82, 0
    %v182 = vsel %vm144, %v83, 0
    %v185 = vsel %vm144, %v84, 0
    %v188 = vsel %vm144, %v85, 0
    %v191 = vsel %vm144, %v86, 0
    %v194 = vsel %vm144, %v87, 0
    %v197 = vsel %vm144, %v88, 0
    %v200 = vsel %vm144, %v89, 0
    %v203 = vsel %vm144, %v90, 0
    %v206 = vsel %vm144, %v91, 0
    %v209 = vsel %vm144, %v92, 0
    %v212 = vsel %vm144, %v93, 0
    %v215 = vsel %vm144, %v94, 0
    %v218 = vsel %vm144, %v95, 0
    %v221 = vsel %vm144, %v96, 0
    %v224 = vsel %vm144, %v97, 0
    %v227 = vsel %vm144, %v98, 0
    %v230 = vsel %vm144, %v99, 0
    %v233 = vsel %vm144, %v100, 0
    %v236 = vsel %vm144, %v101, 0
    %v239 = vsel %vm144, %v102, 0
    %v242 = vsel %vm144, %v103, 0
    %v245 = vsel %vm144, %v104, 0
    %v248 = vsel %vm144, %v105, 0
    %v251 = vsel %vm144, %v106, 0
    %v254 = vsel %vm144, %v107, 0
    %v257 = vsel %vm144, %v108, 0
    %v260 = vsel %vm144, %v109, 0
    %v263 = vsel %vm144, %v110, 0
    %v266 = vsel %vm144, %v111, 0
    %v269 = vsel %vm144, %v112, 0
    %v272 = vsel %vm144, %v113, 0
    %v275 = vsel %vm144, %v114, 0
    %v278 = vsel %vm144, %v115, 0
    %v281 = vsel %vm144, %v116, 0
    %v284 = vsel %vm144, %v117, 0
    %v287 = vsel %vm144, %v118, 0
    %v290 = vsel %vm144, %v119, 0
    %v293 = vsel %vm144, %v120, 0
    %v296 = vsel %vm144, %v121, 0
    %v299 = vsel %vm144, %v122, 0
    %v302 = vsel %vm144, %v123, 0
    %v305 = vsel %vm144, %v124, 0
    %v308 = vsel %vm144, %v125, 0
    %v311 = vsel %vm144, %v126, 0
    %v314 = vsel %vm144, %v127, 0
    %v317 = vsel %vm144, %v128, 0
    %v320 = vsel %vm144, %v129, 0
    %v323 = vsel %vm144, %v130, 0
    %v326 = vsel %vm144, %v131, 0
    %v329 = vsel %vm144, %v132, 0
    %v332 = vsel %vm144, %v133, 0
    %v335 = vsel %vm144, %v134, 0
    %vm337 = vcmask 1043456
    %v339 = vsel %vm337, %v139, 0
    %341 = vmatpush.msra.mxu0 0.0
    %342 = vmatpush.msra.mxu0 0.0
    %343 = vmatpush.msra.mxu0 0.0
    %344 = vmatpush.msra.mxu0 0.0
    %345 = vmatpush.msra.mxu0 0.0
    %346 = vmatpush.msra.mxu0 0.0
    %347 = vmatpush.msra.mxu0 0.0
    %348 = vmatpush.msra.mxu0 0.0
    %349 = vmatpush.msra.mxu0 0.0
    %350 = vmatpush.msra.mxu0 0.0
    %351 = vmatpush.msra.mxu0 0.0
    %352 = vmatpush.msra.mxu0 %v339
    %353 = vmatpush.msra.mxu0 %v138
    %354 = vmatpush.msra.mxu0 %v137
    %355 = vmatpush.msra.mxu0 %v136
    %356 = vmatpush.msra.mxu0 %v135
    %357 = vmatmul.f32.gmra.mxu0 %v146
    %v358 = vpop.f32.mrf.mxu0
    %v359 = vadd.f32 %v142, %v358
    %360 = vmatmul.f32.gmra.mxu0 %v149
    %v361 = vpop.f32.mrf.mxu0
    %v362 = vadd.f32 %v142, %v361
    %363 = vmatmul.f32.gmra.mxu0 %v152
    %v364 = vpop.f32.mrf.mxu0
    %v365 = vadd.f32 %v142, %v364
    %366 = vmatmul.f32.gmra.mxu0 %v155
    %v367 = vpop.f32.mrf.mxu0
    %v368 = vadd.f32 %v142, %v367
    %369 = vmatmul.f32.gmra.mxu0 %v158
    %v370 = vpop.f32.mrf.mxu0
    %v371 = vadd.f32 %v142, %v370
    %372 = vmatmul.f32.gmra.mxu0 %v161
    %v373 = vpop.f32.mrf.mxu0
    %v374 = vadd.f32 %v142, %v373
    %375 = vmatmul.f32.gmra.mxu0 %v164
    %v376 = vpop.f32.mrf.mxu0
    %v377 = vadd.f32 %v142, %v376
    %378 = vmatmul.f32.gmra.mxu0 %v167
    %v379 = vpop.f32.mrf.mxu0
    %v380 = vadd.f32 %v142, %v379
    %381 = vmatmul.f32.gmra.mxu0 %v170
    %v382 = vpop.f32.mrf.mxu0
    %v383 = vadd.f32 %v142, %v382
    %384 = vmatmul.f32.gmra.mxu0 %v173
    %v385 = vpop.f32.mrf.mxu0
    %v386 = vadd.f32 %v142, %v385
    %387 = vmatmul.f32.gmra.mxu0 %v176
    %v388 = vpop.f32.mrf.mxu0
    %v389 = vadd.f32 %v142, %v388
    %390 = vmatmul.f32.gmra.mxu0 %v179
    %v391 = vpop.f32.mrf.mxu0
    %v392 = vadd.f32 %v142, %v391
    %393 = vmatmul.f32.gmra.mxu0 %v182
    %v394 = vpop.f32.mrf.mxu0
    %v395 = vadd.f32 %v142, %v394
    %396 = vmatmul.f32.gmra.mxu0 %v185
    %v397 = vpop.f32.mrf.mxu0
    %v398 = vadd.f32 %v142, %v397
    %399 = vmatmul.f32.gmra.mxu0 %v188
    %v400 = vpop.f32.mrf.mxu0
    %v401 = vadd.f32 %v142, %v400
    %402 = vmatmul.f32.gmra.mxu0 %v191
    %v403 = vpop.f32.mrf.mxu0
    %v404 = vadd.f32 %v142, %v403
    %405 = vmatmul.f32.gmra.mxu0 %v194
    %v406 = vpop.f32.mrf.mxu0
    %v407 = vadd.f32 %v142, %v406
    %408 = vmatmul.f32.gmra.mxu0 %v197
    %v409 = vpop.f32.mrf.mxu0
    %v410 = vadd.f32 %v142, %v409
    %411 = vmatmul.f32.gmra.mxu0 %v200
    %v412 = vpop.f32.mrf.mxu0
    %v413 = vadd.f32 %v142, %v412
    %414 = vmatmul.f32.gmra.mxu0 %v203
    %v415 = vpop.f32.mrf.mxu0
    %v416 = vadd.f32 %v142, %v415
    %417 = vmatmul.f32.gmra.mxu0 %v206
    %v418 = vpop.f32.mrf.mxu0
    %419 = vmatmul.f32.gmra.mxu0 %v209
    %v420 = vpop.f32.mrf.mxu0
    %421 = vmatmul.f32.gmra.mxu0 %v212
    %v422 = vpop.f32.mrf.mxu0
    %423 = vmatmul.f32.gmra.mxu0 %v215
    %v424 = vpop.f32.mrf.mxu0
    %425 = vmatmul.f32.gmra.mxu0 %v218
    %v426 = vpop.f32.mrf.mxu0
    %427 = vmatmul.f32.gmra.mxu0 %v221
    %v428 = vpop.f32.mrf.mxu0
    %429 = vmatmul.f32.gmra.mxu0 %v224
    %v430 = vpop.f32.mrf.mxu0
    %431 = vmatmul.f32.gmra.mxu0 %v227
    %v432 = vpop.f32.mrf.mxu0
    %433 = vmatmul.f32.gmra.mxu0 %v230
    %v434 = vpop.f32.mrf.mxu0
    %435 = vmatmul.f32.gmra.mxu0 %v233
    %v436 = vpop.f32.mrf.mxu0
    %437 = vmatmul.f32.gmra.mxu0 %v236
    %v438 = vpop.f32.mrf.mxu0
    %439 = vmatmul.f32.gmra.mxu0 %v239
    %v440 = vpop.f32.mrf.mxu0
    %441 = vmatmul.f32.gmra.mxu0 %v242
    %v442 = vpop.f32.mrf.mxu0
    %v443 = vadd.f32 %v142, %v442
    %444 = vmatmul.f32.gmra.mxu0 %v245
    %v445 = vpop.f32.mrf.mxu0
    %v446 = vadd.f32 %v142, %v445
    %447 = vmatmul.f32.gmra.mxu0 %v248
    %v448 = vpop.f32.mrf.mxu0
    %v449 = vadd.f32 %v142, %v448
    %450 = vmatmul.f32.gmra.mxu0 %v251
    %v451 = vpop.f32.mrf.mxu0
    %v452 = vadd.f32 %v142, %v451
    %453 = vmatmul.f32.gmra.mxu0 %v254
    %v454 = vpop.f32.mrf.mxu0
    %v455 = vadd.f32 %v142, %v454
    %456 = vmatmul.f32.gmra.mxu0 %v257
    %v457 = vpop.f32.mrf.mxu0
    %v458 = vadd.f32 %v142, %v457
    %459 = vmatmul.f32.gmra.mxu0 %v260
    %v460 = vpop.f32.mrf.mxu0
    %v461 = vadd.f32 %v142, %v460
    %462 = vmatmul.f32.gmra.mxu0 %v263
    %v463 = vpop.f32.mrf.mxu0
    %v464 = vadd.f32 %v142, %v463
    %465 = vmatmul.f32.gmra.mxu0 %v266
    %v466 = vpop.f32.mrf.mxu0
    %v467 = vadd.f32 %v142, %v466
    %468 = vmatmul.f32.gmra.mxu0 %v269
    %v469 = vpop.f32.mrf.mxu0
    %v470 = vadd.f32 %v142, %v469
    %471 = vmatmul.f32.gmra.mxu0 %v272
    %v472 = vpop.f32.mrf.mxu0
    %v473 = vadd.f32 %v142, %v472
    %474 = vmatmul.f32.gmra.mxu0 %v275
    %v475 = vpop.f32.mrf.mxu0
    %v476 = vadd.f32 %v142, %v475
    %477 = vmatmul.f32.gmra.mxu0 %v278
    %v478 = vpop.f32.mrf.mxu0
    %v479 = vadd.f32 %v142, %v478
    %480 = vmatmul.f32.gmra.mxu0 %v281
    %v481 = vpop.f32.mrf.mxu0
    %v482 = vadd.f32 %v142, %v481
    %483 = vmatmul.f32.gmra.mxu0 %v284
    %v484 = vpop.f32.mrf.mxu0
    %v485 = vadd.f32 %v142, %v484
    %486 = vmatmul.f32.gmra.mxu0 %v287
    %v487 = vpop.f32.mrf.mxu0
    %v488 = vadd.f32 %v142, %v487
    %489 = vmatmul.f32.gmra.mxu0 %v290
    %v490 = vpop.f32.mrf.mxu0
    %v491 = vadd.f32 %v142, %v490
    %492 = vmatmul.f32.gmra.mxu0 %v293
    %v493 = vpop.f32.mrf.mxu0
    %v494 = vadd.f32 %v142, %v493
    %495 = vmatmul.f32.gmra.mxu0 %v296
    %v496 = vpop.f32.mrf.mxu0
    %v497 = vadd.f32 %v142, %v496
    %498 = vmatmul.f32.gmra.mxu0 %v299
    %v499 = vpop.f32.mrf.mxu0
    %v500 = vadd.f32 %v142, %v499
    %501 = vmatmul.f32.gmra.mxu0 %v302
    %v502 = vpop.f32.mrf.mxu0
    %503 = vmatmul.f32.gmra.mxu0 %v305
    %v504 = vpop.f32.mrf.mxu0
    %505 = vmatmul.f32.gmra.mxu0 %v308
    %v506 = vpop.f32.mrf.mxu0
    %507 = vmatmul.f32.gmra.mxu0 %v311
    %v508 = vpop.f32.mrf.mxu0
    %509 = vmatmul.f32.gmra.mxu0 %v314
    %v510 = vpop.f32.mrf.mxu0
    %511 = vmatmul.f32.gmra.mxu0 %v317
    %v512 = vpop.f32.mrf.mxu0
    %513 = vmatmul.f32.gmra.mxu0 %v320
    %v514 = vpop.f32.mrf.mxu0
    %515 = vmatmul.f32.gmra.mxu0 %v323
    %v516 = vpop.f32.mrf.mxu0
    %517 = vmatmul.f32.gmra.mxu0 %v326
    %v518 = vpop.f32.mrf.mxu0
    %519 = vmatmul.f32.gmra.mxu0 %v329
    %v520 = vpop.f32.mrf.mxu0
    %521 = vmatmul.f32.gmra.mxu0 %v332
    %v522 = vpop.f32.mrf.mxu0
    %523 = vmatmul.f32.gmra.mxu0 %v335
    %v524 = vpop.f32.mrf.mxu0
    %525 = vdwg.mxu0
    %v526 = vmax.f32 %v359, 0.0
    %v527 = vmax.f32 %v362, 0.0
    %v528 = vmax.f32 %v365, 0.0
    %v529 = vmax.f32 %v368, 0.0
    %v530 = vmax.f32 %v371, 0.0
    %v531 = vmax.f32 %v374, 0.0
    %v532 = vmax.f32 %v377, 0.0
    %v533 = vmax.f32 %v380, 0.0
    %v534 = vmax.f32 %v383, 0.0
    %v535 = vmax.f32 %v386, 0.0
    %v536 = vmax.f32 %v389, 0.0
    %v537 = vmax.f32 %v392, 0.0
    %v538 = vmax.f32 %v395, 0.0
    %v539 = vmax.f32 %v398, 0.0
    %v540 = vmax.f32 %v401, 0.0
    %v541 = vmax.f32 %v404, 0.0
    %v542 = vmax.f32 %v407, 0.0
    %v543 = vmax.f32 %v410, 0.0
    %v544 = vmax.f32 %v413, 0.0
    %v545 = vmax.f32 %v416, 0.0
    %v546 = vmax.f32 %v443, 0.0
    %v547 = vmax.f32 %v446, 0.0
    %v548 = vmax.f32 %v449, 0.0
    %v549 = vmax.f32 %v452, 0.0
    %v550 = vmax.f32 %v455, 0.0
    %v551 = vmax.f32 %v458, 0.0
    %v552 = vmax.f32 %v461, 0.0
    %v553 = vmax.f32 %v464, 0.0
    %v554 = vmax.f32 %v467, 0.0
    %v555 = vmax.f32 %v470, 0.0
    %v556 = vmax.f32 %v473, 0.0
    %v557 = vmax.f32 %v476, 0.0
    %v558 = vmax.f32 %v479, 0.0
    %v559 = vmax.f32 %v482, 0.0
    %v560 = vmax.f32 %v485, 0.0
    %v561 = vmax.f32 %v488, 0.0
    %v562 = vmax.f32 %v491, 0.0
    %v563 = vmax.f32 %v494, 0.0
    %v564 = vmax.f32 %v497, 0.0
    %v565 = vmax.f32 %v500, 0.0
    %v566 = vld [vmem:[%s1] sm:$0xff]
    %v567 = vld [vmem:[%s1 + $0x8] sm:$0xff]
    %v568 = vld [vmem:[%s1 + $0x10] sm:$0xff]
    %v569 = vld [vmem:[%s1 + $0x18] sm:$0xff]
    %v570 = vld [vmem:[%s1 + $0x20] sm:$0xff]
    %v571 = vld [vmem:[%s1 + $0x28] sm:$0xff]
    %v572 = vld [vmem:[%s1 + $0x30] sm:$0xff]
    %v573 = vld [vmem:[%s1 + $0x38] sm:$0xff]
    %v574 = vld [vmem:[%s1 + $0x40] sm:$0xff]
    %v575 = vld [vmem:[%s1 + $0x48] sm:$0xff]
    %v576 = vld [vmem:[%s1 + $0x50] sm:$0xff]
    %v577 = vld [vmem:[%s1 + $0x58] sm:$0xff]
    %v578 = vld [vmem:[%s1 + $0x60] sm:$0xff]
    %v579 = vld [vmem:[%s1 + $0x68] sm:$0xff]
    %v580 = vld [vmem:[%s1 + $0x70] sm:$0xff]
    %v581 = vld [vmem:[%s1 + $0x78] sm:$0xff]
    %v582 = vld [vmem:[%s1 + $0x80] sm:$0xff]
    %v583 = vld [vmem:[%s1 + $0x88] sm:$0xff]
    %v584 = vld [vmem:[%s1 + $0x90] sm:$0xff]
    %v585 = vld [vmem:[%s1 + $0x98] sm:$0xff]
    %v586 = vld [vmem:[%s1 + $0x100] sm:$0xff]
    %v587 = vld [vmem:[%s1 + $0x108] sm:$0xff]
    %v588 = vld [vmem:[%s1 + $0x110] sm:$0xff]
    %v589 = vld [vmem:[%s1 + $0x118] sm:$0xff]
    %v590 = vld [vmem:[%s1 + $0x120] sm:$0xff]
    %v591 = vld [vmem:[%s1 + $0x128] sm:$0xff]
    %v592 = vld [vmem:[%s1 + $0x130] sm:$0xff]
    %v593 = vld [vmem:[%s1 + $0x138] sm:$0xff]
    %v594 = vld [vmem:[%s1 + $0x140] sm:$0xff]
    %v595 = vld [vmem:[%s1 + $0x148] sm:$0xff]
    %v596 = vld [vmem:[%s1 + $0x150] sm:$0xff]
    %v597 = vld [vmem:[%s1 + $0x158] sm:$0xff]
    %v598 = vld [vmem:[%s1 + $0x160] sm:$0xff]
    %v599 = vld [vmem:[%s1 + $0x168] sm:$0xff]
    %v600 = vld [vmem:[%s1 + $0x170] sm:$0xff]
    %v601 = vld [vmem:[%s1 + $0x178] sm:$0xff]
    %v602 = vld [vmem:[%s1 + $0x180] sm:$0xff]
    %v603 = vld [vmem:[%s1 + $0x188] sm:$0xff]
    %v604 = vld [vmem:[%s1 + $0x190] sm:$0xff]
    %v605 = vld [vmem:[%s1 + $0x198] sm:$0xff]
    %607 = vset.pattern.permute.xlu0 0
    %608 = vperm.xlu0 %607, %v566
    %v609 = vpop.permute.xlu0 %608
    %612 = vset.pattern.permute.xlu0 0
    %613 = vperm.xlu0 %612, %v567
    %v614 = vpop.permute.xlu0 %613
    %617 = vset.pattern.permute.xlu0 0
    %618 = vperm.xlu0 %617, %v568
    %v619 = vpop.permute.xlu0 %618
    %622 = vset.pattern.permute.xlu0 0
    %623 = vperm.xlu0 %622, %v569
    %v624 = vpop.permute.xlu0 %623
    %627 = vset.pattern.permute.xlu0 0
    %628 = vperm.xlu0 %627, %v570
    %v629 = vpop.permute.xlu0 %628
    %632 = vset.pattern.permute.xlu0 0
    %633 = vperm.xlu0 %632, %v571
    %v634 = vpop.permute.xlu0 %633
    %637 = vset.pattern.permute.xlu0 0
    %638 = vperm.xlu0 %637, %v572
    %v639 = vpop.permute.xlu0 %638
    %642 = vset.pattern.permute.xlu0 0
    %643 = vperm.xlu0 %642, %v573
    %v644 = vpop.permute.xlu0 %643
    %647 = vset.pattern.permute.xlu0 0
    %648 = vperm.xlu0 %647, %v574
    %v649 = vpop.permute.xlu0 %648
    %652 = vset.pattern.permute.xlu0 0
    %653 = vperm.xlu0 %652, %v575
    %v654 = vpop.permute.xlu0 %653
    %657 = vset.pattern.permute.xlu0 0
    %658 = vperm.xlu0 %657, %v576
    %v659 = vpop.permute.xlu0 %658
    %662 = vset.pattern.permute.xlu0 0
    %663 = vperm.xlu0 %662, %v577
    %v664 = vpop.permute.xlu0 %663
    %667 = vset.pattern.permute.xlu0 0
    %668 = vperm.xlu0 %667, %v578
    %v669 = vpop.permute.xlu0 %668
    %672 = vset.pattern.permute.xlu0 0
    %673 = vperm.xlu0 %672, %v579
    %v674 = vpop.permute.xlu0 %673
    %677 = vset.pattern.permute.xlu0 0
    %678 = vperm.xlu0 %677, %v580
    %v679 = vpop.permute.xlu0 %678
    %682 = vset.pattern.permute.xlu0 0
    %683 = vperm.xlu0 %682, %v581
    %v684 = vpop.permute.xlu0 %683
    %687 = vset.pattern.permute.xlu0 0
    %688 = vperm.xlu0 %687, %v582
    %v689 = vpop.permute.xlu0 %688
    %692 = vset.pattern.permute.xlu0 0
    %693 = vperm.xlu0 %692, %v583
    %v694 = vpop.permute.xlu0 %693
    %697 = vset.pattern.permute.xlu0 0
    %698 = vperm.xlu0 %697, %v584
    %v699 = vpop.permute.xlu0 %698
    %702 = vset.pattern.permute.xlu0 0
    %703 = vperm.xlu0 %702, %v585
    %v704 = vpop.permute.xlu0 %703
    %707 = vset.pattern.permute.xlu0 0
    %708 = vperm.xlu0 %707, %v586
    %v709 = vpop.permute.xlu0 %708
    %712 = vset.pattern.permute.xlu0 0
    %713 = vperm.xlu0 %712, %v587
    %v714 = vpop.permute.xlu0 %713
    %717 = vset.pattern.permute.xlu0 0
    %718 = vperm.xlu0 %717, %v588
    %v719 = vpop.permute.xlu0 %718
    %722 = vset.pattern.permute.xlu0 0
    %723 = vperm.xlu0 %722, %v589
    %v724 = vpop.permute.xlu0 %723
    %727 = vset.pattern.permute.xlu0 0
    %728 = vperm.xlu0 %727, %v590
    %v729 = vpop.permute.xlu0 %728
    %732 = vset.pattern.permute.xlu0 0
    %733 = vperm.xlu0 %732, %v591
    %v734 = vpop.permute.xlu0 %733
    %737 = vset.pattern.permute.xlu0 0
    %738 = vperm.xlu0 %737, %v592
    %v739 = vpop.permute.xlu0 %738
    %742 = vset.pattern.permute.xlu0 0
    %743 = vperm.xlu0 %742, %v593
    %v744 = vpop.permute.xlu0 %743
    %747 = vset.pattern.permute.xlu0 0
    %748 = vperm.xlu0 %747, %v594
    %v749 = vpop.permute.xlu0 %748
    %752 = vset.pattern.permute.xlu0 0
    %753 = vperm.xlu0 %752, %v595
    %v754 = vpop.permute.xlu0 %753
    %757 = vset.pattern.permute.xlu0 0
    %758 = vperm.xlu0 %757, %v596
    %v759 = vpop.permute.xlu0 %758
    %762 = vset.pattern.permute.xlu0 0
    %763 = vperm.xlu0 %762, %v597
    %v764 = vpop.permute.xlu0 %763
    %767 = vset.pattern.permute.xlu0 0
    %768 = vperm.xlu0 %767, %v598
    %v769 = vpop.permute.xlu0 %768
    %772 = vset.pattern.permute.xlu0 0
    %773 = vperm.xlu0 %772, %v599
    %v774 = vpop.permute.xlu0 %773
    %777 = vset.pattern.permute.xlu0 0
    %778 = vperm.xlu0 %777, %v600
    %v779 = vpop.permute.xlu0 %778
    %782 = vset.pattern.permute.xlu0 0
    %783 = vperm.xlu0 %782, %v601
    %v784 = vpop.permute.xlu0 %783
    %787 = vset.pattern.permute.xlu0 0
    %788 = vperm.xlu0 %787, %v602
    %v789 = vpop.permute.xlu0 %788
    %792 = vset.pattern.permute.xlu0 0
    %793 = vperm.xlu0 %792, %v603
    %v794 = vpop.permute.xlu0 %793
    %797 = vset.pattern.permute.xlu0 0
    %798 = vperm.xlu0 %797, %v604
    %v799 = vpop.permute.xlu0 %798
    %802 = vset.pattern.permute.xlu0 0
    %803 = vperm.xlu0 %802, %v605
    %v804 = vpop.permute.xlu0 %803
    %v806 = vmul.f32 %v526, %v609
    %v807 = vmul.f32 %v527, %v614
    %v808 = vmul.f32 %v528, %v619
    %v809 = vmul.f32 %v529, %v624
    %v810 = vmul.f32 %v530, %v629
    %v811 = vmul.f32 %v531, %v634
    %v812 = vmul.f32 %v532, %v639
    %v813 = vmul.f32 %v533, %v644
    %v814 = vmul.f32 %v534, %v649
    %v815 = vmul.f32 %v535, %v654
    %v816 = vmul.f32 %v536, %v659
    %v817 = vmul.f32 %v537, %v664
    %v818 = vmul.f32 %v538, %v669
    %v819 = vmul.f32 %v539, %v674
    %v820 = vmul.f32 %v540, %v679
    %v821 = vmul.f32 %v541, %v684
    %v822 = vmul.f32 %v542, %v689
    %v823 = vmul.f32 %v543, %v694
    %v824 = vmul.f32 %v544, %v699
    %v825 = vmul.f32 %v545, %v704
    %v826 = vmul.f32 %v546, %v709
    %v827 = vmul.f32 %v547, %v714
    %v828 = vmul.f32 %v548, %v719
    %v829 = vmul.f32 %v549, %v724
    %v830 = vmul.f32 %v550, %v729
    %v831 = vmul.f32 %v551, %v734
    %v832 = vmul.f32 %v552, %v739
    %v833 = vmul.f32 %v553, %v744
    %v834 = vmul.f32 %v554, %v749
    %v835 = vmul.f32 %v555, %v754
    %v836 = vmul.f32 %v556, %v759
    %v837 = vmul.f32 %v557, %v764
    %v838 = vmul.f32 %v558, %v769
    %v839 = vmul.f32 %v559, %v774
    %v840 = vmul.f32 %v560, %v779
    %v841 = vmul.f32 %v561, %v784
    %v842 = vmul.f32 %v562, %v789
    %v843 = vmul.f32 %v563, %v794
    %v844 = vmul.f32 %v564, %v799
    %v845 = vmul.f32 %v565, %v804
    %v846 = vld [vmem:[%s4] sm:$0xff]
    %v847 = vld [vmem:[%s4 + $0x8] sm:$0xff]
    %v848 = vld [vmem:[%s4 + $0x10] sm:$0xff]
    %v849 = vld [vmem:[%s4 + $0x18] sm:$0xff]
    %vm882 = vcmask 1046528
    %v883 = vrot.slane %v806, 1
    %v884 = vrot.slane %v807, 1
    %v885 = vsel %vm882, %v883, %v884
    %v886 = vrot.slane %v808, 1
    %v887 = vrot.slane %v809, 1
    %v888 = vsel %vm882, %v886, %v887
    %v889 = vrot.slane %v810, 1
    %v890 = vrot.slane %v811, 1
    %v891 = vsel %vm882, %v889, %v890
    %v892 = vrot.slane %v812, 1
    %v893 = vrot.slane %v813, 1
    %v894 = vsel %vm882, %v892, %v893
    %v895 = vrot.slane %v814, 1
    %v896 = vrot.slane %v815, 1
    %v897 = vsel %vm882, %v895, %v896
    %v898 = vrot.slane %v816, 1
    %v899 = vrot.slane %v817, 1
    %v900 = vsel %vm882, %v898, %v899
    %v901 = vrot.slane %v818, 1
    %v902 = vrot.slane %v819, 1
    %v903 = vsel %vm882, %v901, %v902
    %v904 = vrot.slane %v820, 1
    %v905 = vrot.slane %v821, 1
    %v906 = vsel %vm882, %v904, %v905
    %v907 = vrot.slane %v826, 1
    %v908 = vrot.slane %v827, 1
    %v909 = vsel %vm882, %v907, %v908
    %v910 = vrot.slane %v828, 1
    %v911 = vrot.slane %v829, 1
    %v912 = vsel %vm882, %v910, %v911
    %v913 = vrot.slane %v830, 1
    %v914 = vrot.slane %v831, 1
    %v915 = vsel %vm882, %v913, %v914
    %v916 = vrot.slane %v832, 1
    %v917 = vrot.slane %v833, 1
    %v918 = vsel %vm882, %v916, %v917
    %v919 = vrot.slane %v834, 1
    %v920 = vrot.slane %v835, 1
    %v921 = vsel %vm882, %v919, %v920
    %v922 = vrot.slane %v836, 1
    %v923 = vrot.slane %v837, 1
    %v924 = vsel %vm882, %v922, %v923
    %v925 = vrot.slane %v838, 1
    %v926 = vrot.slane %v839, 1
    %v927 = vsel %vm882, %v925, %v926
    %v928 = vrot.slane %v840, 1
    %v929 = vrot.slane %v841, 1
    %v930 = vsel %vm882, %v928, %v929
    %s931 = scalar_lea.vmem %s4, 32
    %v932 = vld [vmem:[%s931] sm:$0xff]
    %v933 = vld [vmem:[%s931 + $0x8] sm:$0xff]
    %v934 = vld [vmem:[%s931 + $0x10] sm:$0xff]
    %v935 = vld [vmem:[%s931 + $0x18] sm:$0xff]
    %vm936 = vcmask 261120
    %v937 = vsel %vm936, %v885, 0
    %v939 = vsel %vm936, %v888, 0
    %v941 = vsel %vm936, %v891, 0
    %v943 = vsel %vm936, %v894, 0
    %v945 = vsel %vm936, %v897, 0
    %v947 = vsel %vm936, %v900, 0
    %v949 = vsel %vm936, %v903, 0
    %v951 = vsel %vm936, %v906, 0
    %v953 = vsel %vm936, %v909, 0
    %v955 = vsel %vm936, %v912, 0
    %v957 = vsel %vm936, %v915, 0
    %v959 = vsel %vm936, %v918, 0
    %v961 = vsel %vm936, %v921, 0
    %v963 = vsel %vm936, %v924, 0
    %v965 = vsel %vm936, %v927, 0
    %v967 = vsel %vm936, %v930, 0
    %969 = vmatpush.msra.mxu0 0.0
    %970 = vmatpush.msra.mxu0 0.0
    %971 = vmatpush.msra.mxu0 0.0
    %972 = vmatpush.msra.mxu0 0.0
    %973 = vmatpush.msra.mxu0 0.0
    %974 = vmatpush.msra.mxu0 0.0
    %975 = vmatpush.msra.mxu0 0.0
    %976 = vmatpush.msra.mxu0 0.0
    %977 = vmatpush.msra.mxu0 0.0
    %978 = vmatpush.msra.mxu0 0.0
    %979 = vmatpush.msra.mxu0 0.0
    %980 = vmatpush.msra.mxu0 0.0
    %981 = vmatpush.msra.mxu0 %v935
    %982 = vmatpush.msra.mxu0 %v934
    %983 = vmatpush.msra.mxu0 %v933
    %984 = vmatpush.msra.mxu0 %v932
    %985 = vmatmul.f32.gmra.mxu0 %v937
    %v986 = vpop.f32.mrf.mxu0
    %v987 = vadd.f32 0.0, %v986
    %988 = vmatmul.f32.gmra.mxu0 %v939
    %v989 = vpop.f32.mrf.mxu0
    %v990 = vadd.f32 0.0, %v989
    %991 = vmatmul.f32.gmra.mxu0 %v941
    %v992 = vpop.f32.mrf.mxu0
    %v993 = vadd.f32 0.0, %v992
    %994 = vmatmul.f32.gmra.mxu0 %v943
    %v995 = vpop.f32.mrf.mxu0
    %v996 = vadd.f32 0.0, %v995
    %997 = vmatmul.f32.gmra.mxu0 %v945
    %v998 = vpop.f32.mrf.mxu0
    %v999 = vadd.f32 0.0, %v998
    %1000 = vmatmul.f32.gmra.mxu0 %v947
    %v1001 = vpop.f32.mrf.mxu0
    %v1002 = vadd.f32 0.0, %v1001
    %1003 = vmatmul.f32.gmra.mxu0 %v949
    %v1004 = vpop.f32.mrf.mxu0
    %v1005 = vadd.f32 0.0, %v1004
    %1006 = vmatmul.f32.gmra.mxu0 %v951
    %v1007 = vpop.f32.mrf.mxu0
    %v1008 = vadd.f32 0.0, %v1007
    %1009 = vmatmul.f32.gmra.mxu0 %v953
    %v1010 = vpop.f32.mrf.mxu0
    %v1011 = vadd.f32 0.0, %v1010
    %1012 = vmatmul.f32.gmra.mxu0 %v955
    %v1013 = vpop.f32.mrf.mxu0
    %v1014 = vadd.f32 0.0, %v1013
    %1015 = vmatmul.f32.gmra.mxu0 %v957
    %v1016 = vpop.f32.mrf.mxu0
    %v1017 = vadd.f32 0.0, %v1016
    %1018 = vmatmul.f32.gmra.mxu0 %v959
    %v1019 = vpop.f32.mrf.mxu0
    %v1020 = vadd.f32 0.0, %v1019
    %1021 = vmatmul.f32.gmra.mxu0 %v961
    %v1022 = vpop.f32.mrf.mxu0
    %v1023 = vadd.f32 0.0, %v1022
    %1024 = vmatmul.f32.gmra.mxu0 %v963
    %v1025 = vpop.f32.mrf.mxu0
    %v1026 = vadd.f32 0.0, %v1025
    %1027 = vmatmul.f32.gmra.mxu0 %v965
    %v1028 = vpop.f32.mrf.mxu0
    %v1029 = vadd.f32 0.0, %v1028
    %1030 = vmatmul.f32.gmra.mxu0 %v967
    %v1031 = vpop.f32.mrf.mxu0
    %v1032 = vadd.f32 0.0, %v1031
    %1033 = vdwg.mxu0
    %v1034 = vsel %vm936, %v806, 0
    %v1036 = vsel %vm936, %v808, 0
    %v1038 = vsel %vm936, %v810, 0
    %v1040 = vsel %vm936, %v812, 0
    %v1042 = vsel %vm936, %v814, 0
    %v1044 = vsel %vm936, %v816, 0
    %v1046 = vsel %vm936, %v818, 0
    %v1048 = vsel %vm936, %v820, 0
    %v1050 = vsel %vm936, %v826, 0
    %v1052 = vsel %vm936, %v828, 0
    %v1054 = vsel %vm936, %v830, 0
    %v1056 = vsel %vm936, %v832, 0
    %v1058 = vsel %vm936, %v834, 0
    %v1060 = vsel %vm936, %v836, 0
    %v1062 = vsel %vm936, %v838, 0
    %v1064 = vsel %vm936, %v840, 0
    %1066 = vmatpush.msra.mxu0 0.0
    %1067 = vmatpush.msra.mxu0 0.0
    %1068 = vmatpush.msra.mxu0 0.0
    %1069 = vmatpush.msra.mxu0 0.0
    %1070 = vmatpush.msra.mxu0 0.0
    %1071 = vmatpush.msra.mxu0 0.0
    %1072 = vmatpush.msra.mxu0 0.0
    %1073 = vmatpush.msra.mxu0 0.0
    %1074 = vmatpush.msra.mxu0 0.0
    %1075 = vmatpush.msra.mxu0 0.0
    %1076 = vmatpush.msra.mxu0 0.0
    %1077 = vmatpush.msra.mxu0 0.0
    %1078 = vmatpush.msra.mxu0 %v849
    %1079 = vmatpush.msra.mxu0 %v848
    %1080 = vmatpush.msra.mxu0 %v847
    %1081 = vmatpush.msra.mxu0 %v846
    %1082 = vmatmul.f32.gmra.mxu0 %v1034
    %v1083 = vpop.f32.mrf.mxu0
    %v1084 = vadd.f32 %v987, %v1083
    %1085 = vmatmul.f32.gmra.mxu0 %v1036
    %v1086 = vpop.f32.mrf.mxu0
    %v1087 = vadd.f32 %v990, %v1086
    %1088 = vmatmul.f32.gmra.mxu0 %v1038
    %v1089 = vpop.f32.mrf.mxu0
    %v1090 = vadd.f32 %v993, %v1089
    %1091 = vmatmul.f32.gmra.mxu0 %v1040
    %v1092 = vpop.f32.mrf.mxu0
    %v1093 = vadd.f32 %v996, %v1092
    %1094 = vmatmul.f32.gmra.mxu0 %v1042
    %v1095 = vpop.f32.mrf.mxu0
    %v1096 = vadd.f32 %v999, %v1095
    %1097 = vmatmul.f32.gmra.mxu0 %v1044
    %v1098 = vpop.f32.mrf.mxu0
    %v1099 = vadd.f32 %v1002, %v1098
    %1100 = vmatmul.f32.gmra.mxu0 %v1046
    %v1101 = vpop.f32.mrf.mxu0
    %v1102 = vadd.f32 %v1005, %v1101
    %1103 = vmatmul.f32.gmra.mxu0 %v1048
    %v1104 = vpop.f32.mrf.mxu0
    %v1105 = vadd.f32 %v1008, %v1104
    %1106 = vmatmul.f32.gmra.mxu0 %v1050
    %v1107 = vpop.f32.mrf.mxu0
    %v1108 = vadd.f32 %v1011, %v1107
    %1109 = vmatmul.f32.gmra.mxu0 %v1052
    %v1110 = vpop.f32.mrf.mxu0
    %v1111 = vadd.f32 %v1014, %v1110
    %1112 = vmatmul.f32.gmra.mxu0 %v1054
    %v1113 = vpop.f32.mrf.mxu0
    %v1114 = vadd.f32 %v1017, %v1113
    %1115 = vmatmul.f32.gmra.mxu0 %v1056
    %v1116 = vpop.f32.mrf.mxu0
    %v1117 = vadd.f32 %v1020, %v1116
    %1118 = vmatmul.f32.gmra.mxu0 %v1058
    %v1119 = vpop.f32.mrf.mxu0
    %v1120 = vadd.f32 %v1023, %v1119
    %1121 = vmatmul.f32.gmra.mxu0 %v1060
    %v1122 = vpop.f32.mrf.mxu0
    %v1123 = vadd.f32 %v1026, %v1122
    %1124 = vmatmul.f32.gmra.mxu0 %v1062
    %v1125 = vpop.f32.mrf.mxu0
    %v1126 = vadd.f32 %v1029, %v1125
    %1127 = vmatmul.f32.gmra.mxu0 %v1064
    %v1128 = vpop.f32.mrf.mxu0
    %v1129 = vadd.f32 %v1032, %v1128
    %1130 = vdwg.mxu0
    %vm1131 = vcmask 1045504
    %v1132 = vrot.slane %v806, 2
    %v1133 = vrot.slane %v807, 2
    %v1134 = vsel %vm1131, %v1132, %v1133
    %v1135 = vrot.slane %v808, 2
    %v1136 = vrot.slane %v809, 2
    %v1137 = vsel %vm1131, %v1135, %v1136
    %v1138 = vrot.slane %v810, 2
    %v1139 = vrot.slane %v811, 2
    %v1140 = vsel %vm1131, %v1138, %v1139
    %v1141 = vrot.slane %v812, 2
    %v1142 = vrot.slane %v813, 2
    %v1143 = vsel %vm1131, %v1141, %v1142
    %v1144 = vrot.slane %v814, 2
    %v1145 = vrot.slane %v815, 2
    %v1146 = vsel %vm1131, %v1144, %v1145
    %v1147 = vrot.slane %v816, 2
    %v1148 = vrot.slane %v817, 2
    %v1149 = vsel %vm1131, %v1147, %v1148
    %v1150 = vrot.slane %v818, 2
    %v1151 = vrot.slane %v819, 2
    %v1152 = vsel %vm1131, %v1150, %v1151
    %v1153 = vrot.slane %v820, 2
    %v1154 = vrot.slane %v821, 2
    %v1155 = vsel %vm1131, %v1153, %v1154
    %v1156 = vrot.slane %v826, 2
    %v1157 = vrot.slane %v827, 2
    %v1158 = vsel %vm1131, %v1156, %v1157
    %v1159 = vrot.slane %v828, 2
    %v1160 = vrot.slane %v829, 2
    %v1161 = vsel %vm1131, %v1159, %v1160
    %v1162 = vrot.slane %v830, 2
    %v1163 = vrot.slane %v831, 2
    %v1164 = vsel %vm1131, %v1162, %v1163
    %v1165 = vrot.slane %v832, 2
    %v1166 = vrot.slane %v833, 2
    %v1167 = vsel %vm1131, %v1165, %v1166
    %v1168 = vrot.slane %v834, 2
    %v1169 = vrot.slane %v835, 2
    %v1170 = vsel %vm1131, %v1168, %v1169
    %v1171 = vrot.slane %v836, 2
    %v1172 = vrot.slane %v837, 2
    %v1173 = vsel %vm1131, %v1171, %v1172
    %v1174 = vrot.slane %v838, 2
    %v1175 = vrot.slane %v839, 2
    %v1176 = vsel %vm1131, %v1174, %v1175
    %v1177 = vrot.slane %v840, 2
    %v1178 = vrot.slane %v841, 2
    %v1179 = vsel %vm1131, %v1177, %v1178
    %s1180 = scalar_lea.vmem %s4, 64
    %v1181 = vld [vmem:[%s1180] sm:$0xff]
    %v1182 = vld [vmem:[%s1180 + $0x8] sm:$0xff]
    %v1183 = vld [vmem:[%s1180 + $0x10] sm:$0xff]
    %v1184 = vld [vmem:[%s1180 + $0x18] sm:$0xff]
    %v1185 = vsel %vm936, %v1134, 0
    %v1187 = vsel %vm936, %v1137, 0
    %v1189 = vsel %vm936, %v1140, 0
    %v1191 = vsel %vm936, %v1143, 0
    %v1193 = vsel %vm936, %v1146, 0
    %v1195 = vsel %vm936, %v1149, 0
    %v1197 = vsel %vm936, %v1152, 0
    %v1199 = vsel %vm936, %v1155, 0
    %v1201 = vsel %vm936, %v1158, 0
    %v1203 = vsel %vm936, %v1161, 0
    %v1205 = vsel %vm936, %v1164, 0
    %v1207 = vsel %vm936, %v1167, 0
    %v1209 = vsel %vm936, %v1170, 0
    %v1211 = vsel %vm936, %v1173, 0
    %v1213 = vsel %vm936, %v1176, 0
    %v1215 = vsel %vm936, %v1179, 0
    %1217 = vmatpush.msra.mxu0 0.0
    %1218 = vmatpush.msra.mxu0 0.0
    %1219 = vmatpush.msra.mxu0 0.0
    %1220 = vmatpush.msra.mxu0 0.0
    %1221 = vmatpush.msra.mxu0 0.0
    %1222 = vmatpush.msra.mxu0 0.0
    %1223 = vmatpush.msra.mxu0 0.0
    %1224 = vmatpush.msra.mxu0 0.0
    %1225 = vmatpush.msra.mxu0 0.0
    %1226 = vmatpush.msra.mxu0 0.0
    %1227 = vmatpush.msra.mxu0 0.0
    %1228 = vmatpush.msra.mxu0 0.0
    %1229 = vmatpush.msra.mxu0 %v1184
    %1230 = vmatpush.msra.mxu0 %v1183
    %1231 = vmatpush.msra.mxu0 %v1182
    %1232 = vmatpush.msra.mxu0 %v1181
    %1233 = vmatmul.f32.gmra.mxu0 %v1185
    %v1234 = vpop.f32.mrf.mxu0
    %v1235 = vadd.f32 0.0, %v1234
    %1236 = vmatmul.f32.gmra.mxu0 %v1187
    %v1237 = vpop.f32.mrf.mxu0
    %v1238 = vadd.f32 0.0, %v1237
    %1239 = vmatmul.f32.gmra.mxu0 %v1189
    %v1240 = vpop.f32.mrf.mxu0
    %v1241 = vadd.f32 0.0, %v1240
    %1242 = vmatmul.f32.gmra.mxu0 %v1191
    %v1243 = vpop.f32.mrf.mxu0
    %v1244 = vadd.f32 0.0, %v1243
    %1245 = vmatmul.f32.gmra.mxu0 %v1193
    %v1246 = vpop.f32.mrf.mxu0
    %v1247 = vadd.f32 0.0, %v1246
    %1248 = vmatmul.f32.gmra.mxu0 %v1195
    %v1249 = vpop.f32.mrf.mxu0
    %v1250 = vadd.f32 0.0, %v1249
    %1251 = vmatmul.f32.gmra.mxu0 %v1197
    %v1252 = vpop.f32.mrf.mxu0
    %v1253 = vadd.f32 0.0, %v1252
    %1254 = vmatmul.f32.gmra.mxu0 %v1199
    %v1255 = vpop.f32.mrf.mxu0
    %v1256 = vadd.f32 0.0, %v1255
    %1257 = vmatmul.f32.gmra.mxu0 %v1201
    %v1258 = vpop.f32.mrf.mxu0
    %v1259 = vadd.f32 0.0, %v1258
    %1260 = vmatmul.f32.gmra.mxu0 %v1203
    %v1261 = vpop.f32.mrf.mxu0
    %v1262 = vadd.f32 0.0, %v1261
    %1263 = vmatmul.f32.gmra.mxu0 %v1205
    %v1264 = vpop.f32.mrf.mxu0
    %v1265 = vadd.f32 0.0, %v1264
    %1266 = vmatmul.f32.gmra.mxu0 %v1207
    %v1267 = vpop.f32.mrf.mxu0
    %v1268 = vadd.f32 0.0, %v1267
    %1269 = vmatmul.f32.gmra.mxu0 %v1209
    %v1270 = vpop.f32.mrf.mxu0
    %v1271 = vadd.f32 0.0, %v1270
    %1272 = vmatmul.f32.gmra.mxu0 %v1211
    %v1273 = vpop.f32.mrf.mxu0
    %v1274 = vadd.f32 0.0, %v1273
    %1275 = vmatmul.f32.gmra.mxu0 %v1213
    %v1276 = vpop.f32.mrf.mxu0
    %v1277 = vadd.f32 0.0, %v1276
    %1278 = vmatmul.f32.gmra.mxu0 %v1215
    %v1279 = vpop.f32.mrf.mxu0
    %v1280 = vadd.f32 0.0, %v1279
    %1281 = vdwg.mxu0
    %v1282 = vadd.f32 %v1084, %v1235
    %v1283 = vadd.f32 %v1087, %v1238
    %v1284 = vadd.f32 %v1090, %v1241
    %v1285 = vadd.f32 %v1093, %v1244
    %v1286 = vadd.f32 %v1096, %v1247
    %v1287 = vadd.f32 %v1099, %v1250
    %v1288 = vadd.f32 %v1102, %v1253
    %v1289 = vadd.f32 %v1105, %v1256
    %v1290 = vadd.f32 %v1108, %v1259
    %v1291 = vadd.f32 %v1111, %v1262
    %v1292 = vadd.f32 %v1114, %v1265
    %v1293 = vadd.f32 %v1117, %v1268
    %v1294 = vadd.f32 %v1120, %v1271
    %v1295 = vadd.f32 %v1123, %v1274
    %v1296 = vadd.f32 %v1126, %v1277
    %v1297 = vadd.f32 %v1129, %v1280
    %s1298 = scalar_lea.vmem %s4, 96
    %v1299 = vld [vmem:[%s1298] sm:$0xff]
    %v1300 = vld [vmem:[%s1298 + $0x8] sm:$0xff]
    %v1301 = vld [vmem:[%s1298 + $0x10] sm:$0xff]
    %v1302 = vld [vmem:[%s1298 + $0x18] sm:$0xff]
    %v1304 = vsel %vm936, %v822, 0
    %v1307 = vsel %vm936, %v842, 0
    %1309 = vmatpush.msra.mxu0 0.0
    %1310 = vmatpush.msra.mxu0 0.0
    %1311 = vmatpush.msra.mxu0 0.0
    %1312 = vmatpush.msra.mxu0 0.0
    %1313 = vmatpush.msra.mxu0 0.0
    %1314 = vmatpush.msra.mxu0 0.0
    %1315 = vmatpush.msra.mxu0 0.0
    %1316 = vmatpush.msra.mxu0 0.0
    %1317 = vmatpush.msra.mxu0 0.0
    %1318 = vmatpush.msra.mxu0 0.0
    %1319 = vmatpush.msra.mxu0 0.0
    %1320 = vmatpush.msra.mxu0 0.0
    %1321 = vmatpush.msra.mxu0 %v1302
    %1322 = vmatpush.msra.mxu0 %v1301
    %1323 = vmatpush.msra.mxu0 %v1300
    %1324 = vmatpush.msra.mxu0 %v1299
    %1325 = vmatmul.f32.gmra.mxu0 %v1036
    %v1326 = vpop.f32.mrf.mxu0
    %v1327 = vadd.f32 0.0, %v1326
    %1328 = vmatmul.f32.gmra.mxu0 %v1038
    %v1329 = vpop.f32.mrf.mxu0
    %v1330 = vadd.f32 0.0, %v1329
    %1331 = vmatmul.f32.gmra.mxu0 %v1040
    %v1332 = vpop.f32.mrf.mxu0
    %v1333 = vadd.f32 0.0, %v1332
    %1334 = vmatmul.f32.gmra.mxu0 %v1042
    %v1335 = vpop.f32.mrf.mxu0
    %v1336 = vadd.f32 0.0, %v1335
    %1337 = vmatmul.f32.gmra.mxu0 %v1044
    %v1338 = vpop.f32.mrf.mxu0
    %v1339 = vadd.f32 0.0, %v1338
    %1340 = vmatmul.f32.gmra.mxu0 %v1046
    %v1341 = vpop.f32.mrf.mxu0
    %v1342 = vadd.f32 0.0, %v1341
    %1343 = vmatmul.f32.gmra.mxu0 %v1048
    %v1344 = vpop.f32.mrf.mxu0
    %v1345 = vadd.f32 0.0, %v1344
    %1346 = vmatmul.f32.gmra.mxu0 %v1304
    %v1347 = vpop.f32.mrf.mxu0
    %v1348 = vadd.f32 0.0, %v1347
    %1349 = vmatmul.f32.gmra.mxu0 %v1052
    %v1350 = vpop.f32.mrf.mxu0
    %v1351 = vadd.f32 0.0, %v1350
    %1352 = vmatmul.f32.gmra.mxu0 %v1054
    %v1353 = vpop.f32.mrf.mxu0
    %v1354 = vadd.f32 0.0, %v1353
    %1355 = vmatmul.f32.gmra.mxu0 %v1056
    %v1356 = vpop.f32.mrf.mxu0
    %v1357 = vadd.f32 0.0, %v1356
    %1358 = vmatmul.f32.gmra.mxu0 %v1058
    %v1359 = vpop.f32.mrf.mxu0
    %v1360 = vadd.f32 0.0, %v1359
    %1361 = vmatmul.f32.gmra.mxu0 %v1060
    %v1362 = vpop.f32.mrf.mxu0
    %v1363 = vadd.f32 0.0, %v1362
    %1364 = vmatmul.f32.gmra.mxu0 %v1062
    %v1365 = vpop.f32.mrf.mxu0
    %v1366 = vadd.f32 0.0, %v1365
    %1367 = vmatmul.f32.gmra.mxu0 %v1064
    %v1368 = vpop.f32.mrf.mxu0
    %v1369 = vadd.f32 0.0, %v1368
    %1370 = vmatmul.f32.gmra.mxu0 %v1307
    %v1371 = vpop.f32.mrf.mxu0
    %v1372 = vadd.f32 0.0, %v1371
    %1373 = vdwg.mxu0
    %v1374 = vadd.f32 %v1282, %v1327
    %v1375 = vadd.f32 %v1283, %v1330
    %v1376 = vadd.f32 %v1284, %v1333
    %v1377 = vadd.f32 %v1285, %v1336
    %v1378 = vadd.f32 %v1286, %v1339
    %v1379 = vadd.f32 %v1287, %v1342
    %v1380 = vadd.f32 %v1288, %v1345
    %v1381 = vadd.f32 %v1289, %v1348
    %v1382 = vadd.f32 %v1290, %v1351
    %v1383 = vadd.f32 %v1291, %v1354
    %v1384 = vadd.f32 %v1292, %v1357
    %v1385 = vadd.f32 %v1293, %v1360
    %v1386 = vadd.f32 %v1294, %v1363
    %v1387 = vadd.f32 %v1295, %v1366
    %v1388 = vadd.f32 %v1296, %v1369
    %v1389 = vadd.f32 %v1297, %v1372
    %v1392 = vrot.slane %v822, 1
    %v1393 = vrot.slane %v823, 1
    %v1394 = vsel %vm882, %v1392, %v1393
    %v1395 = vrot.slane %v842, 1
    %v1396 = vrot.slane %v843, 1
    %v1397 = vsel %vm882, %v1395, %v1396
    %s1398 = scalar_lea.vmem %s4, 128
    %v1399 = vld [vmem:[%s1398] sm:$0xff]
    %v1400 = vld [vmem:[%s1398 + $0x8] sm:$0xff]
    %v1401 = vld [vmem:[%s1398 + $0x10] sm:$0xff]
    %v1402 = vld [vmem:[%s1398 + $0x18] sm:$0xff]
    %v1403 = vsel %vm936, %v1394, 0
    %v1405 = vsel %vm936, %v1397, 0
    %1407 = vmatpush.msra.mxu0 0.0
    %1408 = vmatpush.msra.mxu0 0.0
    %1409 = vmatpush.msra.mxu0 0.0
    %1410 = vmatpush.msra.mxu0 0.0
    %1411 = vmatpush.msra.mxu0 0.0
    %1412 = vmatpush.msra.mxu0 0.0
    %1413 = vmatpush.msra.mxu0 0.0
    %1414 = vmatpush.msra.mxu0 0.0
    %1415 = vmatpush.msra.mxu0 0.0
    %1416 = vmatpush.msra.mxu0 0.0
    %1417 = vmatpush.msra.mxu0 0.0
    %1418 = vmatpush.msra.mxu0 0.0
    %1419 = vmatpush.msra.mxu0 %v1402
    %1420 = vmatpush.msra.mxu0 %v1401
    %1421 = vmatpush.msra.mxu0 %v1400
    %1422 = vmatpush.msra.mxu0 %v1399
    %1423 = vmatmul.f32.gmra.mxu0 %v939
    %v1424 = vpop.f32.mrf.mxu0
    %v1425 = vadd.f32 0.0, %v1424
    %1426 = vmatmul.f32.gmra.mxu0 %v941
    %v1427 = vpop.f32.mrf.mxu0
    %v1428 = vadd.f32 0.0, %v1427
    %1429 = vmatmul.f32.gmra.mxu0 %v943
    %v1430 = vpop.f32.mrf.mxu0
    %v1431 = vadd.f32 0.0, %v1430
    %1432 = vmatmul.f32.gmra.mxu0 %v945
    %v1433 = vpop.f32.mrf.mxu0
    %v1434 = vadd.f32 0.0, %v1433
    %1435 = vmatmul.f32.gmra.mxu0 %v947
    %v1436 = vpop.f32.mrf.mxu0
    %v1437 = vadd.f32 0.0, %v1436
    %1438 = vmatmul.f32.gmra.mxu0 %v949
    %v1439 = vpop.f32.mrf.mxu0
    %v1440 = vadd.f32 0.0, %v1439
    %1441 = vmatmul.f32.gmra.mxu0 %v951
    %v1442 = vpop.f32.mrf.mxu0
    %v1443 = vadd.f32 0.0, %v1442
    %1444 = vmatmul.f32.gmra.mxu0 %v1403
    %v1445 = vpop.f32.mrf.mxu0
    %v1446 = vadd.f32 0.0, %v1445
    %1447 = vmatmul.f32.gmra.mxu0 %v955
    %v1448 = vpop.f32.mrf.mxu0
    %v1449 = vadd.f32 0.0, %v1448
    %1450 = vmatmul.f32.gmra.mxu0 %v957
    %v1451 = vpop.f32.mrf.mxu0
    %v1452 = vadd.f32 0.0, %v1451
    %1453 = vmatmul.f32.gmra.mxu0 %v959
    %v1454 = vpop.f32.mrf.mxu0
    %v1455 = vadd.f32 0.0, %v1454
    %1456 = vmatmul.f32.gmra.mxu0 %v961
    %v1457 = vpop.f32.mrf.mxu0
    %v1458 = vadd.f32 0.0, %v1457
    %1459 = vmatmul.f32.gmra.mxu0 %v963
    %v1460 = vpop.f32.mrf.mxu0
    %v1461 = vadd.f32 0.0, %v1460
    %1462 = vmatmul.f32.gmra.mxu0 %v965
    %v1463 = vpop.f32.mrf.mxu0
    %v1464 = vadd.f32 0.0, %v1463
    %1465 = vmatmul.f32.gmra.mxu0 %v967
    %v1466 = vpop.f32.mrf.mxu0
    %v1467 = vadd.f32 0.0, %v1466
    %1468 = vmatmul.f32.gmra.mxu0 %v1405
    %v1469 = vpop.f32.mrf.mxu0
    %v1470 = vadd.f32 0.0, %v1469
    %1471 = vdwg.mxu0
    %v1472 = vadd.f32 %v1374, %v1425
    %v1473 = vadd.f32 %v1375, %v1428
    %v1474 = vadd.f32 %v1376, %v1431
    %v1475 = vadd.f32 %v1377, %v1434
    %v1476 = vadd.f32 %v1378, %v1437
    %v1477 = vadd.f32 %v1379, %v1440
    %v1478 = vadd.f32 %v1380, %v1443
    %v1479 = vadd.f32 %v1381, %v1446
    %v1480 = vadd.f32 %v1382, %v1449
    %v1481 = vadd.f32 %v1383, %v1452
    %v1482 = vadd.f32 %v1384, %v1455
    %v1483 = vadd.f32 %v1385, %v1458
    %v1484 = vadd.f32 %v1386, %v1461
    %v1485 = vadd.f32 %v1387, %v1464
    %v1486 = vadd.f32 %v1388, %v1467
    %v1487 = vadd.f32 %v1389, %v1470
    %v1488 = vrot.slane %v822, 2
    %v1489 = vrot.slane %v823, 2
    %v1490 = vsel %vm1131, %v1488, %v1489
    %v1491 = vrot.slane %v842, 2
    %v1492 = vrot.slane %v843, 2
    %v1493 = vsel %vm1131, %v1491, %v1492
    %s1494 = scalar_lea.vmem %s4, 160
    %v1495 = vld [vmem:[%s1494] sm:$0xff]
    %v1496 = vld [vmem:[%s1494 + $0x8] sm:$0xff]
    %v1497 = vld [vmem:[%s1494 + $0x10] sm:$0xff]
    %v1498 = vld [vmem:[%s1494 + $0x18] sm:$0xff]
    %v1499 = vsel %vm936, %v1490, 0
    %v1501 = vsel %vm936, %v1493, 0
    %1503 = vmatpush.msra.mxu0 0.0
    %1504 = vmatpush.msra.mxu0 0.0
    %1505 = vmatpush.msra.mxu0 0.0
    %1506 = vmatpush.msra.mxu0 0.0
    %1507 = vmatpush.msra.mxu0 0.0
    %1508 = vmatpush.msra.mxu0 0.0
    %1509 = vmatpush.msra.mxu0 0.0
    %1510 = vmatpush.msra.mxu0 0.0
    %1511 = vmatpush.msra.mxu0 0.0
    %1512 = vmatpush.msra.mxu0 0.0
    %1513 = vmatpush.msra.mxu0 0.0
    %1514 = vmatpush.msra.mxu0 0.0
    %1515 = vmatpush.msra.mxu0 %v1498
    %1516 = vmatpush.msra.mxu0 %v1497
    %1517 = vmatpush.msra.mxu0 %v1496
    %1518 = vmatpush.msra.mxu0 %v1495
    %1519 = vmatmul.f32.gmra.mxu0 %v1187
    %v1520 = vpop.f32.mrf.mxu0
    %v1521 = vadd.f32 0.0, %v1520
    %1522 = vmatmul.f32.gmra.mxu0 %v1189
    %v1523 = vpop.f32.mrf.mxu0
    %v1524 = vadd.f32 0.0, %v1523
    %1525 = vmatmul.f32.gmra.mxu0 %v1191
    %v1526 = vpop.f32.mrf.mxu0
    %v1527 = vadd.f32 0.0, %v1526
    %1528 = vmatmul.f32.gmra.mxu0 %v1193
    %v1529 = vpop.f32.mrf.mxu0
    %v1530 = vadd.f32 0.0, %v1529
    %1531 = vmatmul.f32.gmra.mxu0 %v1195
    %v1532 = vpop.f32.mrf.mxu0
    %v1533 = vadd.f32 0.0, %v1532
    %1534 = vmatmul.f32.gmra.mxu0 %v1197
    %v1535 = vpop.f32.mrf.mxu0
    %v1536 = vadd.f32 0.0, %v1535
    %1537 = vmatmul.f32.gmra.mxu0 %v1199
    %v1538 = vpop.f32.mrf.mxu0
    %v1539 = vadd.f32 0.0, %v1538
    %1540 = vmatmul.f32.gmra.mxu0 %v1499
    %v1541 = vpop.f32.mrf.mxu0
    %v1542 = vadd.f32 0.0, %v1541
    %1543 = vmatmul.f32.gmra.mxu0 %v1203
    %v1544 = vpop.f32.mrf.mxu0
    %v1545 = vadd.f32 0.0, %v1544
    %1546 = vmatmul.f32.gmra.mxu0 %v1205
    %v1547 = vpop.f32.mrf.mxu0
    %v1548 = vadd.f32 0.0, %v1547
    %1549 = vmatmul.f32.gmra.mxu0 %v1207
    %v1550 = vpop.f32.mrf.mxu0
    %v1551 = vadd.f32 0.0, %v1550
    %1552 = vmatmul.f32.gmra.mxu0 %v1209
    %v1553 = vpop.f32.mrf.mxu0
    %v1554 = vadd.f32 0.0, %v1553
    %1555 = vmatmul.f32.gmra.mxu0 %v1211
    %v1556 = vpop.f32.mrf.mxu0
    %v1557 = vadd.f32 0.0, %v1556
    %1558 = vmatmul.f32.gmra.mxu0 %v1213
    %v1559 = vpop.f32.mrf.mxu0
    %v1560 = vadd.f32 0.0, %v1559
    %1561 = vmatmul.f32.gmra.mxu0 %v1215
    %v1562 = vpop.f32.mrf.mxu0
    %v1563 = vadd.f32 0.0, %v1562
    %1564 = vmatmul.f32.gmra.mxu0 %v1501
    %v1565 = vpop.f32.mrf.mxu0
    %v1566 = vadd.f32 0.0, %v1565
    %1567 = vdwg.mxu0
    %v1568 = vadd.f32 %v1472, %v1521
    %v1569 = vadd.f32 %v1473, %v1524
    %v1570 = vadd.f32 %v1474, %v1527
    %v1571 = vadd.f32 %v1475, %v1530
    %v1572 = vadd.f32 %v1476, %v1533
    %v1573 = vadd.f32 %v1477, %v1536
    %v1574 = vadd.f32 %v1478, %v1539
    %v1575 = vadd.f32 %v1479, %v1542
    %v1576 = vadd.f32 %v1480, %v1545
    %v1577 = vadd.f32 %v1481, %v1548
    %v1578 = vadd.f32 %v1482, %v1551
    %v1579 = vadd.f32 %v1483, %v1554
    %v1580 = vadd.f32 %v1484, %v1557
    %v1581 = vadd.f32 %v1485, %v1560
    %v1582 = vadd.f32 %v1486, %v1563
    %v1583 = vadd.f32 %v1487, %v1566
    %s1584 = scalar_lea.vmem %s4, 192
    %v1585 = vld [vmem:[%s1584] sm:$0xff]
    %v1586 = vld [vmem:[%s1584 + $0x8] sm:$0xff]
    %v1587 = vld [vmem:[%s1584 + $0x10] sm:$0xff]
    %v1588 = vld [vmem:[%s1584 + $0x18] sm:$0xff]
    %v1590 = vsel %vm936, %v824, 0
    %v1593 = vsel %vm936, %v844, 0
    %1595 = vmatpush.msra.mxu0 0.0
    %1596 = vmatpush.msra.mxu0 0.0
    %1597 = vmatpush.msra.mxu0 0.0
    %1598 = vmatpush.msra.mxu0 0.0
    %1599 = vmatpush.msra.mxu0 0.0
    %1600 = vmatpush.msra.mxu0 0.0
    %1601 = vmatpush.msra.mxu0 0.0
    %1602 = vmatpush.msra.mxu0 0.0
    %1603 = vmatpush.msra.mxu0 0.0
    %1604 = vmatpush.msra.mxu0 0.0
    %1605 = vmatpush.msra.mxu0 0.0
    %1606 = vmatpush.msra.mxu0 0.0
    %1607 = vmatpush.msra.mxu0 %v1588
    %1608 = vmatpush.msra.mxu0 %v1587
    %1609 = vmatpush.msra.mxu0 %v1586
    %1610 = vmatpush.msra.mxu0 %v1585
    %1611 = vmatmul.f32.gmra.mxu0 %v1038
    %v1612 = vpop.f32.mrf.mxu0
    %v1613 = vadd.f32 0.0, %v1612
    %1614 = vmatmul.f32.gmra.mxu0 %v1040
    %v1615 = vpop.f32.mrf.mxu0
    %v1616 = vadd.f32 0.0, %v1615
    %1617 = vmatmul.f32.gmra.mxu0 %v1042
    %v1618 = vpop.f32.mrf.mxu0
    %v1619 = vadd.f32 0.0, %v1618
    %1620 = vmatmul.f32.gmra.mxu0 %v1044
    %v1621 = vpop.f32.mrf.mxu0
    %v1622 = vadd.f32 0.0, %v1621
    %1623 = vmatmul.f32.gmra.mxu0 %v1046
    %v1624 = vpop.f32.mrf.mxu0
    %v1625 = vadd.f32 0.0, %v1624
    %1626 = vmatmul.f32.gmra.mxu0 %v1048
    %v1627 = vpop.f32.mrf.mxu0
    %v1628 = vadd.f32 0.0, %v1627
    %1629 = vmatmul.f32.gmra.mxu0 %v1304
    %v1630 = vpop.f32.mrf.mxu0
    %v1631 = vadd.f32 0.0, %v1630
    %1632 = vmatmul.f32.gmra.mxu0 %v1590
    %v1633 = vpop.f32.mrf.mxu0
    %v1634 = vadd.f32 0.0, %v1633
    %1635 = vmatmul.f32.gmra.mxu0 %v1054
    %v1636 = vpop.f32.mrf.mxu0
    %v1637 = vadd.f32 0.0, %v1636
    %1638 = vmatmul.f32.gmra.mxu0 %v1056
    %v1639 = vpop.f32.mrf.mxu0
    %v1640 = vadd.f32 0.0, %v1639
    %1641 = vmatmul.f32.gmra.mxu0 %v1058
    %v1642 = vpop.f32.mrf.mxu0
    %v1643 = vadd.f32 0.0, %v1642
    %1644 = vmatmul.f32.gmra.mxu0 %v1060
    %v1645 = vpop.f32.mrf.mxu0
    %v1646 = vadd.f32 0.0, %v1645
    %1647 = vmatmul.f32.gmra.mxu0 %v1062
    %v1648 = vpop.f32.mrf.mxu0
    %v1649 = vadd.f32 0.0, %v1648
    %1650 = vmatmul.f32.gmra.mxu0 %v1064
    %v1651 = vpop.f32.mrf.mxu0
    %v1652 = vadd.f32 0.0, %v1651
    %1653 = vmatmul.f32.gmra.mxu0 %v1307
    %v1654 = vpop.f32.mrf.mxu0
    %v1655 = vadd.f32 0.0, %v1654
    %1656 = vmatmul.f32.gmra.mxu0 %v1593
    %v1657 = vpop.f32.mrf.mxu0
    %v1658 = vadd.f32 0.0, %v1657
    %1659 = vdwg.mxu0
    %v1660 = vadd.f32 %v1568, %v1613
    %v1661 = vadd.f32 %v1569, %v1616
    %v1662 = vadd.f32 %v1570, %v1619
    %v1663 = vadd.f32 %v1571, %v1622
    %v1664 = vadd.f32 %v1572, %v1625
    %v1665 = vadd.f32 %v1573, %v1628
    %v1666 = vadd.f32 %v1574, %v1631
    %v1667 = vadd.f32 %v1575, %v1634
    %v1668 = vadd.f32 %v1576, %v1637
    %v1669 = vadd.f32 %v1577, %v1640
    %v1670 = vadd.f32 %v1578, %v1643
    %v1671 = vadd.f32 %v1579, %v1646
    %v1672 = vadd.f32 %v1580, %v1649
    %v1673 = vadd.f32 %v1581, %v1652
    %v1674 = vadd.f32 %v1582, %v1655
    %v1675 = vadd.f32 %v1583, %v1658
    %v1678 = vrot.slane %v824, 1
    %v1679 = vrot.slane %v825, 1
    %v1680 = vsel %vm882, %v1678, %v1679
    %v1681 = vrot.slane %v844, 1
    %v1682 = vrot.slane %v845, 1
    %v1683 = vsel %vm882, %v1681, %v1682
    %s1684 = scalar_lea.vmem %s4, 224
    %v1685 = vld [vmem:[%s1684] sm:$0xff]
    %v1686 = vld [vmem:[%s1684 + $0x8] sm:$0xff]
    %v1687 = vld [vmem:[%s1684 + $0x10] sm:$0xff]
    %v1688 = vld [vmem:[%s1684 + $0x18] sm:$0xff]
    %v1689 = vsel %vm936, %v1680, 0
    %v1691 = vsel %vm936, %v1683, 0
    %1693 = vmatpush.msra.mxu0 0.0
    %1694 = vmatpush.msra.mxu0 0.0
    %1695 = vmatpush.msra.mxu0 0.0
    %1696 = vmatpush.msra.mxu0 0.0
    %1697 = vmatpush.msra.mxu0 0.0
    %1698 = vmatpush.msra.mxu0 0.0
    %1699 = vmatpush.msra.mxu0 0.0
    %1700 = vmatpush.msra.mxu0 0.0
    %1701 = vmatpush.msra.mxu0 0.0
    %1702 = vmatpush.msra.mxu0 0.0
    %1703 = vmatpush.msra.mxu0 0.0
    %1704 = vmatpush.msra.mxu0 0.0
    %1705 = vmatpush.msra.mxu0 %v1688
    %1706 = vmatpush.msra.mxu0 %v1687
    %1707 = vmatpush.msra.mxu0 %v1686
    %1708 = vmatpush.msra.mxu0 %v1685
    %1709 = vmatmul.f32.gmra.mxu0 %v941
    %v1710 = vpop.f32.mrf.mxu0
    %v1711 = vadd.f32 0.0, %v1710
    %1712 = vmatmul.f32.gmra.mxu0 %v943
    %v1713 = vpop.f32.mrf.mxu0
    %v1714 = vadd.f32 0.0, %v1713
    %1715 = vmatmul.f32.gmra.mxu0 %v945
    %v1716 = vpop.f32.mrf.mxu0
    %v1717 = vadd.f32 0.0, %v1716
    %1718 = vmatmul.f32.gmra.mxu0 %v947
    %v1719 = vpop.f32.mrf.mxu0
    %v1720 = vadd.f32 0.0, %v1719
    %1721 = vmatmul.f32.gmra.mxu0 %v949
    %v1722 = vpop.f32.mrf.mxu0
    %v1723 = vadd.f32 0.0, %v1722
    %1724 = vmatmul.f32.gmra.mxu0 %v951
    %v1725 = vpop.f32.mrf.mxu0
    %v1726 = vadd.f32 0.0, %v1725
    %1727 = vmatmul.f32.gmra.mxu0 %v1403
    %v1728 = vpop.f32.mrf.mxu0
    %v1729 = vadd.f32 0.0, %v1728
    %1730 = vmatmul.f32.gmra.mxu0 %v1689
    %v1731 = vpop.f32.mrf.mxu0
    %v1732 = vadd.f32 0.0, %v1731
    %1733 = vmatmul.f32.gmra.mxu0 %v957
    %v1734 = vpop.f32.mrf.mxu0
    %v1735 = vadd.f32 0.0, %v1734
    %1736 = vmatmul.f32.gmra.mxu0 %v959
    %v1737 = vpop.f32.mrf.mxu0
    %v1738 = vadd.f32 0.0, %v1737
    %1739 = vmatmul.f32.gmra.mxu0 %v961
    %v1740 = vpop.f32.mrf.mxu0
    %v1741 = vadd.f32 0.0, %v1740
    %1742 = vmatmul.f32.gmra.mxu0 %v963
    %v1743 = vpop.f32.mrf.mxu0
    %v1744 = vadd.f32 0.0, %v1743
    %1745 = vmatmul.f32.gmra.mxu0 %v965
    %v1746 = vpop.f32.mrf.mxu0
    %v1747 = vadd.f32 0.0, %v1746
    %1748 = vmatmul.f32.gmra.mxu0 %v967
    %v1749 = vpop.f32.mrf.mxu0
    %v1750 = vadd.f32 0.0, %v1749
    %1751 = vmatmul.f32.gmra.mxu0 %v1405
    %v1752 = vpop.f32.mrf.mxu0
    %v1753 = vadd.f32 0.0, %v1752
    %1754 = vmatmul.f32.gmra.mxu0 %v1691
    %v1755 = vpop.f32.mrf.mxu0
    %v1756 = vadd.f32 0.0, %v1755
    %1757 = vdwg.mxu0
    %v1758 = vadd.f32 %v1660, %v1711
    %v1759 = vadd.f32 %v1661, %v1714
    %v1760 = vadd.f32 %v1662, %v1717
    %v1761 = vadd.f32 %v1663, %v1720
    %v1762 = vadd.f32 %v1664, %v1723
    %v1763 = vadd.f32 %v1665, %v1726
    %v1764 = vadd.f32 %v1666, %v1729
    %v1765 = vadd.f32 %v1667, %v1732
    %v1766 = vadd.f32 %v1668, %v1735
    %v1767 = vadd.f32 %v1669, %v1738
    %v1768 = vadd.f32 %v1670, %v1741
    %v1769 = vadd.f32 %v1671, %v1744
    %v1770 = vadd.f32 %v1672, %v1747
    %v1771 = vadd.f32 %v1673, %v1750
    %v1772 = vadd.f32 %v1674, %v1753
    %v1773 = vadd.f32 %v1675, %v1756
    %v1774 = vrot.slane %v824, 2
    %v1775 = vrot.slane %v825, 2
    %v1776 = vsel %vm1131, %v1774, %v1775
    %v1777 = vrot.slane %v844, 2
    %v1778 = vrot.slane %v845, 2
    %v1779 = vsel %vm1131, %v1777, %v1778
    %s1780 = scalar_lea.vmem %s4, 256
    %v1781 = vld [vmem:[%s1780] sm:$0xff]
    %v1782 = vld [vmem:[%s1780 + $0x8] sm:$0xff]
    %v1783 = vld [vmem:[%s1780 + $0x10] sm:$0xff]
    %v1784 = vld [vmem:[%s1780 + $0x18] sm:$0xff]
    %v1785 = vsel %vm936, %v1776, 0
    %v1787 = vsel %vm936, %v1779, 0
    %1789 = vmatpush.msra.mxu0 0.0
    %1790 = vmatpush.msra.mxu0 0.0
    %1791 = vmatpush.msra.mxu0 0.0
    %1792 = vmatpush.msra.mxu0 0.0
    %1793 = vmatpush.msra.mxu0 0.0
    %1794 = vmatpush.msra.mxu0 0.0
    %1795 = vmatpush.msra.mxu0 0.0
    %1796 = vmatpush.msra.mxu0 0.0
    %1797 = vmatpush.msra.mxu0 0.0
    %1798 = vmatpush.msra.mxu0 0.0
    %1799 = vmatpush.msra.mxu0 0.0
    %1800 = vmatpush.msra.mxu0 0.0
    %1801 = vmatpush.msra.mxu0 %v1784
    %1802 = vmatpush.msra.mxu0 %v1783
    %1803 = vmatpush.msra.mxu0 %v1782
    %1804 = vmatpush.msra.mxu0 %v1781
    %1805 = vmatmul.f32.gmra.mxu0 %v1189
    %v1806 = vpop.f32.mrf.mxu0
    %v1807 = vadd.f32 0.0, %v1806
    %1808 = vmatmul.f32.gmra.mxu0 %v1191
    %v1809 = vpop.f32.mrf.mxu0
    %v1810 = vadd.f32 0.0, %v1809
    %1811 = vmatmul.f32.gmra.mxu0 %v1193
    %v1812 = vpop.f32.mrf.mxu0
    %v1813 = vadd.f32 0.0, %v1812
    %1814 = vmatmul.f32.gmra.mxu0 %v1195
    %v1815 = vpop.f32.mrf.mxu0
    %v1816 = vadd.f32 0.0, %v1815
    %1817 = vmatmul.f32.gmra.mxu0 %v1197
    %v1818 = vpop.f32.mrf.mxu0
    %v1819 = vadd.f32 0.0, %v1818
    %1820 = vmatmul.f32.gmra.mxu0 %v1199
    %v1821 = vpop.f32.mrf.mxu0
    %v1822 = vadd.f32 0.0, %v1821
    %1823 = vmatmul.f32.gmra.mxu0 %v1499
    %v1824 = vpop.f32.mrf.mxu0
    %v1825 = vadd.f32 0.0, %v1824
    %1826 = vmatmul.f32.gmra.mxu0 %v1785
    %v1827 = vpop.f32.mrf.mxu0
    %v1828 = vadd.f32 0.0, %v1827
    %1829 = vmatmul.f32.gmra.mxu0 %v1205
    %v1830 = vpop.f32.mrf.mxu0
    %v1831 = vadd.f32 0.0, %v1830
    %1832 = vmatmul.f32.gmra.mxu0 %v1207
    %v1833 = vpop.f32.mrf.mxu0
    %v1834 = vadd.f32 0.0, %v1833
    %1835 = vmatmul.f32.gmra.mxu0 %v1209
    %v1836 = vpop.f32.mrf.mxu0
    %v1837 = vadd.f32 0.0, %v1836
    %1838 = vmatmul.f32.gmra.mxu0 %v1211
    %v1839 = vpop.f32.mrf.mxu0
    %v1840 = vadd.f32 0.0, %v1839
    %1841 = vmatmul.f32.gmra.mxu0 %v1213
    %v1842 = vpop.f32.mrf.mxu0
    %v1843 = vadd.f32 0.0, %v1842
    %1844 = vmatmul.f32.gmra.mxu0 %v1215
    %v1845 = vpop.f32.mrf.mxu0
    %v1846 = vadd.f32 0.0, %v1845
    %1847 = vmatmul.f32.gmra.mxu0 %v1501
    %v1848 = vpop.f32.mrf.mxu0
    %v1849 = vadd.f32 0.0, %v1848
    %1850 = vmatmul.f32.gmra.mxu0 %v1787
    %v1851 = vpop.f32.mrf.mxu0
    %v1852 = vadd.f32 0.0, %v1851
    %1853 = vdwg.mxu0
    %v1854 = vadd.f32 %v1758, %v1807
    %v1855 = vadd.f32 %v1759, %v1810
    %v1856 = vadd.f32 %v1760, %v1813
    %v1857 = vadd.f32 %v1761, %v1816
    %v1858 = vadd.f32 %v1762, %v1819
    %v1859 = vadd.f32 %v1763, %v1822
    %v1860 = vadd.f32 %v1764, %v1825
    %v1861 = vadd.f32 %v1765, %v1828
    %v1862 = vadd.f32 %v1766, %v1831
    %v1863 = vadd.f32 %v1767, %v1834
    %v1864 = vadd.f32 %v1768, %v1837
    %v1865 = vadd.f32 %v1769, %v1840
    %v1866 = vadd.f32 %v1770, %v1843
    %v1867 = vadd.f32 %v1771, %v1846
    %v1868 = vadd.f32 %v1772, %v1849
    %v1869 = vadd.f32 %v1773, %v1852
    %v1870 = vld [vmem:[%s5] sm:$0x1]
    %v1872 = vperm.slane %v1870, 0
    %v1874 = vadd.f32 %v1854, %v1872
    %v1875 = vadd.f32 %v1855, %v1872
    %v1876 = vadd.f32 %v1856, %v1872
    %v1877 = vadd.f32 %v1857, %v1872
    %v1878 = vadd.f32 %v1858, %v1872
    %v1879 = vadd.f32 %v1859, %v1872
    %v1880 = vadd.f32 %v1860, %v1872
    %v1881 = vadd.f32 %v1861, %v1872
    %v1882 = vadd.f32 %v1862, %v1872
    %v1883 = vadd.f32 %v1863, %v1872
    %v1884 = vadd.f32 %v1864, %v1872
    %v1885 = vadd.f32 %v1865, %v1872
    %v1886 = vadd.f32 %v1866, %v1872
    %v1887 = vadd.f32 %v1867, %v1872
    %v1888 = vadd.f32 %v1868, %v1872
    %v1889 = vadd.f32 %v1869, %v1872
    %v1890 = vmax.f32 %v1874, 0.0
    %v1891 = vmax.f32 %v1875, 0.0
    %v1892 = vmax.f32 %v1876, 0.0
    %v1893 = vmax.f32 %v1877, 0.0
    %v1894 = vmax.f32 %v1878, 0.0
    %v1895 = vmax.f32 %v1879, 0.0
    %v1896 = vmax.f32 %v1880, 0.0
    %v1897 = vmax.f32 %v1881, 0.0
    %v1898 = vmax.f32 %v1882, 0.0
    %v1899 = vmax.f32 %v1883, 0.0
    %v1900 = vmax.f32 %v1884, 0.0
    %v1901 = vmax.f32 %v1885, 0.0
    %v1902 = vmax.f32 %v1886, 0.0
    %v1903 = vmax.f32 %v1887, 0.0
    %v1904 = vmax.f32 %v1888, 0.0
    %v1905 = vmax.f32 %v1889, 0.0
    %v1906 = vld [vmem:[%s6] sm:$0xff]
    %v1907 = vld [vmem:[%s6 + $0x8] sm:$0xff]
    %v1908 = vld [vmem:[%s7] sm:$0xff]
    %v1909 = vld [vmem:[%s7 + $0x8] sm:$0xff]
    %v1910 = vld [vmem:[%s7 + $0x10] sm:$0xff]
    %v1911 = vld [vmem:[%s7 + $0x18] sm:$0xff]
    %v1912 = vld [vmem:[%s9] sm:$0x1]
    %v1914 = vperm.slane %v1912, 0
    %v1917 = vsel %vm936, %v1906, 0
    %v1920 = vsel %vm936, %v1907, 0
    %1922 = vmatpush.msra.mxu0 0.0
    %1923 = vmatpush.msra.mxu0 0.0
    %1924 = vmatpush.msra.mxu0 0.0
    %1925 = vmatpush.msra.mxu0 0.0
    %1926 = vmatpush.msra.mxu0 0.0
    %1927 = vmatpush.msra.mxu0 0.0
    %1928 = vmatpush.msra.mxu0 0.0
    %1929 = vmatpush.msra.mxu0 0.0
    %1930 = vmatpush.msra.mxu0 0.0
    %1931 = vmatpush.msra.mxu0 0.0
    %1932 = vmatpush.msra.mxu0 0.0
    %1933 = vmatpush.msra.mxu0 0.0
    %1934 = vmatpush.msra.mxu0 %v1911
    %1935 = vmatpush.msra.mxu0 %v1910
    %1936 = vmatpush.msra.mxu0 %v1909
    %1937 = vmatpush.msra.mxu0 %v1908
    %1938 = vmatmul.f32.gmra.mxu0 %v1917
    %v1939 = vpop.f32.mrf.mxu0
    %v1940 = vadd.f32 %v1914, %v1939
    %1941 = vmatmul.f32.gmra.mxu0 %v1920
    %v1942 = vpop.f32.mrf.mxu0
    %v1943 = vadd.f32 %v1914, %v1942
    %1944 = vdwg.mxu0
    %v1945 = vld [vmem:[%s8] sm:$0xff]
    %v1946 = vld [vmem:[%s8 + $0x8] sm:$0xff]
    %v1947 = vld [vmem:[%s8 + $0x10] sm:$0xff]
    %v1948 = vld [vmem:[%s8 + $0x18] sm:$0xff]
    %v1950 = vsel %vm936, 0.0, 0
    %1952 = vmatpush.msra.mxu0 0.0
    %1953 = vmatpush.msra.mxu0 0.0
    %1954 = vmatpush.msra.mxu0 0.0
    %1955 = vmatpush.msra.mxu0 0.0
    %1956 = vmatpush.msra.mxu0 0.0
    %1957 = vmatpush.msra.mxu0 0.0
    %1958 = vmatpush.msra.mxu0 0.0
    %1959 = vmatpush.msra.mxu0 0.0
    %1960 = vmatpush.msra.mxu0 0.0
    %1961 = vmatpush.msra.mxu0 0.0
    %1962 = vmatpush.msra.mxu0 0.0
    %1963 = vmatpush.msra.mxu0 0.0
    %1964 = vmatpush.msra.mxu0 %v1948
    %1965 = vmatpush.msra.mxu0 %v1947
    %1966 = vmatpush.msra.mxu0 %v1946
    %1967 = vmatpush.msra.mxu0 %v1945
    %1968 = vmatmul.f32.gmra.mxu0 %v1950
    %v1969 = vpop.f32.mrf.mxu0
    %v1970 = vadd.f32 0.0, %v1969
    %1971 = vdwg.mxu0
    %v1972 = vadd.f32 %v1940, %v1970
    %v1973 = vxor.u32 %v1972, 2147483648
    %v1974 = vmul.f32 %v1973, 1.442695
    %v1975 = vpow.pop %v1974
    %v1976 = vadd.f32 %v1975, 1.0
    %v1977 = vrcp.pop %v1976
    %v1978 = vmul.f32 %v1976, %v1977
    %v1979 = vsub.f32 1.0, %v1978
    %v1980 = vmul.f32 %v1977, %v1979
    %v1981 = vadd.f32 %v1977, %v1980
    %vm1982 = vweird.f32 %v1976
    %vm1983 = vweird.f32 %v1977
    %vm1984 = vmor %vm1982, %vm1983
    %v1985 = vsel %vm1984, %v1977, %v1981
    %v1986 = vand.u32 2147483647, %v1976
    %vm1987 = vcmp.eq.f32.partialorder %v1986, 8.507059e+37
    %v1988 = vand.u32 %v1976, 2147483648
    %v1989 = vor.u32 1.1754944e-38, %v1988
    %v1990 = vsel %vm1987, %v1989, %v1985
    %v1991 = vmul.f32 1.0, %v1990
    %v1992 = vtanh.pop %v1972
    %v1993 = vmul.f32 %v1991, 0.0
    %1995 = vrot.lane.b32.xlu0 %v1992, 64
    %v1996 = vpop.permute.xlu0 %1995
    %v1998 = vmul.f32 %v1991, %v1996
    %2000 = vrot.lane.b32.xlu0 %v1998, 32
    %v2001 = vpop.permute.xlu0 %2000
    %v2003 = vadd.f32 %v1993, %v2001
    %v2004 = vtanh.pop %v2003
    %2006 = vrot.lane.b32.xlu0 %v2004, 64
    %v2007 = vpop.permute.xlu0 %2006
    %v2009 = vmul.f32 %v1991, %v2007
    %v2010 = vld [vmem:[%s10] sm:$0x3]
    %2012 = vset.pattern.permute.xlu0 0
    %2013 = vperm.xlu0 %2012, %v2010
    %v2014 = vpop.permute.xlu0 %2013
    %v2016 = vmul.f32 %v2014, %v2009
    %v2017 = vadd.f32 %v2016, 0.0
    %2019 = vrot.lane.b32.xlu0 %v2009, 32
    %v2020 = vpop.permute.xlu0 %2019
    %v2021 = vsel %vm936, %v2020, 0
    %2023 = vmatpush.msra.mxu0 0.0
    %2024 = vmatpush.msra.mxu0 0.0
    %2025 = vmatpush.msra.mxu0 0.0
    %2026 = vmatpush.msra.mxu0 0.0
    %2027 = vmatpush.msra.mxu0 0.0
    %2028 = vmatpush.msra.mxu0 0.0
    %2029 = vmatpush.msra.mxu0 0.0
    %2030 = vmatpush.msra.mxu0 0.0
    %2031 = vmatpush.msra.mxu0 0.0
    %2032 = vmatpush.msra.mxu0 0.0
    %2033 = vmatpush.msra.mxu0 0.0
    %2034 = vmatpush.msra.mxu0 0.0
    %2035 = vmatpush.msra.mxu0 %v1948
    %2036 = vmatpush.msra.mxu0 %v1947
    %2037 = vmatpush.msra.mxu0 %v1946
    %2038 = vmatpush.msra.mxu0 %v1945
    %2039 = vmatmul.f32.gmra.mxu0 %v2021
    %v2040 = vpop.f32.mrf.mxu0
    %v2041 = vadd.f32 0.0, %v2040
    %2042 = vdwg.mxu0
    %v2044 = vrot.slane %v2041, 6
    %v2046 = vadd.f32 %v1940, %v2044
    %v2047 = vxor.u32 %v2046, 2147483648
    %v2048 = vmul.f32 %v2047, 1.442695
    %v2049 = vpow.pop %v2048
    %v2050 = vadd.f32 %v2049, 1.0
    %v2051 = vrcp.pop %v2050
    %v2052 = vmul.f32 %v2050, %v2051
    %v2053 = vsub.f32 1.0, %v2052
    %v2054 = vmul.f32 %v2051, %v2053
    %v2055 = vadd.f32 %v2051, %v2054
    %vm2056 = vweird.f32 %v2050
    %vm2057 = vweird.f32 %v2051
    %vm2058 = vmor %vm2056, %vm2057
    %v2059 = vsel %vm2058, %v2051, %v2055
    %v2060 = vand.u32 2147483647, %v2050
    %vm2061 = vcmp.eq.f32.partialorder %v2060, 8.507059e+37
    %v2062 = vand.u32 %v2050, 2147483648
    %v2063 = vor.u32 1.1754944e-38, %v2062
    %v2064 = vsel %vm2061, %v2063, %v2059
    %v2065 = vmul.f32 1.0, %v2064
    %v2066 = vtanh.pop %v2046
    %v2068 = vrot.slane %v2003, 6
    %v2070 = vmul.f32 %v2065, %v2068
    %2072 = vrot.lane.b32.xlu0 %v2066, 64
    %v2073 = vpop.permute.xlu0 %2072
    %v2075 = vmul.f32 %v2065, %v2073
    %2077 = vrot.lane.b32.xlu0 %v2075, 32
    %v2078 = vpop.permute.xlu0 %2077
    %v2080 = vadd.f32 %v2070, %v2078
    %v2081 = vtanh.pop %v2080
    %2083 = vrot.lane.b32.xlu0 %v2081, 64
    %v2084 = vpop.permute.xlu0 %2083
    %v2086 = vmul.f32 %v2065, %v2084
    %2087 = vset.pattern.permute.xlu0 1
    %2088 = vperm.xlu0 %2087, %v2010
    %v2089 = vpop.permute.xlu0 %2088
    %v2092 = vrot.slane %v2086, 2
    %2093 = vrot.lane.b32.xlu0 %v2092, 32
    %v2094 = vpop.permute.xlu0 %2093
    %v2096 = vmul.f32 %v2089, %v2094
    %2098 = vrot.lane.b32.xlu0 %v2096, 96
    %v2099 = vpop.permute.xlu0 %2098
    %v2101 = vadd.f32 %v2017, %v2099
    %v2102 = vsel %vm936, %v2094, 0
    %2104 = vmatpush.msra.mxu0 0.0
    %2105 = vmatpush.msra.mxu0 0.0
    %2106 = vmatpush.msra.mxu0 0.0
    %2107 = vmatpush.msra.mxu0 0.0
    %2108 = vmatpush.msra.mxu0 0.0
    %2109 = vmatpush.msra.mxu0 0.0
    %2110 = vmatpush.msra.mxu0 0.0
    %2111 = vmatpush.msra.mxu0 0.0
    %2112 = vmatpush.msra.mxu0 0.0
    %2113 = vmatpush.msra.mxu0 0.0
    %2114 = vmatpush.msra.mxu0 0.0
    %2115 = vmatpush.msra.mxu0 0.0
    %2116 = vmatpush.msra.mxu0 %v1948
    %2117 = vmatpush.msra.mxu0 %v1947
    %2118 = vmatpush.msra.mxu0 %v1946
    %2119 = vmatpush.msra.mxu0 %v1945
    %2120 = vmatmul.f32.gmra.mxu0 %v2102
    %v2121 = vpop.f32.mrf.mxu0
    %v2122 = vadd.f32 0.0, %v2121
    %2123 = vdwg.mxu0
    %v2125 = vrot.slane %v2122, 4
    %v2127 = vadd.f32 %v1940, %v2125
    %v2128 = vxor.u32 %v2127, 2147483648
    %v2129 = vmul.f32 %v2128, 1.442695
    %v2130 = vpow.pop %v2129
    %v2131 = vadd.f32 %v2130, 1.0
    %v2132 = vrcp.pop %v2131
    %v2133 = vmul.f32 %v2131, %v2132
    %v2134 = vsub.f32 1.0, %v2133
    %v2135 = vmul.f32 %v2132, %v2134
    %v2136 = vadd.f32 %v2132, %v2135
    %vm2137 = vweird.f32 %v2131
    %vm2138 = vweird.f32 %v2132
    %vm2139 = vmor %vm2137, %vm2138
    %v2140 = vsel %vm2139, %v2132, %v2136
    %v2141 = vand.u32 2147483647, %v2131
    %vm2142 = vcmp.eq.f32.partialorder %v2141, 8.507059e+37
    %v2143 = vand.u32 %v2131, 2147483648
    %v2144 = vor.u32 1.1754944e-38, %v2143
    %v2145 = vsel %vm2142, %v2144, %v2140
    %v2146 = vmul.f32 1.0, %v2145
    %v2147 = vtanh.pop %v2127
    %v2149 = vrot.slane %v2080, 6
    %v2151 = vmul.f32 %v2146, %v2149
    %2153 = vrot.lane.b32.xlu0 %v2147, 64
    %v2154 = vpop.permute.xlu0 %2153
    %v2156 = vmul.f32 %v2146, %v2154
    %2158 = vrot.lane.b32.xlu0 %v2156, 32
    %v2159 = vpop.permute.xlu0 %2158
    %v2161 = vadd.f32 %v2151, %v2159
    %v2162 = vtanh.pop %v2161
    %2164 = vrot.lane.b32.xlu0 %v2162, 64
    %v2165 = vpop.permute.xlu0 %2164
    %v2167 = vmul.f32 %v2146, %v2165
    %2168 = vset.pattern.permute.xlu0 2
    %2169 = vperm.xlu0 %2168, %v2010
    %v2170 = vpop.permute.xlu0 %2169
    %v2173 = vrot.slane %v2167, 4
    %2174 = vrot.lane.b32.xlu0 %v2173, 32
    %v2175 = vpop.permute.xlu0 %2174
    %v2177 = vmul.f32 %v2170, %v2175
    %2179 = vrot.lane.b32.xlu0 %v2177, 96
    %v2180 = vpop.permute.xlu0 %2179
    %v2182 = vadd.f32 %v2101, %v2180
    %v2183 = vsel %vm936, %v2175, 0
    %2185 = vmatpush.msra.mxu0 0.0
    %2186 = vmatpush.msra.mxu0 0.0
    %2187 = vmatpush.msra.mxu0 0.0
    %2188 = vmatpush.msra.mxu0 0.0
    %2189 = vmatpush.msra.mxu0 0.0
    %2190 = vmatpush.msra.mxu0 0.0
    %2191 = vmatpush.msra.mxu0 0.0
    %2192 = vmatpush.msra.mxu0 0.0
    %2193 = vmatpush.msra.mxu0 0.0
    %2194 = vmatpush.msra.mxu0 0.0
    %2195 = vmatpush.msra.mxu0 0.0
    %2196 = vmatpush.msra.mxu0 0.0
    %2197 = vmatpush.msra.mxu0 %v1948
    %2198 = vmatpush.msra.mxu0 %v1947
    %2199 = vmatpush.msra.mxu0 %v1946
    %2200 = vmatpush.msra.mxu0 %v1945
    %2201 = vmatmul.f32.gmra.mxu0 %v2183
    %v2202 = vpop.f32.mrf.mxu0
    %v2203 = vadd.f32 0.0, %v2202
    %2204 = vdwg.mxu0
    %v2206 = vrot.slane %v2203, 2
    %v2208 = vadd.f32 %v1940, %v2206
    %v2209 = vxor.u32 %v2208, 2147483648
    %v2210 = vmul.f32 %v2209, 1.442695
    %v2211 = vpow.pop %v2210
    %v2212 = vadd.f32 %v2211, 1.0
    %v2213 = vrcp.pop %v2212
    %v2214 = vmul.f32 %v2212, %v2213
    %v2215 = vsub.f32 1.0, %v2214
    %v2216 = vmul.f32 %v2213, %v2215
    %v2217 = vadd.f32 %v2213, %v2216
    %vm2218 = vweird.f32 %v2212
    %vm2219 = vweird.f32 %v2213
    %vm2220 = vmor %vm2218, %vm2219
    %v2221 = vsel %vm2220, %v2213, %v2217
    %v2222 = vand.u32 2147483647, %v2212
    %vm2223 = vcmp.eq.f32.partialorder %v2222, 8.507059e+37
    %v2224 = vand.u32 %v2212, 2147483648
    %v2225 = vor.u32 1.1754944e-38, %v2224
    %v2226 = vsel %vm2223, %v2225, %v2221
    %v2227 = vmul.f32 1.0, %v2226
    %v2228 = vtanh.pop %v2208
    %v2230 = vrot.slane %v2161, 6
    %v2232 = vmul.f32 %v2227, %v2230
    %2234 = vrot.lane.b32.xlu0 %v2228, 64
    %v2235 = vpop.permute.xlu0 %2234
    %v2237 = vmul.f32 %v2227, %v2235
    %2239 = vrot.lane.b32.xlu0 %v2237, 32
    %v2240 = vpop.permute.xlu0 %2239
    %v2242 = vadd.f32 %v2232, %v2240
    %v2243 = vtanh.pop %v2242
    %2245 = vrot.lane.b32.xlu0 %v2243, 64
    %v2246 = vpop.permute.xlu0 %2245
    %v2248 = vmul.f32 %v2227, %v2246
    %2249 = vset.pattern.permute.xlu0 3
    %2250 = vperm.xlu0 %2249, %v2010
    %v2251 = vpop.permute.xlu0 %2250
    %v2254 = vrot.slane %v2248, 6
    %2255 = vrot.lane.b32.xlu0 %v2254, 32
    %v2256 = vpop.permute.xlu0 %2255
    %v2258 = vmul.f32 %v2251, %v2256
    %2260 = vrot.lane.b32.xlu0 %v2258, 96
    %v2261 = vpop.permute.xlu0 %2260
    %v2263 = vadd.f32 %v2182, %v2261
    %v2264 = vsel %vm936, %v2256, 0
    %2266 = vmatpush.msra.mxu0 0.0
    %2267 = vmatpush.msra.mxu0 0.0
    %2268 = vmatpush.msra.mxu0 0.0
    %2269 = vmatpush.msra.mxu0 0.0
    %2270 = vmatpush.msra.mxu0 0.0
    %2271 = vmatpush.msra.mxu0 0.0
    %2272 = vmatpush.msra.mxu0 0.0
    %2273 = vmatpush.msra.mxu0 0.0
    %2274 = vmatpush.msra.mxu0 0.0
    %2275 = vmatpush.msra.mxu0 0.0
    %2276 = vmatpush.msra.mxu0 0.0
    %2277 = vmatpush.msra.mxu0 0.0
    %2278 = vmatpush.msra.mxu0 %v1948
    %2279 = vmatpush.msra.mxu0 %v1947
    %2280 = vmatpush.msra.mxu0 %v1946
    %2281 = vmatpush.msra.mxu0 %v1945
    %2282 = vmatmul.f32.gmra.mxu0 %v2264
    %v2283 = vpop.f32.mrf.mxu0
    %v2284 = vadd.f32 0.0, %v2283
    %2285 = vdwg.mxu0
    %v2286 = vadd.f32 %v1943, %v2284
    %v2287 = vxor.u32 %v2286, 2147483648
    %v2288 = vmul.f32 %v2287, 1.442695
    %v2289 = vpow.pop %v2288
    %v2290 = vadd.f32 %v2289, 1.0
    %v2291 = vrcp.pop %v2290
    %v2292 = vmul.f32 %v2290, %v2291
    %v2293 = vsub.f32 1.0, %v2292
    %v2294 = vmul.f32 %v2291, %v2293
    %v2295 = vadd.f32 %v2291, %v2294
    %vm2296 = vweird.f32 %v2290
    %vm2297 = vweird.f32 %v2291
    %vm2298 = vmor %vm2296, %vm2297
    %v2299 = vsel %vm2298, %v2291, %v2295
    %v2300 = vand.u32 2147483647, %v2290
    %vm2301 = vcmp.eq.f32.partialorder %v2300, 8.507059e+37
    %v2302 = vand.u32 %v2290, 2147483648
    %v2303 = vor.u32 1.1754944e-38, %v2302
    %v2304 = vsel %vm2301, %v2303, %v2299
    %v2305 = vmul.f32 1.0, %v2304
    %v2306 = vtanh.pop %v2286
    %v2308 = vrot.slane %v2242, 6
    %v2310 = vmul.f32 %v2305, %v2308
    %2312 = vrot.lane.b32.xlu0 %v2306, 64
    %v2313 = vpop.permute.xlu0 %2312
    %v2315 = vmul.f32 %v2305, %v2313
    %2317 = vrot.lane.b32.xlu0 %v2315, 32
    %v2318 = vpop.permute.xlu0 %2317
    %v2320 = vadd.f32 %v2310, %v2318
    %v2321 = vtanh.pop %v2320
    %2323 = vrot.lane.b32.xlu0 %v2321, 64
    %v2324 = vpop.permute.xlu0 %2323
    %v2326 = vmul.f32 %v2305, %v2324
    %2327 = vset.pattern.permute.xlu0 4
    %2328 = vperm.xlu0 %2327, %v2010
    %v2329 = vpop.permute.xlu0 %2328
    %v2331 = vmul.f32 %v2329, %v2326
    %v2332 = vadd.f32 %v2263, %v2331
    %2334 = vrot.lane.b32.xlu0 %v2326, 32
    %v2335 = vpop.permute.xlu0 %2334
    %v2336 = vsel %vm936, %v2335, 0
    %2338 = vmatpush.msra.mxu0 0.0
    %2339 = vmatpush.msra.mxu0 0.0
    %2340 = vmatpush.msra.mxu0 0.0
    %2341 = vmatpush.msra.mxu0 0.0
    %2342 = vmatpush.msra.mxu0 0.0
    %2343 = vmatpush.msra.mxu0 0.0
    %2344 = vmatpush.msra.mxu0 0.0
    %2345 = vmatpush.msra.mxu0 0.0
    %2346 = vmatpush.msra.mxu0 0.0
    %2347 = vmatpush.msra.mxu0 0.0
    %2348 = vmatpush.msra.mxu0 0.0
    %2349 = vmatpush.msra.mxu0 0.0
    %2350 = vmatpush.msra.mxu0 %v1948
    %2351 = vmatpush.msra.mxu0 %v1947
    %2352 = vmatpush.msra.mxu0 %v1946
    %2353 = vmatpush.msra.mxu0 %v1945
    %2354 = vmatmul.f32.gmra.mxu0 %v2336
    %v2355 = vpop.f32.mrf.mxu0
    %v2356 = vadd.f32 0.0, %v2355
    %2357 = vdwg.mxu0
    %v2359 = vrot.slane %v2356, 6
    %v2361 = vadd.f32 %v1943, %v2359
    %v2362 = vxor.u32 %v2361, 2147483648
    %v2363 = vmul.f32 %v2362, 1.442695
    %v2364 = vpow.pop %v2363
    %v2365 = vadd.f32 %v2364, 1.0
    %v2366 = vrcp.pop %v2365
    %v2367 = vmul.f32 %v2365, %v2366
    %v2368 = vsub.f32 1.0, %v2367
    %v2369 = vmul.f32 %v2366, %v2368
    %v2370 = vadd.f32 %v2366, %v2369
    %vm2371 = vweird.f32 %v2365
    %vm2372 = vweird.f32 %v2366
    %vm2373 = vmor %vm2371, %vm2372
    %v2374 = vsel %vm2373, %v2366, %v2370
    %v2375 = vand.u32 2147483647, %v2365
    %vm2376 = vcmp.eq.f32.partialorder %v2375, 8.507059e+37
    %v2377 = vand.u32 %v2365, 2147483648
    %v2378 = vor.u32 1.1754944e-38, %v2377
    %v2379 = vsel %vm2376, %v2378, %v2374
    %v2380 = vmul.f32 1.0, %v2379
    %v2381 = vtanh.pop %v2361
    %v2383 = vrot.slane %v2320, 6
    %v2385 = vmul.f32 %v2380, %v2383
    %2387 = vrot.lane.b32.xlu0 %v2381, 64
    %v2388 = vpop.permute.xlu0 %2387
    %v2390 = vmul.f32 %v2380, %v2388
    %2392 = vrot.lane.b32.xlu0 %v2390, 32
    %v2393 = vpop.permute.xlu0 %2392
    %v2395 = vadd.f32 %v2385, %v2393
    %v2396 = vtanh.pop %v2395
    %2398 = vrot.lane.b32.xlu0 %v2396, 64
    %v2399 = vpop.permute.xlu0 %2398
    %v2401 = vmul.f32 %v2380, %v2399
    %2402 = vset.pattern.permute.xlu0 5
    %2403 = vperm.xlu0 %2402, %v2010
    %v2404 = vpop.permute.xlu0 %2403
    %v2407 = vrot.slane %v2401, 2
    %2408 = vrot.lane.b32.xlu0 %v2407, 32
    %v2409 = vpop.permute.xlu0 %2408
    %v2411 = vmul.f32 %v2404, %v2409
    %2413 = vrot.lane.b32.xlu0 %v2411, 96
    %v2414 = vpop.permute.xlu0 %2413
    %v2416 = vadd.f32 %v2332, %v2414
    %v2417 = vsel %vm936, %v2409, 0
    %2419 = vmatpush.msra.mxu0 0.0
    %2420 = vmatpush.msra.mxu0 0.0
    %2421 = vmatpush.msra.mxu0 0.0
    %2422 = vmatpush.msra.mxu0 0.0
    %2423 = vmatpush.msra.mxu0 0.0
    %2424 = vmatpush.msra.mxu0 0.0
    %2425 = vmatpush.msra.mxu0 0.0
    %2426 = vmatpush.msra.mxu0 0.0
    %2427 = vmatpush.msra.mxu0 0.0
    %2428 = vmatpush.msra.mxu0 0.0
    %2429 = vmatpush.msra.mxu0 0.0
    %2430 = vmatpush.msra.mxu0 0.0
    %2431 = vmatpush.msra.mxu0 %v1948
    %2432 = vmatpush.msra.mxu0 %v1947
    %2433 = vmatpush.msra.mxu0 %v1946
    %2434 = vmatpush.msra.mxu0 %v1945
    %2435 = vmatmul.f32.gmra.mxu0 %v2417
    %v2436 = vpop.f32.mrf.mxu0
    %v2437 = vadd.f32 0.0, %v2436
    %2438 = vdwg.mxu0
    %v2440 = vrot.slane %v2437, 4
    %v2442 = vadd.f32 %v1943, %v2440
    %v2443 = vxor.u32 %v2442, 2147483648
    %v2444 = vmul.f32 %v2443, 1.442695
    %v2445 = vpow.pop %v2444
    %v2446 = vadd.f32 %v2445, 1.0
    %v2447 = vrcp.pop %v2446
    %v2448 = vmul.f32 %v2446, %v2447
    %v2449 = vsub.f32 1.0, %v2448
    %v2450 = vmul.f32 %v2447, %v2449
    %v2451 = vadd.f32 %v2447, %v2450
    %vm2452 = vweird.f32 %v2446
    %vm2453 = vweird.f32 %v2447
    %vm2454 = vmor %vm2452, %vm2453
    %v2455 = vsel %vm2454, %v2447, %v2451
    %v2456 = vand.u32 2147483647, %v2446
    %vm2457 = vcmp.eq.f32.partialorder %v2456, 8.507059e+37
    %v2458 = vand.u32 %v2446, 2147483648
    %v2459 = vor.u32 1.1754944e-38, %v2458
    %v2460 = vsel %vm2457, %v2459, %v2455
    %v2461 = vmul.f32 1.0, %v2460
    %v2462 = vtanh.pop %v2442
    %v2464 = vrot.slane %v2395, 6
    %v2466 = vmul.f32 %v2461, %v2464
    %2468 = vrot.lane.b32.xlu0 %v2462, 64
    %v2469 = vpop.permute.xlu0 %2468
    %v2471 = vmul.f32 %v2461, %v2469
    %2473 = vrot.lane.b32.xlu0 %v2471, 32
    %v2474 = vpop.permute.xlu0 %2473
    %v2476 = vadd.f32 %v2466, %v2474
    %v2477 = vtanh.pop %v2476
    %2479 = vrot.lane.b32.xlu0 %v2477, 64
    %v2480 = vpop.permute.xlu0 %2479
    %v2482 = vmul.f32 %v2461, %v2480
    %2483 = vset.pattern.permute.xlu0 6
    %2484 = vperm.xlu0 %2483, %v2010
    %v2485 = vpop.permute.xlu0 %2484
    %v2488 = vrot.slane %v2482, 4
    %2489 = vrot.lane.b32.xlu0 %v2488, 32
    %v2490 = vpop.permute.xlu0 %2489
    %v2492 = vmul.f32 %v2485, %v2490
    %2494 = vrot.lane.b32.xlu0 %v2492, 96
    %v2495 = vpop.permute.xlu0 %2494
    %v2497 = vadd.f32 %v2416, %v2495
    %v2498 = vsel %vm936, %v2490, 0
    %2500 = vmatpush.msra.mxu0 0.0
    %2501 = vmatpush.msra.mxu0 0.0
    %2502 = vmatpush.msra.mxu0 0.0
    %2503 = vmatpush.msra.mxu0 0.0
    %2504 = vmatpush.msra.mxu0 0.0
    %2505 = vmatpush.msra.mxu0 0.0
    %2506 = vmatpush.msra.mxu0 0.0
    %2507 = vmatpush.msra.mxu0 0.0
    %2508 = vmatpush.msra.mxu0 0.0
    %2509 = vmatpush.msra.mxu0 0.0
    %2510 = vmatpush.msra.mxu0 0.0
    %2511 = vmatpush.msra.mxu0 0.0
    %2512 = vmatpush.msra.mxu0 %v1948
    %2513 = vmatpush.msra.mxu0 %v1947
    %2514 = vmatpush.msra.mxu0 %v1946
    %2515 = vmatpush.msra.mxu0 %v1945
    %2516 = vmatmul.f32.gmra.mxu0 %v2498
    %v2517 = vpop.f32.mrf.mxu0
    %v2518 = vadd.f32 0.0, %v2517
    %2519 = vdwg.mxu0
    %v2521 = vrot.slane %v2518, 2
    %v2523 = vadd.f32 %v1943, %v2521
    %v2524 = vxor.u32 %v2523, 2147483648
    %v2525 = vmul.f32 %v2524, 1.442695
    %v2526 = vpow.pop %v2525
    %v2527 = vadd.f32 %v2526, 1.0
    %v2528 = vrcp.pop %v2527
    %v2529 = vmul.f32 %v2527, %v2528
    %v2530 = vsub.f32 1.0, %v2529
    %v2531 = vmul.f32 %v2528, %v2530
    %v2532 = vadd.f32 %v2528, %v2531
    %vm2533 = vweird.f32 %v2527
    %vm2534 = vweird.f32 %v2528
    %vm2535 = vmor %vm2533, %vm2534
    %v2536 = vsel %vm2535, %v2528, %v2532
    %v2537 = vand.u32 2147483647, %v2527
    %vm2538 = vcmp.eq.f32.partialorder %v2537, 8.507059e+37
    %v2539 = vand.u32 %v2527, 2147483648
    %v2540 = vor.u32 1.1754944e-38, %v2539
    %v2541 = vsel %vm2538, %v2540, %v2536
    %v2542 = vmul.f32 1.0, %v2541
    %v2543 = vtanh.pop %v2523
    %v2545 = vrot.slane %v2476, 6
    %v2547 = vmul.f32 %v2542, %v2545
    %2549 = vrot.lane.b32.xlu0 %v2543, 64
    %v2550 = vpop.permute.xlu0 %2549
    %v2552 = vmul.f32 %v2542, %v2550
    %2554 = vrot.lane.b32.xlu0 %v2552, 32
    %v2555 = vpop.permute.xlu0 %2554
    %v2557 = vadd.f32 %v2547, %v2555
    %v2558 = vtanh.pop %v2557
    %2560 = vrot.lane.b32.xlu0 %v2558, 64
    %v2561 = vpop.permute.xlu0 %2560
    %v2563 = vmul.f32 %v2542, %v2561
    %2564 = vset.pattern.permute.xlu0 7
    %2565 = vperm.xlu0 %2564, %v2010
    %v2566 = vpop.permute.xlu0 %2565
    %v2569 = vrot.slane %v2563, 6
    %2570 = vrot.lane.b32.xlu0 %v2569, 32
    %v2571 = vpop.permute.xlu0 %2570
    %v2573 = vmul.f32 %v2566, %v2571
    %2575 = vrot.lane.b32.xlu0 %v2573, 96
    %v2576 = vpop.permute.xlu0 %2575
    %v2578 = vadd.f32 %v2497, %v2576
    %v2579 = vpack.c.bf16 %v1891, %v1890
    %v2580 = vpack.c.bf16 %v1893, %v1892
    %v2581 = vpack.c.bf16 %v1895, %v1894
    %v2582 = vpack.c.bf16 %v1897, %v1896
    %v2583 = vpack.c.bf16 %v1899, %v1898
    %v2584 = vpack.c.bf16 %v1901, %v1900
    %v2585 = vpack.c.bf16 %v1903, %v1902
    %v2586 = vpack.c.bf16 %v1905, %v1904
    %v2587 = vld [vmem:[%s11] sm:$0xff]
    %v2588 = vld [vmem:[%s11 + $0x8] sm:$0xff]
    %v2589 = vld [vmem:[%s11 + $0x10] sm:$0xff]
    %v2590 = vld [vmem:[%s11 + $0x18] sm:$0xff]
    %v2591 = vld [vmem:[%s11 + $0x20] sm:$0xff]
    %v2592 = vld [vmem:[%s11 + $0x28] sm:$0xff]
    %v2593 = vld [vmem:[%s11 + $0x30] sm:$0xff]
    %v2594 = vld [vmem:[%s11 + $0x38] sm:$0xff]
    %v2595 = vld [vmem:[%s12] sm:$0xf]
    %v2597 = vperm.slane %v2595, 0
    %v2598 = vperm.slane %v2595, 1
    %v2599 = vperm.slane %v2595, 2
    %v2600 = vperm.slane %v2595, 3
    %v2613 = vunpack.c.l.b16 %v2587
    %v2614 = vunpack.c.h.b16 %v2587
    %v2615 = vunpack.c.l.b16 %v2588
    %v2616 = vunpack.c.h.b16 %v2588
    %v2617 = vunpack.c.l.b16 %v2589
    %v2618 = vunpack.c.h.b16 %v2589
    %v2619 = vunpack.c.l.b16 %v2590
    %v2620 = vunpack.c.h.b16 %v2590
    %v2621 = vunpack.c.l.b16 %v2591
    %v2622 = vunpack.c.h.b16 %v2591
    %v2623 = vunpack.c.l.b16 %v2592
    %v2624 = vunpack.c.h.b16 %v2592
    %v2625 = vunpack.c.l.b16 %v2593
    %v2626 = vunpack.c.h.b16 %v2593
    %v2627 = vunpack.c.l.b16 %v2594
    %v2628 = vunpack.c.h.b16 %v2594
    %v2629 = vpack.c.b16 %v2617, %v2613
    %v2630 = vpack.c.b16 %v2618, %v2614
    %v2631 = vpack.c.b16 %v2619, %v2615
    %v2632 = vpack.c.b16 %v2620, %v2616
    %v2633 = vpack.c.b16 %v2625, %v2621
    %v2634 = vpack.c.b16 %v2626, %v2622
    %v2635 = vpack.c.b16 %v2627, %v2623
    %v2636 = vpack.c.b16 %v2628, %v2624
    %v2646 = vsel %vm936, %v2579, 0
    %v2649 = vsel %vm936, %v2580, 0
    %v2652 = vsel %vm936, %v2581, 0
    %v2655 = vsel %vm936, %v2582, 0
    %v2658 = vsel %vm936, %v2583, 0
    %v2661 = vsel %vm936, %v2584, 0
    %v2664 = vsel %vm936, %v2585, 0
    %v2667 = vsel %vm936, %v2586, 0
    %2669 = vmatpush.bf16.msra.mxu0 0
    %2670 = vmatpush.bf16.msra.mxu0 0
    %2671 = vmatpush.bf16.msra.mxu0 0
    %2672 = vmatpush.bf16.msra.mxu0 0
    %2673 = vmatpush.bf16.msra.mxu0 0
    %2674 = vmatpush.bf16.msra.mxu0 0
    %2675 = vmatpush.bf16.msra.mxu0 %v2633
    %2676 = vmatpush.bf16.msra.mxu0 %v2629
    %2677 = vmatmul.bf16.gmra.mxu0 %v2646
    %v2678 = vpop.f32.mrf.mxu0
    %v2679 = vadd.f32 %v2597, %v2678
    %v2680 = vpop.f32.mrf.mxu0
    %v2681 = vadd.f32 %v2597, %v2680
    %2682 = vmatmul.bf16.gmra.mxu0 %v2649
    %v2683 = vpop.f32.mrf.mxu0
    %v2684 = vadd.f32 %v2597, %v2683
    %v2685 = vpop.f32.mrf.mxu0
    %v2686 = vadd.f32 %v2597, %v2685
    %2687 = vmatmul.bf16.gmra.mxu0 %v2652
    %v2688 = vpop.f32.mrf.mxu0
    %v2689 = vadd.f32 %v2597, %v2688
    %v2690 = vpop.f32.mrf.mxu0
    %v2691 = vadd.f32 %v2597, %v2690
    %2692 = vmatmul.bf16.gmra.mxu0 %v2655
    %v2693 = vpop.f32.mrf.mxu0
    %v2694 = vadd.f32 %v2597, %v2693
    %v2695 = vpop.f32.mrf.mxu0
    %v2696 = vadd.f32 %v2597, %v2695
    %2697 = vmatmul.bf16.gmra.mxu0 %v2658
    %v2698 = vpop.f32.mrf.mxu0
    %v2699 = vadd.f32 %v2597, %v2698
    %v2700 = vpop.f32.mrf.mxu0
    %v2701 = vadd.f32 %v2597, %v2700
    %2702 = vmatmul.bf16.gmra.mxu0 %v2661
    %v2703 = vpop.f32.mrf.mxu0
    %v2704 = vadd.f32 %v2597, %v2703
    %v2705 = vpop.f32.mrf.mxu0
    %v2706 = vadd.f32 %v2597, %v2705
    %2707 = vmatmul.bf16.gmra.mxu0 %v2664
    %v2708 = vpop.f32.mrf.mxu0
    %v2709 = vadd.f32 %v2597, %v2708
    %v2710 = vpop.f32.mrf.mxu0
    %v2711 = vadd.f32 %v2597, %v2710
    %2712 = vmatmul.bf16.gmra.mxu0 %v2667
    %v2713 = vpop.f32.mrf.mxu0
    %v2714 = vadd.f32 %v2597, %v2713
    %v2715 = vpop.f32.mrf.mxu0
    %v2716 = vadd.f32 %v2597, %v2715
    %2717 = vdwg.mxu0
    %2718 = vmatpush.bf16.msra.mxu0 0
    %2719 = vmatpush.bf16.msra.mxu0 0
    %2720 = vmatpush.bf16.msra.mxu0 0
    %2721 = vmatpush.bf16.msra.mxu0 0
    %2722 = vmatpush.bf16.msra.mxu0 0
    %2723 = vmatpush.bf16.msra.mxu0 0
    %2724 = vmatpush.bf16.msra.mxu0 %v2634
    %2725 = vmatpush.bf16.msra.mxu0 %v2630
    %2726 = vmatmul.bf16.gmra.mxu0 %v2646
    %v2727 = vpop.f32.mrf.mxu0
    %v2728 = vadd.f32 %v2598, %v2727
    %v2729 = vpop.f32.mrf.mxu0
    %v2730 = vadd.f32 %v2598, %v2729
    %2731 = vmatmul.bf16.gmra.mxu0 %v2649
    %v2732 = vpop.f32.mrf.mxu0
    %v2733 = vadd.f32 %v2598, %v2732
    %v2734 = vpop.f32.mrf.mxu0
    %v2735 = vadd.f32 %v2598, %v2734
    %2736 = vmatmul.bf16.gmra.mxu0 %v2652
    %v2737 = vpop.f32.mrf.mxu0
    %v2738 = vadd.f32 %v2598, %v2737
    %v2739 = vpop.f32.mrf.mxu0
    %v2740 = vadd.f32 %v2598, %v2739
    %2741 = vmatmul.bf16.gmra.mxu0 %v2655
    %v2742 = vpop.f32.mrf.mxu0
    %v2743 = vadd.f32 %v2598, %v2742
    %v2744 = vpop.f32.mrf.mxu0
    %v2745 = vadd.f32 %v2598, %v2744
    %2746 = vmatmul.bf16.gmra.mxu0 %v2658
    %v2747 = vpop.f32.mrf.mxu0
    %v2748 = vadd.f32 %v2598, %v2747
    %v2749 = vpop.f32.mrf.mxu0
    %v2750 = vadd.f32 %v2598, %v2749
    %2751 = vmatmul.bf16.gmra.mxu0 %v2661
    %v2752 = vpop.f32.mrf.mxu0
    %v2753 = vadd.f32 %v2598, %v2752
    %v2754 = vpop.f32.mrf.mxu0
    %v2755 = vadd.f32 %v2598, %v2754
    %2756 = vmatmul.bf16.gmra.mxu0 %v2664
    %v2757 = vpop.f32.mrf.mxu0
    %v2758 = vadd.f32 %v2598, %v2757
    %v2759 = vpop.f32.mrf.mxu0
    %v2760 = vadd.f32 %v2598, %v2759
    %2761 = vmatmul.bf16.gmra.mxu0 %v2667
    %v2762 = vpop.f32.mrf.mxu0
    %v2763 = vadd.f32 %v2598, %v2762
    %v2764 = vpop.f32.mrf.mxu0
    %v2765 = vadd.f32 %v2598, %v2764
    %2766 = vdwg.mxu0
    %2767 = vmatpush.bf16.msra.mxu0 0
    %2768 = vmatpush.bf16.msra.mxu0 0
    %2769 = vmatpush.bf16.msra.mxu0 0
    %2770 = vmatpush.bf16.msra.mxu0 0
    %2771 = vmatpush.bf16.msra.mxu0 0
    %2772 = vmatpush.bf16.msra.mxu0 0
    %2773 = vmatpush.bf16.msra.mxu0 %v2635
    %2774 = vmatpush.bf16.msra.mxu0 %v2631
    %2775 = vmatmul.bf16.gmra.mxu0 %v2646
    %v2776 = vpop.f32.mrf.mxu0
    %v2777 = vadd.f32 %v2599, %v2776
    %v2778 = vpop.f32.mrf.mxu0
    %v2779 = vadd.f32 %v2599, %v2778
    %2780 = vmatmul.bf16.gmra.mxu0 %v2649
    %v2781 = vpop.f32.mrf.mxu0
    %v2782 = vadd.f32 %v2599, %v2781
    %v2783 = vpop.f32.mrf.mxu0
    %v2784 = vadd.f32 %v2599, %v2783
    %2785 = vmatmul.bf16.gmra.mxu0 %v2652
    %v2786 = vpop.f32.mrf.mxu0
    %v2787 = vadd.f32 %v2599, %v2786
    %v2788 = vpop.f32.mrf.mxu0
    %v2789 = vadd.f32 %v2599, %v2788
    %2790 = vmatmul.bf16.gmra.mxu0 %v2655
    %v2791 = vpop.f32.mrf.mxu0
    %v2792 = vadd.f32 %v2599, %v2791
    %v2793 = vpop.f32.mrf.mxu0
    %v2794 = vadd.f32 %v2599, %v2793
    %2795 = vmatmul.bf16.gmra.mxu0 %v2658
    %v2796 = vpop.f32.mrf.mxu0
    %v2797 = vadd.f32 %v2599, %v2796
    %v2798 = vpop.f32.mrf.mxu0
    %v2799 = vadd.f32 %v2599, %v2798
    %2800 = vmatmul.bf16.gmra.mxu0 %v2661
    %v2801 = vpop.f32.mrf.mxu0
    %v2802 = vadd.f32 %v2599, %v2801
    %v2803 = vpop.f32.mrf.mxu0
    %v2804 = vadd.f32 %v2599, %v2803
    %2805 = vmatmul.bf16.gmra.mxu0 %v2664
    %v2806 = vpop.f32.mrf.mxu0
    %v2807 = vadd.f32 %v2599, %v2806
    %v2808 = vpop.f32.mrf.mxu0
    %v2809 = vadd.f32 %v2599, %v2808
    %2810 = vmatmul.bf16.gmra.mxu0 %v2667
    %v2811 = vpop.f32.mrf.mxu0
    %v2812 = vadd.f32 %v2599, %v2811
    %v2813 = vpop.f32.mrf.mxu0
    %v2814 = vadd.f32 %v2599, %v2813
    %2815 = vdwg.mxu0
    %2816 = vmatpush.bf16.msra.mxu0 0
    %2817 = vmatpush.bf16.msra.mxu0 0
    %2818 = vmatpush.bf16.msra.mxu0 0
    %2819 = vmatpush.bf16.msra.mxu0 0
    %2820 = vmatpush.bf16.msra.mxu0 0
    %2821 = vmatpush.bf16.msra.mxu0 0
    %2822 = vmatpush.bf16.msra.mxu0 %v2636
    %2823 = vmatpush.bf16.msra.mxu0 %v2632
    %2824 = vmatmul.bf16.gmra.mxu0 %v2646
    %v2825 = vpop.f32.mrf.mxu0
    %v2826 = vadd.f32 %v2600, %v2825
    %v2827 = vpop.f32.mrf.mxu0
    %v2828 = vadd.f32 %v2600, %v2827
    %2829 = vmatmul.bf16.gmra.mxu0 %v2649
    %v2830 = vpop.f32.mrf.mxu0
    %v2831 = vadd.f32 %v2600, %v2830
    %v2832 = vpop.f32.mrf.mxu0
    %v2833 = vadd.f32 %v2600, %v2832
    %2834 = vmatmul.bf16.gmra.mxu0 %v2652
    %v2835 = vpop.f32.mrf.mxu0
    %v2836 = vadd.f32 %v2600, %v2835
    %v2837 = vpop.f32.mrf.mxu0
    %v2838 = vadd.f32 %v2600, %v2837
    %2839 = vmatmul.bf16.gmra.mxu0 %v2655
    %v2840 = vpop.f32.mrf.mxu0
    %v2841 = vadd.f32 %v2600, %v2840
    %v2842 = vpop.f32.mrf.mxu0
    %v2843 = vadd.f32 %v2600, %v2842
    %2844 = vmatmul.bf16.gmra.mxu0 %v2658
    %v2845 = vpop.f32.mrf.mxu0
    %v2846 = vadd.f32 %v2600, %v2845
    %v2847 = vpop.f32.mrf.mxu0
    %v2848 = vadd.f32 %v2600, %v2847
    %2849 = vmatmul.bf16.gmra.mxu0 %v2661
    %v2850 = vpop.f32.mrf.mxu0
    %v2851 = vadd.f32 %v2600, %v2850
    %v2852 = vpop.f32.mrf.mxu0
    %v2853 = vadd.f32 %v2600, %v2852
    %2854 = vmatmul.bf16.gmra.mxu0 %v2664
    %v2855 = vpop.f32.mrf.mxu0
    %v2856 = vadd.f32 %v2600, %v2855
    %v2857 = vpop.f32.mrf.mxu0
    %v2858 = vadd.f32 %v2600, %v2857
    %2859 = vmatmul.bf16.gmra.mxu0 %v2667
    %v2860 = vpop.f32.mrf.mxu0
    %v2861 = vadd.f32 %v2600, %v2860
    %v2862 = vpop.f32.mrf.mxu0
    %v2863 = vadd.f32 %v2600, %v2862
    %2864 = vdwg.mxu0
    %v2865 = vld [vmem:[%s15] sm:$0xf]
    %s2866 = sld [smem:[#allocation2]]
    %v2867 = vpack.c.bf16 %v2578, %v2578
    %v2868 = vld [vmem:[%s13] sm:$0xff]
    %v2869 = vld [vmem:[%s13 + $0x8] sm:$0xff]
    %v2870 = vld [vmem:[%s13 + $0x10] sm:$0xff]
    %v2871 = vld [vmem:[%s13 + $0x18] sm:$0xff]
    %v2872 = vld [vmem:[%s13 + $0x20] sm:$0xff]
    %v2873 = vld [vmem:[%s13 + $0x28] sm:$0xff]
    %v2874 = vld [vmem:[%s13 + $0x30] sm:$0xff]
    %v2875 = vld [vmem:[%s13 + $0x38] sm:$0xff]
    %v2876 = vld [vmem:[%s14] sm:$0xf]
    %v2878 = vperm.slane %v2876, 0
    %v2879 = vperm.slane %v2876, 1
    %v2880 = vperm.slane %v2876, 2
    %v2881 = vperm.slane %v2876, 3
    %2887 = vrot.lane.b32.xlu0 %v2867, 32
    %v2888 = vpop.permute.xlu0 %2887
    %v2897 = vunpack.c.l.b16 %v2868
    %v2898 = vunpack.c.h.b16 %v2868
    %v2899 = vunpack.c.l.b16 %v2869
    %v2900 = vunpack.c.h.b16 %v2869
    %v2901 = vunpack.c.l.b16 %v2870
    %v2902 = vunpack.c.h.b16 %v2870
    %v2903 = vunpack.c.l.b16 %v2871
    %v2904 = vunpack.c.h.b16 %v2871
    %v2905 = vunpack.c.l.b16 %v2872
    %v2906 = vunpack.c.h.b16 %v2872
    %v2907 = vunpack.c.l.b16 %v2873
    %v2908 = vunpack.c.h.b16 %v2873
    %v2909 = vunpack.c.l.b16 %v2874
    %v2910 = vunpack.c.h.b16 %v2874
    %v2911 = vunpack.c.l.b16 %v2875
    %v2912 = vunpack.c.h.b16 %v2875
    %v2913 = vpack.c.b16 %v2901, %v2897
    %v2914 = vpack.c.b16 %v2902, %v2898
    %v2915 = vpack.c.b16 %v2903, %v2899
    %v2916 = vpack.c.b16 %v2904, %v2900
    %v2917 = vpack.c.b16 %v2909, %v2905
    %v2918 = vpack.c.b16 %v2910, %v2906
    %v2919 = vpack.c.b16 %v2911, %v2907
    %v2920 = vpack.c.b16 %v2912, %v2908
    %v2930 = vsel %vm936, %v2888, 0
    %2932 = vmatpush.bf16.msra.mxu0 0
    %2933 = vmatpush.bf16.msra.mxu0 0
    %2934 = vmatpush.bf16.msra.mxu0 0
    %2935 = vmatpush.bf16.msra.mxu0 0
    %2936 = vmatpush.bf16.msra.mxu0 0
    %2937 = vmatpush.bf16.msra.mxu0 0
    %2938 = vmatpush.bf16.msra.mxu0 %v2917
    %2939 = vmatpush.bf16.msra.mxu0 %v2913
    %2940 = vmatmul.bf16.gmra.mxu0 %v2930
    %v2941 = vpop.f32.mrf.mxu0
    %v2942 = vadd.f32 %v2878, %v2941
    %v2943 = vpop.f32.mrf.mxu0
    %2944 = vdwg.mxu0
    %2945 = vmatpush.bf16.msra.mxu0 0
    %2946 = vmatpush.bf16.msra.mxu0 0
    %2947 = vmatpush.bf16.msra.mxu0 0
    %2948 = vmatpush.bf16.msra.mxu0 0
    %2949 = vmatpush.bf16.msra.mxu0 0
    %2950 = vmatpush.bf16.msra.mxu0 0
    %2951 = vmatpush.bf16.msra.mxu0 %v2918
    %2952 = vmatpush.bf16.msra.mxu0 %v2914
    %2953 = vmatmul.bf16.gmra.mxu0 %v2930
    %v2954 = vpop.f32.mrf.mxu0
    %v2955 = vadd.f32 %v2879, %v2954
    %v2956 = vpop.f32.mrf.mxu0
    %2957 = vdwg.mxu0
    %2958 = vmatpush.bf16.msra.mxu0 0
    %2959 = vmatpush.bf16.msra.mxu0 0
    %2960 = vmatpush.bf16.msra.mxu0 0
    %2961 = vmatpush.bf16.msra.mxu0 0
    %2962 = vmatpush.bf16.msra.mxu0 0
    %2963 = vmatpush.bf16.msra.mxu0 0
    %2964 = vmatpush.bf16.msra.mxu0 %v2919
    %2965 = vmatpush.bf16.msra.mxu0 %v2915
    %2966 = vmatmul.bf16.gmra.mxu0 %v2930
    %v2967 = vpop.f32.mrf.mxu0
    %v2968 = vadd.f32 %v2880, %v2967
    %v2969 = vpop.f32.mrf.mxu0
    %2970 = vdwg.mxu0
    %2971 = vmatpush.bf16.msra.mxu0 0
    %2972 = vmatpush.bf16.msra.mxu0 0
    %2973 = vmatpush.bf16.msra.mxu0 0
    %2974 = vmatpush.bf16.msra.mxu0 0
    %2975 = vmatpush.bf16.msra.mxu0 0
    %2976 = vmatpush.bf16.msra.mxu0 0
    %2977 = vmatpush.bf16.msra.mxu0 %v2920
    %2978 = vmatpush.bf16.msra.mxu0 %v2916
    %2979 = vmatmul.bf16.gmra.mxu0 %v2930
    %v2980 = vpop.f32.mrf.mxu0
    %v2981 = vadd.f32 %v2881, %v2980
    %v2982 = vpop.f32.mrf.mxu0
    %2983 = vdwg.mxu0
    %v2988 = vrot.slane %v2955, 7
    %v2989 = vrot.slane %v2968, 6
    %v2990 = vrot.slane %v2981, 5
    %vm2991 = vcmask 1040384
    %v2992 = vsel %vm2991, %v2942, %v2988
    %vm2993 = vcmask 1042434
    %v2994 = vsel %vm2993, %v2989, %v2990
    %vm2995 = vcmask 1041408
    %v2996 = vsel %vm2995, %v2992, %v2994
    %vm2997 = vcmask 1041409
    %v2998 = vsel %vm2997, %v2942, %v2988
    %vm2999 = vcmask 1043459
    %v3000 = vsel %vm2999, %v2989, %v2990
    %vm3001 = vcmask 1042433
    %v3002 = vsel %vm3001, %v2998, %v3000
    %v3003 = vrot.slane %v3002, 1
    %v3004 = vperm.slane %v2996, 0
    %v3005 = vperm.slane %v2996, 1
    %v3006 = vperm.slane %v2996, 2
    %v3007 = vperm.slane %v2996, 3
    %v3008 = vperm.slane %v3003, 0
    %v3009 = vperm.slane %v3003, 1
    %v3010 = vperm.slane %v3003, 2
    %v3011 = vperm.slane %v3003, 3
    %v3020 = vadd.f32 %v2679, %v3004
    %v3021 = vadd.f32 %v2728, %v3005
    %v3022 = vadd.f32 %v2777, %v3006
    %v3023 = vadd.f32 %v2826, %v3007
    %v3024 = vadd.f32 %v2681, %v3004
    %v3025 = vadd.f32 %v2730, %v3005
    %v3026 = vadd.f32 %v2779, %v3006
    %v3027 = vadd.f32 %v2828, %v3007
    %v3028 = vadd.f32 %v2684, %v3004
    %v3029 = vadd.f32 %v2733, %v3005
    %v3030 = vadd.f32 %v2782, %v3006
    %v3031 = vadd.f32 %v2831, %v3007
    %v3032 = vadd.f32 %v2686, %v3004
    %v3033 = vadd.f32 %v2735, %v3005
    %v3034 = vadd.f32 %v2784, %v3006
    %v3035 = vadd.f32 %v2833, %v3007
    %v3036 = vadd.f32 %v2689, %v3004
    %v3037 = vadd.f32 %v2738, %v3005
    %v3038 = vadd.f32 %v2787, %v3006
    %v3039 = vadd.f32 %v2836, %v3007
    %v3040 = vadd.f32 %v2691, %v3004
    %v3041 = vadd.f32 %v2740, %v3005
    %v3042 = vadd.f32 %v2789, %v3006
    %v3043 = vadd.f32 %v2838, %v3007
    %v3044 = vadd.f32 %v2694, %v3004
    %v3045 = vadd.f32 %v2743, %v3005
    %v3046 = vadd.f32 %v2792, %v3006
    %v3047 = vadd.f32 %v2841, %v3007
    %v3048 = vadd.f32 %v2696, %v3004
    %v3049 = vadd.f32 %v2745, %v3005
    %v3050 = vadd.f32 %v2794, %v3006
    %v3051 = vadd.f32 %v2843, %v3007
    %v3052 = vadd.f32 %v2699, %v3008
    %v3053 = vadd.f32 %v2748, %v3009
    %v3054 = vadd.f32 %v2797, %v3010
    %v3055 = vadd.f32 %v2846, %v3011
    %v3056 = vadd.f32 %v2701, %v3008
    %v3057 = vadd.f32 %v2750, %v3009
    %v3058 = vadd.f32 %v2799, %v3010
    %v3059 = vadd.f32 %v2848, %v3011
    %v3060 = vadd.f32 %v2704, %v3008
    %v3061 = vadd.f32 %v2753, %v3009
    %v3062 = vadd.f32 %v2802, %v3010
    %v3063 = vadd.f32 %v2851, %v3011
    %v3064 = vadd.f32 %v2706, %v3008
    %v3065 = vadd.f32 %v2755, %v3009
    %v3066 = vadd.f32 %v2804, %v3010
    %v3067 = vadd.f32 %v2853, %v3011
    %v3068 = vadd.f32 %v2709, %v3008
    %v3069 = vadd.f32 %v2758, %v3009
    %v3070 = vadd.f32 %v2807, %v3010
    %v3071 = vadd.f32 %v2856, %v3011
    %v3072 = vadd.f32 %v2711, %v3008
    %v3073 = vadd.f32 %v2760, %v3009
    %v3074 = vadd.f32 %v2809, %v3010
    %v3075 = vadd.f32 %v2858, %v3011
    %v3076 = vadd.f32 %v2714, %v3008
    %v3077 = vadd.f32 %v2763, %v3009
    %v3078 = vadd.f32 %v2812, %v3010
    %v3079 = vadd.f32 %v2861, %v3011
    %v3080 = vadd.f32 %v2716, %v3008
    %v3081 = vadd.f32 %v2765, %v3009
    %v3082 = vadd.f32 %v2814, %v3010
    %v3083 = vadd.f32 %v2863, %v3011
    %v3084 = vtanh.pop %v3020
    %v3085 = vtanh.pop %v3021
    %v3086 = vtanh.pop %v3022
    %v3087 = vtanh.pop %v3023
    %v3088 = vtanh.pop %v3024
    %v3089 = vtanh.pop %v3025
    %v3090 = vtanh.pop %v3026
    %v3091 = vtanh.pop %v3027
    %v3092 = vtanh.pop %v3028
    %v3093 = vtanh.pop %v3029
    %v3094 = vtanh.pop %v3030
    %v3095 = vtanh.pop %v3031
    %v3096 = vtanh.pop %v3032
    %v3097 = vtanh.pop %v3033
    %v3098 = vtanh.pop %v3034
    %v3099 = vtanh.pop %v3035
    %v3100 = vtanh.pop %v3036
    %v3101 = vtanh.pop %v3037
    %v3102 = vtanh.pop %v3038
    %v3103 = vtanh.pop %v3039
    %v3104 = vtanh.pop %v3040
    %v3105 = vtanh.pop %v3041
    %v3106 = vtanh.pop %v3042
    %v3107 = vtanh.pop %v3043
    %v3108 = vtanh.pop %v3044
    %v3109 = vtanh.pop %v3045
    %v3110 = vtanh.pop %v3046
    %v3111 = vtanh.pop %v3047
    %v3112 = vtanh.pop %v3048
    %v3113 = vtanh.pop %v3049
    %v3114 = vtanh.pop %v3050
    %v3115 = vtanh.pop %v3051
    %v3116 = vtanh.pop %v3052
    %v3117 = vtanh.pop %v3053
    %v3118 = vtanh.pop %v3054
    %v3119 = vtanh.pop %v3055
    %v3120 = vtanh.pop %v3056
    %v3121 = vtanh.pop %v3057
    %v3122 = vtanh.pop %v3058
    %v3123 = vtanh.pop %v3059
    %v3124 = vtanh.pop %v3060
    %v3125 = vtanh.pop %v3061
    %v3126 = vtanh.pop %v3062
    %v3127 = vtanh.pop %v3063
    %v3128 = vtanh.pop %v3064
    %v3129 = vtanh.pop %v3065
    %v3130 = vtanh.pop %v3066
    %v3131 = vtanh.pop %v3067
    %v3132 = vtanh.pop %v3068
    %v3133 = vtanh.pop %v3069
    %v3134 = vtanh.pop %v3070
    %v3135 = vtanh.pop %v3071
    %v3136 = vtanh.pop %v3072
    %v3137 = vtanh.pop %v3073
    %v3138 = vtanh.pop %v3074
    %v3139 = vtanh.pop %v3075
    %v3140 = vtanh.pop %v3076
    %v3141 = vtanh.pop %v3077
    %v3142 = vtanh.pop %v3078
    %v3143 = vtanh.pop %v3079
    %v3144 = vtanh.pop %v3080
    %v3145 = vtanh.pop %v3081
    %v3146 = vtanh.pop %v3082
    %v3147 = vtanh.pop %v3083
    %v3149 = vperm.slane %v2865, 0
    %v3150 = vperm.slane %v2865, 1
    %v3151 = vperm.slane %v2865, 2
    %v3152 = vperm.slane %v2865, 3
    %v3157 = vmul.f32 %v3084, %v3149
    %v3158 = vmul.f32 %v3085, %v3150
    %v3159 = vmul.f32 %v3086, %v3151
    %v3160 = vmul.f32 %v3087, %v3152
    %v3161 = vmul.f32 %v3088, %v3149
    %v3162 = vmul.f32 %v3089, %v3150
    %v3163 = vmul.f32 %v3090, %v3151
    %v3164 = vmul.f32 %v3091, %v3152
    %v3165 = vmul.f32 %v3092, %v3149
    %v3166 = vmul.f32 %v3093, %v3150
    %v3167 = vmul.f32 %v3094, %v3151
    %v3168 = vmul.f32 %v3095, %v3152
    %v3169 = vmul.f32 %v3096, %v3149
    %v3170 = vmul.f32 %v3097, %v3150
    %v3171 = vmul.f32 %v3098, %v3151
    %v3172 = vmul.f32 %v3099, %v3152
    %v3173 = vmul.f32 %v3100, %v3149
    %v3174 = vmul.f32 %v3101, %v3150
    %v3175 = vmul.f32 %v3102, %v3151
    %v3176 = vmul.f32 %v3103, %v3152
    %v3177 = vmul.f32 %v3104, %v3149
    %v3178 = vmul.f32 %v3105, %v3150
    %v3179 = vmul.f32 %v3106, %v3151
    %v3180 = vmul.f32 %v3107, %v3152
    %v3181 = vmul.f32 %v3108, %v3149
    %v3182 = vmul.f32 %v3109, %v3150
    %v3183 = vmul.f32 %v3110, %v3151
    %v3184 = vmul.f32 %v3111, %v3152
    %v3185 = vmul.f32 %v3112, %v3149
    %v3186 = vmul.f32 %v3113, %v3150
    %v3187 = vmul.f32 %v3114, %v3151
    %v3188 = vmul.f32 %v3115, %v3152
    %v3189 = vmul.f32 %v3116, %v3149
    %v3190 = vmul.f32 %v3117, %v3150
    %v3191 = vmul.f32 %v3118, %v3151
    %v3192 = vmul.f32 %v3119, %v3152
    %v3193 = vmul.f32 %v3120, %v3149
    %v3194 = vmul.f32 %v3121, %v3150
    %v3195 = vmul.f32 %v3122, %v3151
    %v3196 = vmul.f32 %v3123, %v3152
    %v3197 = vmul.f32 %v3124, %v3149
    %v3198 = vmul.f32 %v3125, %v3150
    %v3199 = vmul.f32 %v3126, %v3151
    %v3200 = vmul.f32 %v3127, %v3152
    %v3201 = vmul.f32 %v3128, %v3149
    %v3202 = vmul.f32 %v3129, %v3150
    %v3203 = vmul.f32 %v3130, %v3151
    %v3204 = vmul.f32 %v3131, %v3152
    %v3205 = vmul.f32 %v3132, %v3149
    %v3206 = vmul.f32 %v3133, %v3150
    %v3207 = vmul.f32 %v3134, %v3151
    %v3208 = vmul.f32 %v3135, %v3152
    %v3209 = vmul.f32 %v3136, %v3149
    %v3210 = vmul.f32 %v3137, %v3150
    %v3211 = vmul.f32 %v3138, %v3151
    %v3212 = vmul.f32 %v3139, %v3152
    %v3213 = vmul.f32 %v3140, %v3149
    %v3214 = vmul.f32 %v3141, %v3150
    %v3215 = vmul.f32 %v3142, %v3151
    %v3216 = vmul.f32 %v3143, %v3152
    %v3217 = vmul.f32 %v3144, %v3149
    %v3218 = vmul.f32 %v3145, %v3150
    %v3219 = vmul.f32 %v3146, %v3151
    %v3220 = vmul.f32 %v3147, %v3152
    %v3221 = vadd.f32 %v3157, %v3158
    %v3222 = vadd.f32 %v3221, %v3159
    %v3223 = vadd.f32 %v3222, %v3160
    %3224 = vadd.xlane.f32.xlu0 %v3223
    %v3225 = vpop.xlane.xlu0 %3224
    %v3226 = vadd.f32 %v3161, %v3162
    %v3227 = vadd.f32 %v3226, %v3163
    %v3228 = vadd.f32 %v3227, %v3164
    %3229 = vadd.xlane.f32.xlu0 %v3228
    %v3230 = vpop.xlane.xlu0 %3229
    %v3231 = vadd.f32 %v3165, %v3166
    %v3232 = vadd.f32 %v3231, %v3167
    %v3233 = vadd.f32 %v3232, %v3168
    %3234 = vadd.xlane.f32.xlu0 %v3233
    %v3235 = vpop.xlane.xlu0 %3234
    %v3236 = vadd.f32 %v3169, %v3170
    %v3237 = vadd.f32 %v3236, %v3171
    %v3238 = vadd.f32 %v3237, %v3172
    %3239 = vadd.xlane.f32.xlu0 %v3238
    %v3240 = vpop.xlane.xlu0 %3239
    %v3241 = vadd.f32 %v3173, %v3174
    %v3242 = vadd.f32 %v3241, %v3175
    %v3243 = vadd.f32 %v3242, %v3176
    %3244 = vadd.xlane.f32.xlu0 %v3243
    %v3245 = vpop.xlane.xlu0 %3244
    %v3246 = vadd.f32 %v3177, %v3178
    %v3247 = vadd.f32 %v3246, %v3179
    %v3248 = vadd.f32 %v3247, %v3180
    %3249 = vadd.xlane.f32.xlu0 %v3248
    %v3250 = vpop.xlane.xlu0 %3249
    %v3251 = vadd.f32 %v3181, %v3182
    %v3252 = vadd.f32 %v3251, %v3183
    %v3253 = vadd.f32 %v3252, %v3184
    %3254 = vadd.xlane.f32.xlu0 %v3253
    %v3255 = vpop.xlane.xlu0 %3254
    %v3256 = vadd.f32 %v3185, %v3186
    %v3257 = vadd.f32 %v3256, %v3187
    %v3258 = vadd.f32 %v3257, %v3188
    %3259 = vadd.xlane.f32.xlu0 %v3258
    %v3260 = vpop.xlane.xlu0 %3259
    %v3261 = vadd.f32 %v3189, %v3190
    %v3262 = vadd.f32 %v3261, %v3191
    %v3263 = vadd.f32 %v3262, %v3192
    %3264 = vadd.xlane.f32.xlu0 %v3263
    %v3265 = vpop.xlane.xlu0 %3264
    %v3266 = vadd.f32 %v3193, %v3194
    %v3267 = vadd.f32 %v3266, %v3195
    %v3268 = vadd.f32 %v3267, %v3196
    %3269 = vadd.xlane.f32.xlu0 %v3268
    %v3270 = vpop.xlane.xlu0 %3269
    %v3271 = vadd.f32 %v3197, %v3198
    %v3272 = vadd.f32 %v3271, %v3199
    %v3273 = vadd.f32 %v3272, %v3200
    %3274 = vadd.xlane.f32.xlu0 %v3273
    %v3275 = vpop.xlane.xlu0 %3274
    %v3276 = vadd.f32 %v3201, %v3202
    %v3277 = vadd.f32 %v3276, %v3203
    %v3278 = vadd.f32 %v3277, %v3204
    %3279 = vadd.xlane.f32.xlu0 %v3278
    %v3280 = vpop.xlane.xlu0 %3279
    %v3281 = vadd.f32 %v3205, %v3206
    %v3282 = vadd.f32 %v3281, %v3207
    %v3283 = vadd.f32 %v3282, %v3208
    %3284 = vadd.xlane.f32.xlu0 %v3283
    %v3285 = vpop.xlane.xlu0 %3284
    %v3286 = vadd.f32 %v3209, %v3210
    %v3287 = vadd.f32 %v3286, %v3211
    %v3288 = vadd.f32 %v3287, %v3212
    %3289 = vadd.xlane.f32.xlu0 %v3288
    %v3290 = vpop.xlane.xlu0 %3289
    %v3291 = vadd.f32 %v3213, %v3214
    %v3292 = vadd.f32 %v3291, %v3215
    %v3293 = vadd.f32 %v3292, %v3216
    %3294 = vadd.xlane.f32.xlu0 %v3293
    %v3295 = vpop.xlane.xlu0 %3294
    %v3296 = vadd.f32 %v3217, %v3218
    %v3297 = vadd.f32 %v3296, %v3219
    %v3298 = vadd.f32 %v3297, %v3220
    %3299 = vadd.xlane.f32.xlu0 %v3298
    %v3300 = vpop.xlane.xlu0 %3299
    %v3301 = vstv %s2866
    %v3302 = vadd.f32 %v3225, %v3301
    %v3303 = vadd.f32 %v3230, %v3301
    %v3304 = vadd.f32 %v3235, %v3301
    %v3305 = vadd.f32 %v3240, %v3301
    %v3306 = vadd.f32 %v3245, %v3301
    %v3307 = vadd.f32 %v3250, %v3301
    %v3308 = vadd.f32 %v3255, %v3301
    %v3309 = vadd.f32 %v3260, %v3301
    %v3310 = vadd.f32 %v3265, %v3301
    %v3311 = vadd.f32 %v3270, %v3301
    %v3312 = vadd.f32 %v3275, %v3301
    %v3313 = vadd.f32 %v3280, %v3301
    %v3314 = vadd.f32 %v3285, %v3301
    %v3315 = vadd.f32 %v3290, %v3301
    %v3316 = vadd.f32 %v3295, %v3301
    %v3317 = vadd.f32 %v3300, %v3301
    %v3334 = vlaneseq
    %v3335 = vand.u32 %v3334, 127
    %v3336 = vperm.slane %v3302, %v3335
    %v3337 = vadd.s32 %v3335, 4294967288
    %v3338 = vperm.slane %v3303, %v3337
    %vm3339 = vcmask 130112
    %v3340 = vsel %vm3339, %v3338, %v3336
    %v3341 = vadd.s32 %v3335, 4294967280
    %v3342 = vperm.slane %v3304, %v3341
    %vm3343 = vcmask 195712
    %v3344 = vsel %vm3343, %v3342, %v3340
    %v3345 = vadd.s32 %v3335, 4294967272
    %v3346 = vperm.slane %v3305, %v3345
    %vm3347 = vcmask 261312
    %v3348 = vsel %vm3347, %v3346, %v3344
    %v3349 = vadd.s32 %v3335, 4294967264
    %v3350 = vperm.slane %v3306, %v3349
    %vm3351 = vcmask 326912
    %v3352 = vsel %vm3351, %v3350, %v3348
    %v3353 = vadd.s32 %v3335, 4294967256
    %v3354 = vperm.slane %v3307, %v3353
    %vm3355 = vcmask 392512
    %v3356 = vsel %vm3355, %v3354, %v3352
    %v3357 = vadd.s32 %v3335, 4294967248
    %v3358 = vperm.slane %v3308, %v3357
    %vm3359 = vcmask 458112
    %v3360 = vsel %vm3359, %v3358, %v3356
    %v3361 = vadd.s32 %v3335, 4294967240
    %v3362 = vperm.slane %v3309, %v3361
    %vm3363 = vcmask 523712
    %v3364 = vsel %vm3363, %v3362, %v3360
    %v3365 = vperm.slane %v3310, %v3335
    %v3366 = vperm.slane %v3311, %v3337
    %v3367 = vsel %vm3339, %v3366, %v3365
    %v3368 = vperm.slane %v3312, %v3341
    %v3369 = vsel %vm3343, %v3368, %v3367
    %v3370 = vperm.slane %v3313, %v3345
    %v3371 = vsel %vm3347, %v3370, %v3369
    %v3372 = vperm.slane %v3314, %v3349
    %v3373 = vsel %vm3351, %v3372, %v3371
    %v3374 = vperm.slane %v3315, %v3353
    %v3375 = vsel %vm3355, %v3374, %v3373
    %v3376 = vperm.slane %v3316, %v3357
    %v3377 = vsel %vm3359, %v3376, %v3375
    %v3378 = vperm.slane %v3317, %v3361
    %v3379 = vsel %vm3363, %v3378, %v3377
    %v3380 = vsel %vm2997, %v3379, %v3364
    %vm3382 = vcmask 517120
    %v3383 = vsel %vm3382, %v3380, -inf
    %3384 = vmax.xlane.f32.xlu0 %v3383
    %v3385 = vpop.xlane.xlu0 %3384
    %v3387 = vperm.slane %v3385, 0
    %v3388 = vperm.slane %v3385, 1
    %v3391 = vsub.f32 %v3302, %v3387
    %v3392 = vsub.f32 %v3303, %v3387
    %v3393 = vsub.f32 %v3304, %v3387
    %v3394 = vsub.f32 %v3305, %v3387
    %v3395 = vsub.f32 %v3306, %v3387
    %v3396 = vsub.f32 %v3307, %v3387
    %v3397 = vsub.f32 %v3308, %v3387
    %v3398 = vsub.f32 %v3309, %v3387
    %v3399 = vsub.f32 %v3310, %v3388
    %v3400 = vsub.f32 %v3311, %v3388
    %v3401 = vsub.f32 %v3312, %v3388
    %v3402 = vsub.f32 %v3313, %v3388
    %v3403 = vsub.f32 %v3314, %v3388
    %v3404 = vsub.f32 %v3315, %v3388
    %v3405 = vsub.f32 %v3316, %v3388
    %v3406 = vsub.f32 %v3317, %v3388
    %v3407 = vmul.f32 %v3391, 1.442695
    %v3408 = vpow.pop %v3407
    %v3409 = vmul.f32 %v3392, 1.442695
    %v3410 = vpow.pop %v3409
    %v3411 = vmul.f32 %v3393, 1.442695
    %v3412 = vpow.pop %v3411
    %v3413 = vmul.f32 %v3394, 1.442695
    %v3414 = vpow.pop %v3413
    %v3415 = vmul.f32 %v3395, 1.442695
    %v3416 = vpow.pop %v3415
    %v3417 = vmul.f32 %v3396, 1.442695
    %v3418 = vpow.pop %v3417
    %v3419 = vmul.f32 %v3397, 1.442695
    %v3420 = vpow.pop %v3419
    %v3421 = vmul.f32 %v3398, 1.442695
    %v3422 = vpow.pop %v3421
    %v3423 = vmul.f32 %v3399, 1.442695
    %v3424 = vpow.pop %v3423
    %v3425 = vmul.f32 %v3400, 1.442695
    %v3426 = vpow.pop %v3425
    %v3427 = vmul.f32 %v3401, 1.442695
    %v3428 = vpow.pop %v3427
    %v3429 = vmul.f32 %v3402, 1.442695
    %v3430 = vpow.pop %v3429
    %v3431 = vmul.f32 %v3403, 1.442695
    %v3432 = vpow.pop %v3431
    %v3433 = vmul.f32 %v3404, 1.442695
    %v3434 = vpow.pop %v3433
    %v3435 = vmul.f32 %v3405, 1.442695
    %v3436 = vpow.pop %v3435
    %v3437 = vmul.f32 %v3406, 1.442695
    %v3438 = vpow.pop %v3437
    %3455 = vset.pattern.permute.xlu0 0
    %3456 = vperm.xlu0 %3455, %v3408
    %v3457 = vpop.permute.xlu0 %3456
    %3458 = vset.pattern.permute.xlu0 0
    %3459 = vperm.xlu0 %3458, %v3410
    %v3460 = vpop.permute.xlu0 %3459
    %3461 = vset.pattern.permute.xlu0 0
    %3462 = vperm.xlu0 %3461, %v3412
    %v3463 = vpop.permute.xlu0 %3462
    %3464 = vset.pattern.permute.xlu0 0
    %3465 = vperm.xlu0 %3464, %v3414
    %v3466 = vpop.permute.xlu0 %3465
    %3467 = vset.pattern.permute.xlu0 0
    %3468 = vperm.xlu0 %3467, %v3416
    %v3469 = vpop.permute.xlu0 %3468
    %3470 = vset.pattern.permute.xlu0 0
    %3471 = vperm.xlu0 %3470, %v3418
    %v3472 = vpop.permute.xlu0 %3471
    %3473 = vset.pattern.permute.xlu0 0
    %3474 = vperm.xlu0 %3473, %v3420
    %v3475 = vpop.permute.xlu0 %3474
    %3476 = vset.pattern.permute.xlu0 0
    %3477 = vperm.xlu0 %3476, %v3422
    %v3478 = vpop.permute.xlu0 %3477
    %3479 = vset.pattern.permute.xlu0 0
    %3480 = vperm.xlu0 %3479, %v3424
    %v3481 = vpop.permute.xlu0 %3480
    %3482 = vset.pattern.permute.xlu0 0
    %3483 = vperm.xlu0 %3482, %v3426
    %v3484 = vpop.permute.xlu0 %3483
    %3485 = vset.pattern.permute.xlu0 0
    %3486 = vperm.xlu0 %3485, %v3428
    %v3487 = vpop.permute.xlu0 %3486
    %3488 = vset.pattern.permute.xlu0 0
    %3489 = vperm.xlu0 %3488, %v3430
    %v3490 = vpop.permute.xlu0 %3489
    %3491 = vset.pattern.permute.xlu0 0
    %3492 = vperm.xlu0 %3491, %v3432
    %v3493 = vpop.permute.xlu0 %3492
    %3494 = vset.pattern.permute.xlu0 0
    %3495 = vperm.xlu0 %3494, %v3434
    %v3496 = vpop.permute.xlu0 %3495
    %3497 = vset.pattern.permute.xlu0 0
    %3498 = vperm.xlu0 %3497, %v3436
    %v3499 = vpop.permute.xlu0 %3498
    %3500 = vset.pattern.permute.xlu0 0
    %3501 = vperm.xlu0 %3500, %v3438
    %v3502 = vpop.permute.xlu0 %3501
    %v3503 = vperm.slane %v3457, %v3335
    %v3504 = vperm.slane %v3460, %v3337
    %v3505 = vsel %vm3339, %v3504, %v3503
    %v3506 = vperm.slane %v3463, %v3341
    %v3507 = vsel %vm3343, %v3506, %v3505
    %v3508 = vperm.slane %v3466, %v3345
    %v3509 = vsel %vm3347, %v3508, %v3507
    %v3510 = vperm.slane %v3469, %v3349
    %v3511 = vsel %vm3351, %v3510, %v3509
    %v3512 = vperm.slane %v3472, %v3353
    %v3513 = vsel %vm3355, %v3512, %v3511
    %v3514 = vperm.slane %v3475, %v3357
    %v3515 = vsel %vm3359, %v3514, %v3513
    %v3516 = vperm.slane %v3478, %v3361
    %v3517 = vsel %vm3363, %v3516, %v3515
    %v3518 = vperm.slane %v3481, %v3335
    %v3519 = vperm.slane %v3484, %v3337
    %v3520 = vsel %vm3339, %v3519, %v3518
    %v3521 = vperm.slane %v3487, %v3341
    %v3522 = vsel %vm3343, %v3521, %v3520
    %v3523 = vperm.slane %v3490, %v3345
    %v3524 = vsel %vm3347, %v3523, %v3522
    %v3525 = vperm.slane %v3493, %v3349
    %v3526 = vsel %vm3351, %v3525, %v3524
    %v3527 = vperm.slane %v3496, %v3353
    %v3528 = vsel %vm3355, %v3527, %v3526
    %v3529 = vperm.slane %v3499, %v3357
    %v3530 = vsel %vm3359, %v3529, %v3528
    %v3531 = vperm.slane %v3502, %v3361
    %v3532 = vsel %vm3363, %v3531, %v3530
    %v3533 = vsel %vm2997, %v3532, %v3517
    %v3535 = vsel %vm3382, %v3533, 0.0
    %3536 = vadd.xlane.f32.xlu0 %v3535
    %v3537 = vpop.xlane.xlu0 %3536
    %v3538 = vrcp.pop %v3537
    %v3540 = vperm.slane %v3538, 0
    %v3541 = vperm.slane %v3538, 1
    %v3544 = vmul.f32 %v3408, %v3540
    %v3545 = vmul.f32 %v3410, %v3540
    %v3546 = vmul.f32 %v3412, %v3540
    %v3547 = vmul.f32 %v3414, %v3540
    %v3548 = vmul.f32 %v3416, %v3540
    %v3549 = vmul.f32 %v3418, %v3540
    %v3550 = vmul.f32 %v3420, %v3540
    %v3551 = vmul.f32 %v3422, %v3540
    %v3552 = vmul.f32 %v3424, %v3541
    %v3553 = vmul.f32 %v3426, %v3541
    %v3554 = vmul.f32 %v3428, %v3541
    %v3555 = vmul.f32 %v3430, %v3541
    %v3556 = vmul.f32 %v3432, %v3541
    %v3557 = vmul.f32 %v3434, %v3541
    %v3558 = vmul.f32 %v3436, %v3541
    %v3559 = vmul.f32 %v3438, %v3541
    %3568 = vset.pattern.permute.xlu0 0
    %3569 = vperm.xlu0 %3568, %v3544
    %v3570 = vpop.permute.xlu0 %3569
    %3571 = vset.pattern.permute.xlu0 0
    %3572 = vperm.xlu0 %3571, %v3545
    %v3573 = vpop.permute.xlu0 %3572
    %3574 = vset.pattern.permute.xlu0 0
    %3575 = vperm.xlu0 %3574, %v3546
    %v3576 = vpop.permute.xlu0 %3575
    %3577 = vset.pattern.permute.xlu0 0
    %3578 = vperm.xlu0 %3577, %v3547
    %v3579 = vpop.permute.xlu0 %3578
    %3580 = vset.pattern.permute.xlu0 0
    %3581 = vperm.xlu0 %3580, %v3548
    %v3582 = vpop.permute.xlu0 %3581
    %3583 = vset.pattern.permute.xlu0 0
    %3584 = vperm.xlu0 %3583, %v3549
    %v3585 = vpop.permute.xlu0 %3584
    %3586 = vset.pattern.permute.xlu0 0
    %3587 = vperm.xlu0 %3586, %v3550
    %v3588 = vpop.permute.xlu0 %3587
    %3589 = vset.pattern.permute.xlu0 0
    %3590 = vperm.xlu0 %3589, %v3551
    %v3591 = vpop.permute.xlu0 %3590
    %v3592 = vperm.slane %v3570, %v3335
    %v3593 = vperm.slane %v3573, %v3337
    %v3594 = vsel %vm3339, %v3593, %v3592
    %v3595 = vperm.slane %v3576, %v3341
    %v3596 = vsel %vm3343, %v3595, %v3594
    %v3597 = vperm.slane %v3579, %v3345
    %v3598 = vsel %vm3347, %v3597, %v3596
    %v3599 = vperm.slane %v3582, %v3349
    %v3600 = vsel %vm3351, %v3599, %v3598
    %v3601 = vperm.slane %v3585, %v3353
    %v3602 = vsel %vm3355, %v3601, %v3600
    %v3603 = vperm.slane %v3588, %v3357
    %v3604 = vsel %vm3359, %v3603, %v3602
    %v3605 = vperm.slane %v3591, %v3361
    %v3606 = vsel %vm3363, %v3605, %v3604
    %vm3607 = vcmask 523264
    %v3608 = vsel %vm3607, %v3606, 0
    %3610 = vmatpush.msra.mxu0 0.0
    %3611 = vmatpush.msra.mxu0 0.0
    %3612 = vmatpush.msra.mxu0 0.0
    %3613 = vmatpush.msra.mxu0 0.0
    %3614 = vmatpush.msra.mxu0 0.0
    %3615 = vmatpush.msra.mxu0 0.0
    %3616 = vmatpush.msra.mxu0 0.0
    %3617 = vmatpush.msra.mxu0 0.0
    %3618 = vmatpush.msra.mxu0 %v1897
    %3619 = vmatpush.msra.mxu0 %v1896
    %3620 = vmatpush.msra.mxu0 %v1895
    %3621 = vmatpush.msra.mxu0 %v1894
    %3622 = vmatpush.msra.mxu0 %v1893
    %3623 = vmatpush.msra.mxu0 %v1892
    %3624 = vmatpush.msra.mxu0 %v1891
    %3625 = vmatpush.msra.mxu0 %v1890
    %3626 = vmatmul.f32.gmra.mxu0 %v3608
    %v3627 = vpop.f32.mrf.mxu0
    %v3628 = vadd.f32 0.0, %v3627
    %3629 = vdwg.mxu0
    %3638 = vset.pattern.permute.xlu0 0
    %3639 = vperm.xlu0 %3638, %v3552
    %v3640 = vpop.permute.xlu0 %3639
    %3641 = vset.pattern.permute.xlu0 0
    %3642 = vperm.xlu0 %3641, %v3553
    %v3643 = vpop.permute.xlu0 %3642
    %3644 = vset.pattern.permute.xlu0 0
    %3645 = vperm.xlu0 %3644, %v3554
    %v3646 = vpop.permute.xlu0 %3645
    %3647 = vset.pattern.permute.xlu0 0
    %3648 = vperm.xlu0 %3647, %v3555
    %v3649 = vpop.permute.xlu0 %3648
    %3650 = vset.pattern.permute.xlu0 0
    %3651 = vperm.xlu0 %3650, %v3556
    %v3652 = vpop.permute.xlu0 %3651
    %3653 = vset.pattern.permute.xlu0 0
    %3654 = vperm.xlu0 %3653, %v3557
    %v3655 = vpop.permute.xlu0 %3654
    %3656 = vset.pattern.permute.xlu0 0
    %3657 = vperm.xlu0 %3656, %v3558
    %v3658 = vpop.permute.xlu0 %3657
    %3659 = vset.pattern.permute.xlu0 0
    %3660 = vperm.xlu0 %3659, %v3559
    %v3661 = vpop.permute.xlu0 %3660
    %v3662 = vperm.slane %v3640, %v3335
    %v3663 = vperm.slane %v3643, %v3337
    %v3664 = vsel %vm3339, %v3663, %v3662
    %v3665 = vperm.slane %v3646, %v3341
    %v3666 = vsel %vm3343, %v3665, %v3664
    %v3667 = vperm.slane %v3649, %v3345
    %v3668 = vsel %vm3347, %v3667, %v3666
    %v3669 = vperm.slane %v3652, %v3349
    %v3670 = vsel %vm3351, %v3669, %v3668
    %v3671 = vperm.slane %v3655, %v3353
    %v3672 = vsel %vm3355, %v3671, %v3670
    %v3673 = vperm.slane %v3658, %v3357
    %v3674 = vsel %vm3359, %v3673, %v3672
    %v3675 = vperm.slane %v3661, %v3361
    %v3676 = vsel %vm3363, %v3675, %v3674
    %v3677 = vsel %vm3607, %v3676, 0
    %3679 = vmatpush.msra.mxu0 0.0
    %3680 = vmatpush.msra.mxu0 0.0
    %3681 = vmatpush.msra.mxu0 0.0
    %3682 = vmatpush.msra.mxu0 0.0
    %3683 = vmatpush.msra.mxu0 0.0
    %3684 = vmatpush.msra.mxu0 0.0
    %3685 = vmatpush.msra.mxu0 0.0
    %3686 = vmatpush.msra.mxu0 0.0
    %3687 = vmatpush.msra.mxu0 %v1905
    %3688 = vmatpush.msra.mxu0 %v1904
    %3689 = vmatpush.msra.mxu0 %v1903
    %3690 = vmatpush.msra.mxu0 %v1902
    %3691 = vmatpush.msra.mxu0 %v1901
    %3692 = vmatpush.msra.mxu0 %v1900
    %3693 = vmatpush.msra.mxu0 %v1899
    %3694 = vmatpush.msra.mxu0 %v1898
    %3695 = vmatmul.f32.gmra.mxu0 %v3677
    %v3696 = vpop.f32.mrf.mxu0
    %v3697 = vadd.f32 0.0, %v3696
    %3698 = vdwg.mxu0
    %v3700 = vrot.slane %v2578, 1
    %3701 = vrot.lane.b32.xlu0 %v2578, 32
    %v3702 = vpop.permute.xlu0 %3701
    %3703 = vrot.lane.b32.xlu0 %v3700, 32
    %v3704 = vpop.permute.xlu0 %3703
    %v3707 = vadd.f32 %v3628, %v3702
    %v3708 = vadd.f32 %v3697, %v3704
    %v3709 = vpack.c.bf16 %v3707, %v3707
    %v3710 = vpack.c.bf16 %v3708, %v3708
    %v3711 = vld [vmem:[%s13] sm:$0xff]
    %v3712 = vld [vmem:[%s13 + $0x8] sm:$0xff]
    %v3713 = vld [vmem:[%s13 + $0x10] sm:$0xff]
    %v3714 = vld [vmem:[%s13 + $0x18] sm:$0xff]
    %v3715 = vld [vmem:[%s13 + $0x20] sm:$0xff]
    %v3716 = vld [vmem:[%s13 + $0x28] sm:$0xff]
    %v3717 = vld [vmem:[%s13 + $0x30] sm:$0xff]
    %v3718 = vld [vmem:[%s13 + $0x38] sm:$0xff]
    %v3719 = vld [vmem:[%s14] sm:$0xf]
    %v3721 = vperm.slane %v3719, 0
    %v3722 = vperm.slane %v3719, 1
    %v3723 = vperm.slane %v3719, 2
    %v3724 = vperm.slane %v3719, 3
    %v3731 = vunpack.c.l.b16 %v3709
    %v3732 = vunpack.c.l.b16 %v3710
    %v3733 = vrot.slane %v3732, 7
    %v3734 = vsel %vm2997, %v3733, %v3731
    %v3735 = vpack.c.b16 %v3734, %v3734
    %v3744 = vunpack.c.l.b16 %v3711
    %v3745 = vunpack.c.h.b16 %v3711
    %v3746 = vunpack.c.l.b16 %v3712
    %v3747 = vunpack.c.h.b16 %v3712
    %v3748 = vunpack.c.l.b16 %v3713
    %v3749 = vunpack.c.h.b16 %v3713
    %v3750 = vunpack.c.l.b16 %v3714
    %v3751 = vunpack.c.h.b16 %v3714
    %v3752 = vunpack.c.l.b16 %v3715
    %v3753 = vunpack.c.h.b16 %v3715
    %v3754 = vunpack.c.l.b16 %v3716
    %v3755 = vunpack.c.h.b16 %v3716
    %v3756 = vunpack.c.l.b16 %v3717
    %v3757 = vunpack.c.h.b16 %v3717
    %v3758 = vunpack.c.l.b16 %v3718
    %v3759 = vunpack.c.h.b16 %v3718
    %v3760 = vpack.c.b16 %v3748, %v3744
    %v3761 = vpack.c.b16 %v3749, %v3745
    %v3762 = vpack.c.b16 %v3750, %v3746
    %v3763 = vpack.c.b16 %v3751, %v3747
    %v3764 = vpack.c.b16 %v3756, %v3752
    %v3765 = vpack.c.b16 %v3757, %v3753
    %v3766 = vpack.c.b16 %v3758, %v3754
    %v3767 = vpack.c.b16 %v3759, %v3755
    %v3777 = vsel %vm936, %v3735, 0
    %3779 = vmatpush.bf16.msra.mxu0 0
    %3780 = vmatpush.bf16.msra.mxu0 0
    %3781 = vmatpush.bf16.msra.mxu0 0
    %3782 = vmatpush.bf16.msra.mxu0 0
    %3783 = vmatpush.bf16.msra.mxu0 0
    %3784 = vmatpush.bf16.msra.mxu0 0
    %3785 = vmatpush.bf16.msra.mxu0 %v3764
    %3786 = vmatpush.bf16.msra.mxu0 %v3760
    %3787 = vmatmul.bf16.gmra.mxu0 %v3777
    %v3788 = vpop.f32.mrf.mxu0
    %v3789 = vadd.f32 %v3721, %v3788
    %v3790 = vpop.f32.mrf.mxu0
    %3791 = vdwg.mxu0
    %3792 = vmatpush.bf16.msra.mxu0 0
    %3793 = vmatpush.bf16.msra.mxu0 0
    %3794 = vmatpush.bf16.msra.mxu0 0
    %3795 = vmatpush.bf16.msra.mxu0 0
    %3796 = vmatpush.bf16.msra.mxu0 0
    %3797 = vmatpush.bf16.msra.mxu0 0
    %3798 = vmatpush.bf16.msra.mxu0 %v3765
    %3799 = vmatpush.bf16.msra.mxu0 %v3761
    %3800 = vmatmul.bf16.gmra.mxu0 %v3777
    %v3801 = vpop.f32.mrf.mxu0
    %v3802 = vadd.f32 %v3722, %v3801
    %v3803 = vpop.f32.mrf.mxu0
    %3804 = vdwg.mxu0
    %3805 = vmatpush.bf16.msra.mxu0 0
    %3806 = vmatpush.bf16.msra.mxu0 0
    %3807 = vmatpush.bf16.msra.mxu0 0
    %3808 = vmatpush.bf16.msra.mxu0 0
    %3809 = vmatpush.bf16.msra.mxu0 0
    %3810 = vmatpush.bf16.msra.mxu0 0
    %3811 = vmatpush.bf16.msra.mxu0 %v3766
    %3812 = vmatpush.bf16.msra.mxu0 %v3762
    %3813 = vmatmul.bf16.gmra.mxu0 %v3777
    %v3814 = vpop.f32.mrf.mxu0
    %v3815 = vadd.f32 %v3723, %v3814
    %v3816 = vpop.f32.mrf.mxu0
    %3817 = vdwg.mxu0
    %3818 = vmatpush.bf16.msra.mxu0 0
    %3819 = vmatpush.bf16.msra.mxu0 0
    %3820 = vmatpush.bf16.msra.mxu0 0
    %3821 = vmatpush.bf16.msra.mxu0 0
    %3822 = vmatpush.bf16.msra.mxu0 0
    %3823 = vmatpush.bf16.msra.mxu0 0
    %3824 = vmatpush.bf16.msra.mxu0 %v3767
    %3825 = vmatpush.bf16.msra.mxu0 %v3763
    %3826 = vmatmul.bf16.gmra.mxu0 %v3777
    %v3827 = vpop.f32.mrf.mxu0
    %v3828 = vadd.f32 %v3724, %v3827
    %v3829 = vpop.f32.mrf.mxu0
    %3830 = vdwg.mxu0
    %v3835 = vrot.slane %v3802, 7
    %v3836 = vrot.slane %v3815, 6
    %v3837 = vrot.slane %v3828, 5
    %v3838 = vsel %vm2991, %v3789, %v3835
    %v3839 = vsel %vm2993, %v3836, %v3837
    %v3840 = vsel %vm2995, %v3838, %v3839
    %v3841 = vsel %vm2997, %v3789, %v3835
    %v3842 = vsel %vm2999, %v3836, %v3837
    %v3843 = vsel %vm3001, %v3841, %v3842
    %v3844 = vrot.slane %v3843, 1
    %v3845 = vperm.slane %v3840, 0
    %v3846 = vperm.slane %v3840, 1
    %v3847 = vperm.slane %v3840, 2
    %v3848 = vperm.slane %v3840, 3
    %v3849 = vperm.slane %v3844, 0
    %v3850 = vperm.slane %v3844, 1
    %v3851 = vperm.slane %v3844, 2
    %v3852 = vperm.slane %v3844, 3
    %v3861 = vadd.f32 %v2679, %v3845
    %v3862 = vadd.f32 %v2728, %v3846
    %v3863 = vadd.f32 %v2777, %v3847
    %v3864 = vadd.f32 %v2826, %v3848
    %v3865 = vadd.f32 %v2681, %v3845
    %v3866 = vadd.f32 %v2730, %v3846
    %v3867 = vadd.f32 %v2779, %v3847
    %v3868 = vadd.f32 %v2828, %v3848
    %v3869 = vadd.f32 %v2684, %v3845
    %v3870 = vadd.f32 %v2733, %v3846
    %v3871 = vadd.f32 %v2782, %v3847
    %v3872 = vadd.f32 %v2831, %v3848
    %v3873 = vadd.f32 %v2686, %v3845
    %v3874 = vadd.f32 %v2735, %v3846
    %v3875 = vadd.f32 %v2784, %v3847
    %v3876 = vadd.f32 %v2833, %v3848
    %v3877 = vadd.f32 %v2689, %v3845
    %v3878 = vadd.f32 %v2738, %v3846
    %v3879 = vadd.f32 %v2787, %v3847
    %v3880 = vadd.f32 %v2836, %v3848
    %v3881 = vadd.f32 %v2691, %v3845
    %v3882 = vadd.f32 %v2740, %v3846
    %v3883 = vadd.f32 %v2789, %v3847
    %v3884 = vadd.f32 %v2838, %v3848
    %v3885 = vadd.f32 %v2694, %v3845
    %v3886 = vadd.f32 %v2743, %v3846
    %v3887 = vadd.f32 %v2792, %v3847
    %v3888 = vadd.f32 %v2841, %v3848
    %v3889 = vadd.f32 %v2696, %v3845
    %v3890 = vadd.f32 %v2745, %v3846
    %v3891 = vadd.f32 %v2794, %v3847
    %v3892 = vadd.f32 %v2843, %v3848
    %v3893 = vadd.f32 %v2699, %v3849
    %v3894 = vadd.f32 %v2748, %v3850
    %v3895 = vadd.f32 %v2797, %v3851
    %v3896 = vadd.f32 %v2846, %v3852
    %v3897 = vadd.f32 %v2701, %v3849
    %v3898 = vadd.f32 %v2750, %v3850
    %v3899 = vadd.f32 %v2799, %v3851
    %v3900 = vadd.f32 %v2848, %v3852
    %v3901 = vadd.f32 %v2704, %v3849
    %v3902 = vadd.f32 %v2753, %v3850
    %v3903 = vadd.f32 %v2802, %v3851
    %v3904 = vadd.f32 %v2851, %v3852
    %v3905 = vadd.f32 %v2706, %v3849
    %v3906 = vadd.f32 %v2755, %v3850
    %v3907 = vadd.f32 %v2804, %v3851
    %v3908 = vadd.f32 %v2853, %v3852
    %v3909 = vadd.f32 %v2709, %v3849
    %v3910 = vadd.f32 %v2758, %v3850
    %v3911 = vadd.f32 %v2807, %v3851
    %v3912 = vadd.f32 %v2856, %v3852
    %v3913 = vadd.f32 %v2711, %v3849
    %v3914 = vadd.f32 %v2760, %v3850
    %v3915 = vadd.f32 %v2809, %v3851
    %v3916 = vadd.f32 %v2858, %v3852
    %v3917 = vadd.f32 %v2714, %v3849
    %v3918 = vadd.f32 %v2763, %v3850
    %v3919 = vadd.f32 %v2812, %v3851
    %v3920 = vadd.f32 %v2861, %v3852
    %v3921 = vadd.f32 %v2716, %v3849
    %v3922 = vadd.f32 %v2765, %v3850
    %v3923 = vadd.f32 %v2814, %v3851
    %v3924 = vadd.f32 %v2863, %v3852
    %v3925 = vtanh.pop %v3861
    %v3926 = vtanh.pop %v3862
    %v3927 = vtanh.pop %v3863
    %v3928 = vtanh.pop %v3864
    %v3929 = vtanh.pop %v3865
    %v3930 = vtanh.pop %v3866
    %v3931 = vtanh.pop %v3867
    %v3932 = vtanh.pop %v3868
    %v3933 = vtanh.pop %v3869
    %v3934 = vtanh.pop %v3870
    %v3935 = vtanh.pop %v3871
    %v3936 = vtanh.pop %v3872
    %v3937 = vtanh.pop %v3873
    %v3938 = vtanh.pop %v3874
    %v3939 = vtanh.pop %v3875
    %v3940 = vtanh.pop %v3876
    %v3941 = vtanh.pop %v3877
    %v3942 = vtanh.pop %v3878
    %v3943 = vtanh.pop %v3879
    %v3944 = vtanh.pop %v3880
    %v3945 = vtanh.pop %v3881
    %v3946 = vtanh.pop %v3882
    %v3947 = vtanh.pop %v3883
    %v3948 = vtanh.pop %v3884
    %v3949 = vtanh.pop %v3885
    %v3950 = vtanh.pop %v3886
    %v3951 = vtanh.pop %v3887
    %v3952 = vtanh.pop %v3888
    %v3953 = vtanh.pop %v3889
    %v3954 = vtanh.pop %v3890
    %v3955 = vtanh.pop %v3891
    %v3956 = vtanh.pop %v3892
    %v3957 = vtanh.pop %v3893
    %v3958 = vtanh.pop %v3894
    %v3959 = vtanh.pop %v3895
    %v3960 = vtanh.pop %v3896
    %v3961 = vtanh.pop %v3897
    %v3962 = vtanh.pop %v3898
    %v3963 = vtanh.pop %v3899
    %v3964 = vtanh.pop %v3900
    %v3965 = vtanh.pop %v3901
    %v3966 = vtanh.pop %v3902
    %v3967 = vtanh.pop %v3903
    %v3968 = vtanh.pop %v3904
    %v3969 = vtanh.pop %v3905
    %v3970 = vtanh.pop %v3906
    %v3971 = vtanh.pop %v3907
    %v3972 = vtanh.pop %v3908
    %v3973 = vtanh.pop %v3909
    %v3974 = vtanh.pop %v3910
    %v3975 = vtanh.pop %v3911
    %v3976 = vtanh.pop %v3912
    %v3977 = vtanh.pop %v3913
    %v3978 = vtanh.pop %v3914
    %v3979 = vtanh.pop %v3915
    %v3980 = vtanh.pop %v3916
    %v3981 = vtanh.pop %v3917
    %v3982 = vtanh.pop %v3918
    %v3983 = vtanh.pop %v3919
    %v3984 = vtanh.pop %v3920
    %v3985 = vtanh.pop %v3921
    %v3986 = vtanh.pop %v3922
    %v3987 = vtanh.pop %v3923
    %v3988 = vtanh.pop %v3924
    %v3989 = vmul.f32 %v3925, %v3149
    %v3990 = vmul.f32 %v3926, %v3150
    %v3991 = vmul.f32 %v3927, %v3151
    %v3992 = vmul.f32 %v3928, %v3152
    %v3993 = vmul.f32 %v3929, %v3149
    %v3994 = vmul.f32 %v3930, %v3150
    %v3995 = vmul.f32 %v3931, %v3151
    %v3996 = vmul.f32 %v3932, %v3152
    %v3997 = vmul.f32 %v3933, %v3149
    %v3998 = vmul.f32 %v3934, %v3150
    %v3999 = vmul.f32 %v3935, %v3151
    %v4000 = vmul.f32 %v3936, %v3152
    %v4001 = vmul.f32 %v3937, %v3149
    %v4002 = vmul.f32 %v3938, %v3150
    %v4003 = vmul.f32 %v3939, %v3151
    %v4004 = vmul.f32 %v3940, %v3152
    %v4005 = vmul.f32 %v3941, %v3149
    %v4006 = vmul.f32 %v3942, %v3150
    %v4007 = vmul.f32 %v3943, %v3151
    %v4008 = vmul.f32 %v3944, %v3152
    %v4009 = vmul.f32 %v3945, %v3149
    %v4010 = vmul.f32 %v3946, %v3150
    %v4011 = vmul.f32 %v3947, %v3151
    %v4012 = vmul.f32 %v3948, %v3152
    %v4013 = vmul.f32 %v3949, %v3149
    %v4014 = vmul.f32 %v3950, %v3150
    %v4015 = vmul.f32 %v3951, %v3151
    %v4016 = vmul.f32 %v3952, %v3152
    %v4017 = vmul.f32 %v3953, %v3149
    %v4018 = vmul.f32 %v3954, %v3150
    %v4019 = vmul.f32 %v3955, %v3151
    %v4020 = vmul.f32 %v3956, %v3152
    %v4021 = vmul.f32 %v3957, %v3149
    %v4022 = vmul.f32 %v3958, %v3150
    %v4023 = vmul.f32 %v3959, %v3151
    %v4024 = vmul.f32 %v3960, %v3152
    %v4025 = vmul.f32 %v3961, %v3149
    %v4026 = vmul.f32 %v3962, %v3150
    %v4027 = vmul.f32 %v3963, %v3151
    %v4028 = vmul.f32 %v3964, %v3152
    %v4029 = vmul.f32 %v3965, %v3149
    %v4030 = vmul.f32 %v3966, %v3150
    %v4031 = vmul.f32 %v3967, %v3151
    %v4032 = vmul.f32 %v3968, %v3152
    %v4033 = vmul.f32 %v3969, %v3149
    %v4034 = vmul.f32 %v3970, %v3150
    %v4035 = vmul.f32 %v3971, %v3151
    %v4036 = vmul.f32 %v3972, %v3152
    %v4037 = vmul.f32 %v3973, %v3149
    %v4038 = vmul.f32 %v3974, %v3150
    %v4039 = vmul.f32 %v3975, %v3151
    %v4040 = vmul.f32 %v3976, %v3152
    %v4041 = vmul.f32 %v3977, %v3149
    %v4042 = vmul.f32 %v3978, %v3150
    %v4043 = vmul.f32 %v3979, %v3151
    %v4044 = vmul.f32 %v3980, %v3152
    %v4045 = vmul.f32 %v3981, %v3149
    %v4046 = vmul.f32 %v3982, %v3150
    %v4047 = vmul.f32 %v3983, %v3151
    %v4048 = vmul.f32 %v3984, %v3152
    %v4049 = vmul.f32 %v3985, %v3149
    %v4050 = vmul.f32 %v3986, %v3150
    %v4051 = vmul.f32 %v3987, %v3151
    %v4052 = vmul.f32 %v3988, %v3152
    %v4053 = vadd.f32 %v3989, %v3990
    %v4054 = vadd.f32 %v4053, %v3991
    %v4055 = vadd.f32 %v4054, %v3992
    %4056 = vadd.xlane.f32.xlu0 %v4055
    %v4057 = vpop.xlane.xlu0 %4056
    %v4058 = vadd.f32 %v3993, %v3994
    %v4059 = vadd.f32 %v4058, %v3995
    %v4060 = vadd.f32 %v4059, %v3996
    %4061 = vadd.xlane.f32.xlu0 %v4060
    %v4062 = vpop.xlane.xlu0 %4061
    %v4063 = vadd.f32 %v3997, %v3998
    %v4064 = vadd.f32 %v4063, %v3999
    %v4065 = vadd.f32 %v4064, %v4000
    %4066 = vadd.xlane.f32.xlu0 %v4065
    %v4067 = vpop.xlane.xlu0 %4066
    %v4068 = vadd.f32 %v4001, %v4002
    %v4069 = vadd.f32 %v4068, %v4003
    %v4070 = vadd.f32 %v4069, %v4004
    %4071 = vadd.xlane.f32.xlu0 %v4070
    %v4072 = vpop.xlane.xlu0 %4071
    %v4073 = vadd.f32 %v4005, %v4006
    %v4074 = vadd.f32 %v4073, %v4007
    %v4075 = vadd.f32 %v4074, %v4008
    %4076 = vadd.xlane.f32.xlu0 %v4075
    %v4077 = vpop.xlane.xlu0 %4076
    %v4078 = vadd.f32 %v4009, %v4010
    %v4079 = vadd.f32 %v4078, %v4011
    %v4080 = vadd.f32 %v4079, %v4012
    %4081 = vadd.xlane.f32.xlu0 %v4080
    %v4082 = vpop.xlane.xlu0 %4081
    %v4083 = vadd.f32 %v4013, %v4014
    %v4084 = vadd.f32 %v4083, %v4015
    %v4085 = vadd.f32 %v4084, %v4016
    %4086 = vadd.xlane.f32.xlu0 %v4085
    %v4087 = vpop.xlane.xlu0 %4086
    %v4088 = vadd.f32 %v4017, %v4018
    %v4089 = vadd.f32 %v4088, %v4019
    %v4090 = vadd.f32 %v4089, %v4020
    %4091 = vadd.xlane.f32.xlu0 %v4090
    %v4092 = vpop.xlane.xlu0 %4091
    %v4093 = vadd.f32 %v4021, %v4022
    %v4094 = vadd.f32 %v4093, %v4023
    %v4095 = vadd.f32 %v4094, %v4024
    %4096 = vadd.xlane.f32.xlu0 %v4095
    %v4097 = vpop.xlane.xlu0 %4096
    %v4098 = vadd.f32 %v4025, %v4026
    %v4099 = vadd.f32 %v4098, %v4027
    %v4100 = vadd.f32 %v4099, %v4028
    %4101 = vadd.xlane.f32.xlu0 %v4100
    %v4102 = vpop.xlane.xlu0 %4101
    %v4103 = vadd.f32 %v4029, %v4030
    %v4104 = vadd.f32 %v4103, %v4031
    %v4105 = vadd.f32 %v4104, %v4032
    %4106 = vadd.xlane.f32.xlu0 %v4105
    %v4107 = vpop.xlane.xlu0 %4106
    %v4108 = vadd.f32 %v4033, %v4034
    %v4109 = vadd.f32 %v4108, %v4035
    %v4110 = vadd.f32 %v4109, %v4036
    %4111 = vadd.xlane.f32.xlu0 %v4110
    %v4112 = vpop.xlane.xlu0 %4111
    %v4113 = vadd.f32 %v4037, %v4038
    %v4114 = vadd.f32 %v4113, %v4039
    %v4115 = vadd.f32 %v4114, %v4040
    %4116 = vadd.xlane.f32.xlu0 %v4115
    %v4117 = vpop.xlane.xlu0 %4116
    %v4118 = vadd.f32 %v4041, %v4042
    %v4119 = vadd.f32 %v4118, %v4043
    %v4120 = vadd.f32 %v4119, %v4044
    %4121 = vadd.xlane.f32.xlu0 %v4120
    %v4122 = vpop.xlane.xlu0 %4121
    %v4123 = vadd.f32 %v4045, %v4046
    %v4124 = vadd.f32 %v4123, %v4047
    %v4125 = vadd.f32 %v4124, %v4048
    %4126 = vadd.xlane.f32.xlu0 %v4125
    %v4127 = vpop.xlane.xlu0 %4126
    %v4128 = vadd.f32 %v4049, %v4050
    %v4129 = vadd.f32 %v4128, %v4051
    %v4130 = vadd.f32 %v4129, %v4052
    %4131 = vadd.xlane.f32.xlu0 %v4130
    %v4132 = vpop.xlane.xlu0 %4131
    %v4133 = vadd.f32 %v4057, %v3301
    %v4134 = vadd.f32 %v4062, %v3301
    %v4135 = vadd.f32 %v4067, %v3301
    %v4136 = vadd.f32 %v4072, %v3301
    %v4137 = vadd.f32 %v4077, %v3301
    %v4138 = vadd.f32 %v4082, %v3301
    %v4139 = vadd.f32 %v4087, %v3301
    %v4140 = vadd.f32 %v4092, %v3301
    %v4141 = vadd.f32 %v4097, %v3301
    %v4142 = vadd.f32 %v4102, %v3301
    %v4143 = vadd.f32 %v4107, %v3301
    %v4144 = vadd.f32 %v4112, %v3301
    %v4145 = vadd.f32 %v4117, %v3301
    %v4146 = vadd.f32 %v4122, %v3301
    %v4147 = vadd.f32 %v4127, %v3301
    %v4148 = vadd.f32 %v4132, %v3301
    %v4165 = vperm.slane %v4133, %v3335
    %v4166 = vperm.slane %v4134, %v3337
    %v4167 = vsel %vm3339, %v4166, %v4165
    %v4168 = vperm.slane %v4135, %v3341
    %v4169 = vsel %vm3343, %v4168, %v4167
    %v4170 = vperm.slane %v4136, %v3345
    %v4171 = vsel %vm3347, %v4170, %v4169
    %v4172 = vperm.slane %v4137, %v3349
    %v4173 = vsel %vm3351, %v4172, %v4171
    %v4174 = vperm.slane %v4138, %v3353
    %v4175 = vsel %vm3355, %v4174, %v4173
    %v4176 = vperm.slane %v4139, %v3357
    %v4177 = vsel %vm3359, %v4176, %v4175
    %v4178 = vperm.slane %v4140, %v3361
    %v4179 = vsel %vm3363, %v4178, %v4177
    %v4180 = vperm.slane %v4141, %v3335
    %v4181 = vperm.slane %v4142, %v3337
    %v4182 = vsel %vm3339, %v4181, %v4180
    %v4183 = vperm.slane %v4143, %v3341
    %v4184 = vsel %vm3343, %v4183, %v4182
    %v4185 = vperm.slane %v4144, %v3345
    %v4186 = vsel %vm3347, %v4185, %v4184
    %v4187 = vperm.slane %v4145, %v3349
    %v4188 = vsel %vm3351, %v4187, %v4186
    %v4189 = vperm.slane %v4146, %v3353
    %v4190 = vsel %vm3355, %v4189, %v4188
    %v4191 = vperm.slane %v4147, %v3357
    %v4192 = vsel %vm3359, %v4191, %v4190
    %v4193 = vperm.slane %v4148, %v3361
    %v4194 = vsel %vm3363, %v4193, %v4192
    %v4195 = vsel %vm2997, %v4194, %v4179
    %v4197 = vsel %vm3382, %v4195, -inf
    %4198 = vmax.xlane.f32.xlu0 %v4197
    %v4199 = vpop.xlane.xlu0 %4198
    %v4201 = vperm.slane %v4199, 0
    %v4202 = vperm.slane %v4199, 1
    %v4205 = vsub.f32 %v4133, %v4201
    %v4206 = vsub.f32 %v4134, %v4201
    %v4207 = vsub.f32 %v4135, %v4201
    %v4208 = vsub.f32 %v4136, %v4201
    %v4209 = vsub.f32 %v4137, %v4201
    %v4210 = vsub.f32 %v4138, %v4201
    %v4211 = vsub.f32 %v4139, %v4201
    %v4212 = vsub.f32 %v4140, %v4201
    %v4213 = vsub.f32 %v4141, %v4202
    %v4214 = vsub.f32 %v4142, %v4202
    %v4215 = vsub.f32 %v4143, %v4202
    %v4216 = vsub.f32 %v4144, %v4202
    %v4217 = vsub.f32 %v4145, %v4202
    %v4218 = vsub.f32 %v4146, %v4202
    %v4219 = vsub.f32 %v4147, %v4202
    %v4220 = vsub.f32 %v4148, %v4202
    %v4221 = vmul.f32 %v4205, 1.442695
    %v4222 = vpow.pop %v4221
    %v4223 = vmul.f32 %v4206, 1.442695
    %v4224 = vpow.pop %v4223
    %v4225 = vmul.f32 %v4207, 1.442695
    %v4226 = vpow.pop %v4225
    %v4227 = vmul.f32 %v4208, 1.442695
    %v4228 = vpow.pop %v4227
    %v4229 = vmul.f32 %v4209, 1.442695
    %v4230 = vpow.pop %v4229
    %v4231 = vmul.f32 %v4210, 1.442695
    %v4232 = vpow.pop %v4231
    %v4233 = vmul.f32 %v4211, 1.442695
    %v4234 = vpow.pop %v4233
    %v4235 = vmul.f32 %v4212, 1.442695
    %v4236 = vpow.pop %v4235
    %v4237 = vmul.f32 %v4213, 1.442695
    %v4238 = vpow.pop %v4237
    %v4239 = vmul.f32 %v4214, 1.442695
    %v4240 = vpow.pop %v4239
    %v4241 = vmul.f32 %v4215, 1.442695
    %v4242 = vpow.pop %v4241
    %v4243 = vmul.f32 %v4216, 1.442695
    %v4244 = vpow.pop %v4243
    %v4245 = vmul.f32 %v4217, 1.442695
    %v4246 = vpow.pop %v4245
    %v4247 = vmul.f32 %v4218, 1.442695
    %v4248 = vpow.pop %v4247
    %v4249 = vmul.f32 %v4219, 1.442695
    %v4250 = vpow.pop %v4249
    %v4251 = vmul.f32 %v4220, 1.442695
    %v4252 = vpow.pop %v4251
    %4269 = vset.pattern.permute.xlu0 0
    %4270 = vperm.xlu0 %4269, %v4222
    %v4271 = vpop.permute.xlu0 %4270
    %4272 = vset.pattern.permute.xlu0 0
    %4273 = vperm.xlu0 %4272, %v4224
    %v4274 = vpop.permute.xlu0 %4273
    %4275 = vset.pattern.permute.xlu0 0
    %4276 = vperm.xlu0 %4275, %v4226
    %v4277 = vpop.permute.xlu0 %4276
    %4278 = vset.pattern.permute.xlu0 0
    %4279 = vperm.xlu0 %4278, %v4228
    %v4280 = vpop.permute.xlu0 %4279
    %4281 = vset.pattern.permute.xlu0 0
    %4282 = vperm.xlu0 %4281, %v4230
    %v4283 = vpop.permute.xlu0 %4282
    %4284 = vset.pattern.permute.xlu0 0
    %4285 = vperm.xlu0 %4284, %v4232
    %v4286 = vpop.permute.xlu0 %4285
    %4287 = vset.pattern.permute.xlu0 0
    %4288 = vperm.xlu0 %4287, %v4234
    %v4289 = vpop.permute.xlu0 %4288
    %4290 = vset.pattern.permute.xlu0 0
    %4291 = vperm.xlu0 %4290, %v4236
    %v4292 = vpop.permute.xlu0 %4291
    %4293 = vset.pattern.permute.xlu0 0
    %4294 = vperm.xlu0 %4293, %v4238
    %v4295 = vpop.permute.xlu0 %4294
    %4296 = vset.pattern.permute.xlu0 0
    %4297 = vperm.xlu0 %4296, %v4240
    %v4298 = vpop.permute.xlu0 %4297
    %4299 = vset.pattern.permute.xlu0 0
    %4300 = vperm.xlu0 %4299, %v4242
    %v4301 = vpop.permute.xlu0 %4300
    %4302 = vset.pattern.permute.xlu0 0
    %4303 = vperm.xlu0 %4302, %v4244
    %v4304 = vpop.permute.xlu0 %4303
    %4305 = vset.pattern.permute.xlu0 0
    %4306 = vperm.xlu0 %4305, %v4246
    %v4307 = vpop.permute.xlu0 %4306
    %4308 = vset.pattern.permute.xlu0 0
    %4309 = vperm.xlu0 %4308, %v4248
    %v4310 = vpop.permute.xlu0 %4309
    %4311 = vset.pattern.permute.xlu0 0
    %4312 = vperm.xlu0 %4311, %v4250
    %v4313 = vpop.permute.xlu0 %4312
    %4314 = vset.pattern.permute.xlu0 0
    %4315 = vperm.xlu0 %4314, %v4252
    %v4316 = vpop.permute.xlu0 %4315
    %v4317 = vperm.slane %v4271, %v3335
    %v4318 = vperm.slane %v4274, %v3337
    %v4319 = vsel %vm3339, %v4318, %v4317
    %v4320 = vperm.slane %v4277, %v3341
    %v4321 = vsel %vm3343, %v4320, %v4319
    %v4322 = vperm.slane %v4280, %v3345
    %v4323 = vsel %vm3347, %v4322, %v4321
    %v4324 = vperm.slane %v4283, %v3349
    %v4325 = vsel %vm3351, %v4324, %v4323
    %v4326 = vperm.slane %v4286, %v3353
    %v4327 = vsel %vm3355, %v4326, %v4325
    %v4328 = vperm.slane %v4289, %v3357
    %v4329 = vsel %vm3359, %v4328, %v4327
    %v4330 = vperm.slane %v4292, %v3361
    %v4331 = vsel %vm3363, %v4330, %v4329
    %v4332 = vperm.slane %v4295, %v3335
    %v4333 = vperm.slane %v4298, %v3337
    %v4334 = vsel %vm3339, %v4333, %v4332
    %v4335 = vperm.slane %v4301, %v3341
    %v4336 = vsel %vm3343, %v4335, %v4334
    %v4337 = vperm.slane %v4304, %v3345
    %v4338 = vsel %vm3347, %v4337, %v4336
    %v4339 = vperm.slane %v4307, %v3349
    %v4340 = vsel %vm3351, %v4339, %v4338
    %v4341 = vperm.slane %v4310, %v3353
    %v4342 = vsel %vm3355, %v4341, %v4340
    %v4343 = vperm.slane %v4313, %v3357
    %v4344 = vsel %vm3359, %v4343, %v4342
    %v4345 = vperm.slane %v4316, %v3361
    %v4346 = vsel %vm3363, %v4345, %v4344
    %v4347 = vsel %vm2997, %v4346, %v4331
    %v4349 = vsel %vm3382, %v4347, 0.0
    %4350 = vadd.xlane.f32.xlu0 %v4349
    %v4351 = vpop.xlane.xlu0 %4350
    %v4352 = vrcp.pop %v4351
    %v4354 = vperm.slane %v4352, 0
    %v4355 = vperm.slane %v4352, 1
    %v4358 = vmul.f32 %v4222, %v4354
    %v4359 = vmul.f32 %v4224, %v4354
    %v4360 = vmul.f32 %v4226, %v4354
    %v4361 = vmul.f32 %v4228, %v4354
    %v4362 = vmul.f32 %v4230, %v4354
    %v4363 = vmul.f32 %v4232, %v4354
    %v4364 = vmul.f32 %v4234, %v4354
    %v4365 = vmul.f32 %v4236, %v4354
    %v4366 = vmul.f32 %v4238, %v4355
    %v4367 = vmul.f32 %v4240, %v4355
    %v4368 = vmul.f32 %v4242, %v4355
    %v4369 = vmul.f32 %v4244, %v4355
    %v4370 = vmul.f32 %v4246, %v4355
    %v4371 = vmul.f32 %v4248, %v4355
    %v4372 = vmul.f32 %v4250, %v4355
    %v4373 = vmul.f32 %v4252, %v4355
    %4382 = vset.pattern.permute.xlu0 0
    %4383 = vperm.xlu0 %4382, %v4358
    %v4384 = vpop.permute.xlu0 %4383
    %4385 = vset.pattern.permute.xlu0 0
    %4386 = vperm.xlu0 %4385, %v4359
    %v4387 = vpop.permute.xlu0 %4386
    %4388 = vset.pattern.permute.xlu0 0
    %4389 = vperm.xlu0 %4388, %v4360
    %v4390 = vpop.permute.xlu0 %4389
    %4391 = vset.pattern.permute.xlu0 0
    %4392 = vperm.xlu0 %4391, %v4361
    %v4393 = vpop.permute.xlu0 %4392
    %4394 = vset.pattern.permute.xlu0 0
    %4395 = vperm.xlu0 %4394, %v4362
    %v4396 = vpop.permute.xlu0 %4395
    %4397 = vset.pattern.permute.xlu0 0
    %4398 = vperm.xlu0 %4397, %v4363
    %v4399 = vpop.permute.xlu0 %4398
    %4400 = vset.pattern.permute.xlu0 0
    %4401 = vperm.xlu0 %4400, %v4364
    %v4402 = vpop.permute.xlu0 %4401
    %4403 = vset.pattern.permute.xlu0 0
    %4404 = vperm.xlu0 %4403, %v4365
    %v4405 = vpop.permute.xlu0 %4404
    %v4406 = vperm.slane %v4384, %v3335
    %v4407 = vperm.slane %v4387, %v3337
    %v4408 = vsel %vm3339, %v4407, %v4406
    %v4409 = vperm.slane %v4390, %v3341
    %v4410 = vsel %vm3343, %v4409, %v4408
    %v4411 = vperm.slane %v4393, %v3345
    %v4412 = vsel %vm3347, %v4411, %v4410
    %v4413 = vperm.slane %v4396, %v3349
    %v4414 = vsel %vm3351, %v4413, %v4412
    %v4415 = vperm.slane %v4399, %v3353
    %v4416 = vsel %vm3355, %v4415, %v4414
    %v4417 = vperm.slane %v4402, %v3357
    %v4418 = vsel %vm3359, %v4417, %v4416
    %v4419 = vperm.slane %v4405, %v3361
    %v4420 = vsel %vm3363, %v4419, %v4418
    %v4421 = vsel %vm3607, %v4420, 0
    %4423 = vmatpush.msra.mxu0 0.0
    %4424 = vmatpush.msra.mxu0 0.0
    %4425 = vmatpush.msra.mxu0 0.0
    %4426 = vmatpush.msra.mxu0 0.0
    %4427 = vmatpush.msra.mxu0 0.0
    %4428 = vmatpush.msra.mxu0 0.0
    %4429 = vmatpush.msra.mxu0 0.0
    %4430 = vmatpush.msra.mxu0 0.0
    %4431 = vmatpush.msra.mxu0 %v1897
    %4432 = vmatpush.msra.mxu0 %v1896
    %4433 = vmatpush.msra.mxu0 %v1895
    %4434 = vmatpush.msra.mxu0 %v1894
    %4435 = vmatpush.msra.mxu0 %v1893
    %4436 = vmatpush.msra.mxu0 %v1892
    %4437 = vmatpush.msra.mxu0 %v1891
    %4438 = vmatpush.msra.mxu0 %v1890
    %4439 = vmatmul.f32.gmra.mxu0 %v4421
    %v4440 = vpop.f32.mrf.mxu0
    %v4441 = vadd.f32 0.0, %v4440
    %4442 = vdwg.mxu0
    %4451 = vset.pattern.permute.xlu0 0
    %4452 = vperm.xlu0 %4451, %v4366
    %v4453 = vpop.permute.xlu0 %4452
    %4454 = vset.pattern.permute.xlu0 0
    %4455 = vperm.xlu0 %4454, %v4367
    %v4456 = vpop.permute.xlu0 %4455
    %4457 = vset.pattern.permute.xlu0 0
    %4458 = vperm.xlu0 %4457, %v4368
    %v4459 = vpop.permute.xlu0 %4458
    %4460 = vset.pattern.permute.xlu0 0
    %4461 = vperm.xlu0 %4460, %v4369
    %v4462 = vpop.permute.xlu0 %4461
    %4463 = vset.pattern.permute.xlu0 0
    %4464 = vperm.xlu0 %4463, %v4370
    %v4465 = vpop.permute.xlu0 %4464
    %4466 = vset.pattern.permute.xlu0 0
    %4467 = vperm.xlu0 %4466, %v4371
    %v4468 = vpop.permute.xlu0 %4467
    %4469 = vset.pattern.permute.xlu0 0
    %4470 = vperm.xlu0 %4469, %v4372
    %v4471 = vpop.permute.xlu0 %4470
    %4472 = vset.pattern.permute.xlu0 0
    %4473 = vperm.xlu0 %4472, %v4373
    %v4474 = vpop.permute.xlu0 %4473
    %v4475 = vperm.slane %v4453, %v3335
    %v4476 = vperm.slane %v4456, %v3337
    %v4477 = vsel %vm3339, %v4476, %v4475
    %v4478 = vperm.slane %v4459, %v3341
    %v4479 = vsel %vm3343, %v4478, %v4477
    %v4480 = vperm.slane %v4462, %v3345
    %v4481 = vsel %vm3347, %v4480, %v4479
    %v4482 = vperm.slane %v4465, %v3349
    %v4483 = vsel %vm3351, %v4482, %v4481
    %v4484 = vperm.slane %v4468, %v3353
    %v4485 = vsel %vm3355, %v4484, %v4483
    %v4486 = vperm.slane %v4471, %v3357
    %v4487 = vsel %vm3359, %v4486, %v4485
    %v4488 = vperm.slane %v4474, %v3361
    %v4489 = vsel %vm3363, %v4488, %v4487
    %v4490 = vsel %vm3607, %v4489, 0
    %4492 = vmatpush.msra.mxu0 0.0
    %4493 = vmatpush.msra.mxu0 0.0
    %4494 = vmatpush.msra.mxu0 0.0
    %4495 = vmatpush.msra.mxu0 0.0
    %4496 = vmatpush.msra.mxu0 0.0
    %4497 = vmatpush.msra.mxu0 0.0
    %4498 = vmatpush.msra.mxu0 0.0
    %4499 = vmatpush.msra.mxu0 0.0
    %4500 = vmatpush.msra.mxu0 %v1905
    %4501 = vmatpush.msra.mxu0 %v1904
    %4502 = vmatpush.msra.mxu0 %v1903
    %4503 = vmatpush.msra.mxu0 %v1902
    %4504 = vmatpush.msra.mxu0 %v1901
    %4505 = vmatpush.msra.mxu0 %v1900
    %4506 = vmatpush.msra.mxu0 %v1899
    %4507 = vmatpush.msra.mxu0 %v1898
    %4508 = vmatmul.f32.gmra.mxu0 %v4490
    %v4509 = vpop.f32.mrf.mxu0
    %v4510 = vadd.f32 0.0, %v4509
    %4511 = vdwg.mxu0
    %v4512 = vadd.f32 %v4441, %v3707
    %v4513 = vadd.f32 %v4510, %v3708
    %v4514 = vpack.c.bf16 %v4512, %v4512
    %v4515 = vpack.c.bf16 %v4513, %v4513
    %v4516 = vld [vmem:[%s13] sm:$0xff]
    %v4517 = vld [vmem:[%s13 + $0x8] sm:$0xff]
    %v4518 = vld [vmem:[%s13 + $0x10] sm:$0xff]
    %v4519 = vld [vmem:[%s13 + $0x18] sm:$0xff]
    %v4520 = vld [vmem:[%s13 + $0x20] sm:$0xff]
    %v4521 = vld [vmem:[%s13 + $0x28] sm:$0xff]
    %v4522 = vld [vmem:[%s13 + $0x30] sm:$0xff]
    %v4523 = vld [vmem:[%s13 + $0x38] sm:$0xff]
    %v4524 = vld [vmem:[%s14] sm:$0xf]
    %v4526 = vperm.slane %v4524, 0
    %v4527 = vperm.slane %v4524, 1
    %v4528 = vperm.slane %v4524, 2
    %v4529 = vperm.slane %v4524, 3
    %v4536 = vunpack.c.l.b16 %v4514
    %v4537 = vunpack.c.l.b16 %v4515
    %v4538 = vrot.slane %v4537, 7
    %v4539 = vsel %vm2997, %v4538, %v4536
    %v4540 = vpack.c.b16 %v4539, %v4539
    %v4549 = vunpack.c.l.b16 %v4516
    %v4550 = vunpack.c.h.b16 %v4516
    %v4551 = vunpack.c.l.b16 %v4517
    %v4552 = vunpack.c.h.b16 %v4517
    %v4553 = vunpack.c.l.b16 %v4518
    %v4554 = vunpack.c.h.b16 %v4518
    %v4555 = vunpack.c.l.b16 %v4519
    %v4556 = vunpack.c.h.b16 %v4519
    %v4557 = vunpack.c.l.b16 %v4520
    %v4558 = vunpack.c.h.b16 %v4520
    %v4559 = vunpack.c.l.b16 %v4521
    %v4560 = vunpack.c.h.b16 %v4521
    %v4561 = vunpack.c.l.b16 %v4522
    %v4562 = vunpack.c.h.b16 %v4522
    %v4563 = vunpack.c.l.b16 %v4523
    %v4564 = vunpack.c.h.b16 %v4523
    %v4565 = vpack.c.b16 %v4553, %v4549
    %v4566 = vpack.c.b16 %v4554, %v4550
    %v4567 = vpack.c.b16 %v4555, %v4551
    %v4568 = vpack.c.b16 %v4556, %v4552
    %v4569 = vpack.c.b16 %v4561, %v4557
    %v4570 = vpack.c.b16 %v4562, %v4558
    %v4571 = vpack.c.b16 %v4563, %v4559
    %v4572 = vpack.c.b16 %v4564, %v4560
    %v4582 = vsel %vm936, %v4540, 0
    %4584 = vmatpush.bf16.msra.mxu0 0
    %4585 = vmatpush.bf16.msra.mxu0 0
    %4586 = vmatpush.bf16.msra.mxu0 0
    %4587 = vmatpush.bf16.msra.mxu0 0
    %4588 = vmatpush.bf16.msra.mxu0 0
    %4589 = vmatpush.bf16.msra.mxu0 0
    %4590 = vmatpush.bf16.msra.mxu0 %v4569
    %4591 = vmatpush.bf16.msra.mxu0 %v4565
    %4592 = vmatmul.bf16.gmra.mxu0 %v4582
    %v4593 = vpop.f32.mrf.mxu0
    %v4594 = vadd.f32 %v4526, %v4593
    %v4595 = vpop.f32.mrf.mxu0
    %4596 = vdwg.mxu0
    %4597 = vmatpush.bf16.msra.mxu0 0
    %4598 = vmatpush.bf16.msra.mxu0 0
    %4599 = vmatpush.bf16.msra.mxu0 0
    %4600 = vmatpush.bf16.msra.mxu0 0
    %4601 = vmatpush.bf16.msra.mxu0 0
    %4602 = vmatpush.bf16.msra.mxu0 0
    %4603 = vmatpush.bf16.msra.mxu0 %v4570
    %4604 = vmatpush.bf16.msra.mxu0 %v4566
    %4605 = vmatmul.bf16.gmra.mxu0 %v4582
    %v4606 = vpop.f32.mrf.mxu0
    %v4607 = vadd.f32 %v4527, %v4606
    %v4608 = vpop.f32.mrf.mxu0
    %4609 = vdwg.mxu0
    %4610 = vmatpush.bf16.msra.mxu0 0
    %4611 = vmatpush.bf16.msra.mxu0 0
    %4612 = vmatpush.bf16.msra.mxu0 0
    %4613 = vmatpush.bf16.msra.mxu0 0
    %4614 = vmatpush.bf16.msra.mxu0 0
    %4615 = vmatpush.bf16.msra.mxu0 0
    %4616 = vmatpush.bf16.msra.mxu0 %v4571
    %4617 = vmatpush.bf16.msra.mxu0 %v4567
    %4618 = vmatmul.bf16.gmra.mxu0 %v4582
    %v4619 = vpop.f32.mrf.mxu0
    %v4620 = vadd.f32 %v4528, %v4619
    %v4621 = vpop.f32.mrf.mxu0
    %4622 = vdwg.mxu0
    %4623 = vmatpush.bf16.msra.mxu0 0
    %4624 = vmatpush.bf16.msra.mxu0 0
    %4625 = vmatpush.bf16.msra.mxu0 0
    %4626 = vmatpush.bf16.msra.mxu0 0
    %4627 = vmatpush.bf16.msra.mxu0 0
    %4628 = vmatpush.bf16.msra.mxu0 0
    %4629 = vmatpush.bf16.msra.mxu0 %v4572
    %4630 = vmatpush.bf16.msra.mxu0 %v4568
    %4631 = vmatmul.bf16.gmra.mxu0 %v4582
    %v4632 = vpop.f32.mrf.mxu0
    %v4633 = vadd.f32 %v4529, %v4632
    %v4634 = vpop.f32.mrf.mxu0
    %4635 = vdwg.mxu0
    %v4640 = vrot.slane %v4607, 7
    %v4641 = vrot.slane %v4620, 6
    %v4642 = vrot.slane %v4633, 5
    %v4643 = vsel %vm2991, %v4594, %v4640
    %v4644 = vsel %vm2993, %v4641, %v4642
    %v4645 = vsel %vm2995, %v4643, %v4644
    %v4646 = vsel %vm2997, %v4594, %v4640
    %v4647 = vsel %vm2999, %v4641, %v4642
    %v4648 = vsel %vm3001, %v4646, %v4647
    %v4649 = vrot.slane %v4648, 1
    %v4650 = vperm.slane %v4645, 0
    %v4651 = vperm.slane %v4645, 1
    %v4652 = vperm.slane %v4645, 2
    %v4653 = vperm.slane %v4645, 3
    %v4654 = vperm.slane %v4649, 0
    %v4655 = vperm.slane %v4649, 1
    %v4656 = vperm.slane %v4649, 2
    %v4657 = vperm.slane %v4649, 3
    %v4666 = vadd.f32 %v2679, %v4650
    %v4667 = vadd.f32 %v2728, %v4651
    %v4668 = vadd.f32 %v2777, %v4652
    %v4669 = vadd.f32 %v2826, %v4653
    %v4670 = vadd.f32 %v2681, %v4650
    %v4671 = vadd.f32 %v2730, %v4651
    %v4672 = vadd.f32 %v2779, %v4652
    %v4673 = vadd.f32 %v2828, %v4653
    %v4674 = vadd.f32 %v2684, %v4650
    %v4675 = vadd.f32 %v2733, %v4651
    %v4676 = vadd.f32 %v2782, %v4652
    %v4677 = vadd.f32 %v2831, %v4653
    %v4678 = vadd.f32 %v2686, %v4650
    %v4679 = vadd.f32 %v2735, %v4651
    %v4680 = vadd.f32 %v2784, %v4652
    %v4681 = vadd.f32 %v2833, %v4653
    %v4682 = vadd.f32 %v2689, %v4650
    %v4683 = vadd.f32 %v2738, %v4651
    %v4684 = vadd.f32 %v2787, %v4652
    %v4685 = vadd.f32 %v2836, %v4653
    %v4686 = vadd.f32 %v2691, %v4650
    %v4687 = vadd.f32 %v2740, %v4651
    %v4688 = vadd.f32 %v2789, %v4652
    %v4689 = vadd.f32 %v2838, %v4653
    %v4690 = vadd.f32 %v2694, %v4650
    %v4691 = vadd.f32 %v2743, %v4651
    %v4692 = vadd.f32 %v2792, %v4652
    %v4693 = vadd.f32 %v2841, %v4653
    %v4694 = vadd.f32 %v2696, %v4650
    %v4695 = vadd.f32 %v2745, %v4651
    %v4696 = vadd.f32 %v2794, %v4652
    %v4697 = vadd.f32 %v2843, %v4653
    %v4698 = vadd.f32 %v2699, %v4654
    %v4699 = vadd.f32 %v2748, %v4655
    %v4700 = vadd.f32 %v2797, %v4656
    %v4701 = vadd.f32 %v2846, %v4657
    %v4702 = vadd.f32 %v2701, %v4654
    %v4703 = vadd.f32 %v2750, %v4655
    %v4704 = vadd.f32 %v2799, %v4656
    %v4705 = vadd.f32 %v2848, %v4657
    %v4706 = vadd.f32 %v2704, %v4654
    %v4707 = vadd.f32 %v2753, %v4655
    %v4708 = vadd.f32 %v2802, %v4656
    %v4709 = vadd.f32 %v2851, %v4657
    %v4710 = vadd.f32 %v2706, %v4654
    %v4711 = vadd.f32 %v2755, %v4655
    %v4712 = vadd.f32 %v2804, %v4656
    %v4713 = vadd.f32 %v2853, %v4657
    %v4714 = vadd.f32 %v2709, %v4654
    %v4715 = vadd.f32 %v2758, %v4655
    %v4716 = vadd.f32 %v2807, %v4656
    %v4717 = vadd.f32 %v2856, %v4657
    %v4718 = vadd.f32 %v2711, %v4654
    %v4719 = vadd.f32 %v2760, %v4655
    %v4720 = vadd.f32 %v2809, %v4656
    %v4721 = vadd.f32 %v2858, %v4657
    %v4722 = vadd.f32 %v2714, %v4654
    %v4723 = vadd.f32 %v2763, %v4655
    %v4724 = vadd.f32 %v2812, %v4656
    %v4725 = vadd.f32 %v2861, %v4657
    %v4726 = vadd.f32 %v2716, %v4654
    %v4727 = vadd.f32 %v2765, %v4655
    %v4728 = vadd.f32 %v2814, %v4656
    %v4729 = vadd.f32 %v2863, %v4657
    %v4730 = vtanh.pop %v4666
    %v4731 = vtanh.pop %v4667
    %v4732 = vtanh.pop %v4668
    %v4733 = vtanh.pop %v4669
    %v4734 = vtanh.pop %v4670
    %v4735 = vtanh.pop %v4671
    %v4736 = vtanh.pop %v4672
    %v4737 = vtanh.pop %v4673
    %v4738 = vtanh.pop %v4674
    %v4739 = vtanh.pop %v4675
    %v4740 = vtanh.pop %v4676
    %v4741 = vtanh.pop %v4677
    %v4742 = vtanh.pop %v4678
    %v4743 = vtanh.pop %v4679
    %v4744 = vtanh.pop %v4680
    %v4745 = vtanh.pop %v4681
    %v4746 = vtanh.pop %v4682
    %v4747 = vtanh.pop %v4683
    %v4748 = vtanh.pop %v4684
    %v4749 = vtanh.pop %v4685
    %v4750 = vtanh.pop %v4686
    %v4751 = vtanh.pop %v4687
    %v4752 = vtanh.pop %v4688
    %v4753 = vtanh.pop %v4689
    %v4754 = vtanh.pop %v4690
    %v4755 = vtanh.pop %v4691
    %v4756 = vtanh.pop %v4692
    %v4757 = vtanh.pop %v4693
    %v4758 = vtanh.pop %v4694
    %v4759 = vtanh.pop %v4695
    %v4760 = vtanh.pop %v4696
    %v4761 = vtanh.pop %v4697
    %v4762 = vtanh.pop %v4698
    %v4763 = vtanh.pop %v4699
    %v4764 = vtanh.pop %v4700
    %v4765 = vtanh.pop %v4701
    %v4766 = vtanh.pop %v4702
    %v4767 = vtanh.pop %v4703
    %v4768 = vtanh.pop %v4704
    %v4769 = vtanh.pop %v4705
    %v4770 = vtanh.pop %v4706
    %v4771 = vtanh.pop %v4707
    %v4772 = vtanh.pop %v4708
    %v4773 = vtanh.pop %v4709
    %v4774 = vtanh.pop %v4710
    %v4775 = vtanh.pop %v4711
    %v4776 = vtanh.pop %v4712
    %v4777 = vtanh.pop %v4713
    %v4778 = vtanh.pop %v4714
    %v4779 = vtanh.pop %v4715
    %v4780 = vtanh.pop %v4716
    %v4781 = vtanh.pop %v4717
    %v4782 = vtanh.pop %v4718
    %v4783 = vtanh.pop %v4719
    %v4784 = vtanh.pop %v4720
    %v4785 = vtanh.pop %v4721
    %v4786 = vtanh.pop %v4722
    %v4787 = vtanh.pop %v4723
    %v4788 = vtanh.pop %v4724
    %v4789 = vtanh.pop %v4725
    %v4790 = vtanh.pop %v4726
    %v4791 = vtanh.pop %v4727
    %v4792 = vtanh.pop %v4728
    %v4793 = vtanh.pop %v4729
    %v4794 = vmul.f32 %v4730, %v3149
    %v4795 = vmul.f32 %v4731, %v3150
    %v4796 = vmul.f32 %v4732, %v3151
    %v4797 = vmul.f32 %v4733, %v3152
    %v4798 = vmul.f32 %v4734, %v3149
    %v4799 = vmul.f32 %v4735, %v3150
    %v4800 = vmul.f32 %v4736, %v3151
    %v4801 = vmul.f32 %v4737, %v3152
    %v4802 = vmul.f32 %v4738, %v3149
    %v4803 = vmul.f32 %v4739, %v3150
    %v4804 = vmul.f32 %v4740, %v3151
    %v4805 = vmul.f32 %v4741, %v3152
    %v4806 = vmul.f32 %v4742, %v3149
    %v4807 = vmul.f32 %v4743, %v3150
    %v4808 = vmul.f32 %v4744, %v3151
    %v4809 = vmul.f32 %v4745, %v3152
    %v4810 = vmul.f32 %v4746, %v3149
    %v4811 = vmul.f32 %v4747, %v3150
    %v4812 = vmul.f32 %v4748, %v3151
    %v4813 = vmul.f32 %v4749, %v3152
    %v4814 = vmul.f32 %v4750, %v3149
    %v4815 = vmul.f32 %v4751, %v3150
    %v4816 = vmul.f32 %v4752, %v3151
    %v4817 = vmul.f32 %v4753, %v3152
    %v4818 = vmul.f32 %v4754, %v3149
    %v4819 = vmul.f32 %v4755, %v3150
    %v4820 = vmul.f32 %v4756, %v3151
    %v4821 = vmul.f32 %v4757, %v3152
    %v4822 = vmul.f32 %v4758, %v3149
    %v4823 = vmul.f32 %v4759, %v3150
    %v4824 = vmul.f32 %v4760, %v3151
    %v4825 = vmul.f32 %v4761, %v3152
    %v4826 = vmul.f32 %v4762, %v3149
    %v4827 = vmul.f32 %v4763, %v3150
    %v4828 = vmul.f32 %v4764, %v3151
    %v4829 = vmul.f32 %v4765, %v3152
    %v4830 = vmul.f32 %v4766, %v3149
    %v4831 = vmul.f32 %v4767, %v3150
    %v4832 = vmul.f32 %v4768, %v3151
    %v4833 = vmul.f32 %v4769, %v3152
    %v4834 = vmul.f32 %v4770, %v3149
    %v4835 = vmul.f32 %v4771, %v3150
    %v4836 = vmul.f32 %v4772, %v3151
    %v4837 = vmul.f32 %v4773, %v3152
    %v4838 = vmul.f32 %v4774, %v3149
    %v4839 = vmul.f32 %v4775, %v3150
    %v4840 = vmul.f32 %v4776, %v3151
    %v4841 = vmul.f32 %v4777, %v3152
    %v4842 = vmul.f32 %v4778, %v3149
    %v4843 = vmul.f32 %v4779, %v3150
    %v4844 = vmul.f32 %v4780, %v3151
    %v4845 = vmul.f32 %v4781, %v3152
    %v4846 = vmul.f32 %v4782, %v3149
    %v4847 = vmul.f32 %v4783, %v3150
    %v4848 = vmul.f32 %v4784, %v3151
    %v4849 = vmul.f32 %v4785, %v3152
    %v4850 = vmul.f32 %v4786, %v3149
    %v4851 = vmul.f32 %v4787, %v3150
    %v4852 = vmul.f32 %v4788, %v3151
    %v4853 = vmul.f32 %v4789, %v3152
    %v4854 = vmul.f32 %v4790, %v3149
    %v4855 = vmul.f32 %v4791, %v3150
    %v4856 = vmul.f32 %v4792, %v3151
    %v4857 = vmul.f32 %v4793, %v3152
    %v4858 = vadd.f32 %v4794, %v4795
    %v4859 = vadd.f32 %v4858, %v4796
    %v4860 = vadd.f32 %v4859, %v4797
    %4861 = vadd.xlane.f32.xlu0 %v4860
    %v4862 = vpop.xlane.xlu0 %4861
    %v4863 = vadd.f32 %v4798, %v4799
    %v4864 = vadd.f32 %v4863, %v4800
    %v4865 = vadd.f32 %v4864, %v4801
    %4866 = vadd.xlane.f32.xlu0 %v4865
    %v4867 = vpop.xlane.xlu0 %4866
    %v4868 = vadd.f32 %v4802, %v4803
    %v4869 = vadd.f32 %v4868, %v4804
    %v4870 = vadd.f32 %v4869, %v4805
    %4871 = vadd.xlane.f32.xlu0 %v4870
    %v4872 = vpop.xlane.xlu0 %4871
    %v4873 = vadd.f32 %v4806, %v4807
    %v4874 = vadd.f32 %v4873, %v4808
    %v4875 = vadd.f32 %v4874, %v4809
    %4876 = vadd.xlane.f32.xlu0 %v4875
    %v4877 = vpop.xlane.xlu0 %4876
    %v4878 = vadd.f32 %v4810, %v4811
    %v4879 = vadd.f32 %v4878, %v4812
    %v4880 = vadd.f32 %v4879, %v4813
    %4881 = vadd.xlane.f32.xlu0 %v4880
    %v4882 = vpop.xlane.xlu0 %4881
    %v4883 = vadd.f32 %v4814, %v4815
    %v4884 = vadd.f32 %v4883, %v4816
    %v4885 = vadd.f32 %v4884, %v4817
    %4886 = vadd.xlane.f32.xlu0 %v4885
    %v4887 = vpop.xlane.xlu0 %4886
    %v4888 = vadd.f32 %v4818, %v4819
    %v4889 = vadd.f32 %v4888, %v4820
    %v4890 = vadd.f32 %v4889, %v4821
    %4891 = vadd.xlane.f32.xlu0 %v4890
    %v4892 = vpop.xlane.xlu0 %4891
    %v4893 = vadd.f32 %v4822, %v4823
    %v4894 = vadd.f32 %v4893, %v4824
    %v4895 = vadd.f32 %v4894, %v4825
    %4896 = vadd.xlane.f32.xlu0 %v4895
    %v4897 = vpop.xlane.xlu0 %4896
    %v4898 = vadd.f32 %v4826, %v4827
    %v4899 = vadd.f32 %v4898, %v4828
    %v4900 = vadd.f32 %v4899, %v4829
    %4901 = vadd.xlane.f32.xlu0 %v4900
    %v4902 = vpop.xlane.xlu0 %4901
    %v4903 = vadd.f32 %v4830, %v4831
    %v4904 = vadd.f32 %v4903, %v4832
    %v4905 = vadd.f32 %v4904, %v4833
    %4906 = vadd.xlane.f32.xlu0 %v4905
    %v4907 = vpop.xlane.xlu0 %4906
    %v4908 = vadd.f32 %v4834, %v4835
    %v4909 = vadd.f32 %v4908, %v4836
    %v4910 = vadd.f32 %v4909, %v4837
    %4911 = vadd.xlane.f32.xlu0 %v4910
    %v4912 = vpop.xlane.xlu0 %4911
    %v4913 = vadd.f32 %v4838, %v4839
    %v4914 = vadd.f32 %v4913, %v4840
    %v4915 = vadd.f32 %v4914, %v4841
    %4916 = vadd.xlane.f32.xlu0 %v4915
    %v4917 = vpop.xlane.xlu0 %4916
    %v4918 = vadd.f32 %v4842, %v4843
    %v4919 = vadd.f32 %v4918, %v4844
    %v4920 = vadd.f32 %v4919, %v4845
    %4921 = vadd.xlane.f32.xlu0 %v4920
    %v4922 = vpop.xlane.xlu0 %4921
    %v4923 = vadd.f32 %v4846, %v4847
    %v4924 = vadd.f32 %v4923, %v4848
    %v4925 = vadd.f32 %v4924, %v4849
    %4926 = vadd.xlane.f32.xlu0 %v4925
    %v4927 = vpop.xlane.xlu0 %4926
    %v4928 = vadd.f32 %v4850, %v4851
    %v4929 = vadd.f32 %v4928, %v4852
    %v4930 = vadd.f32 %v4929, %v4853
    %4931 = vadd.xlane.f32.xlu0 %v4930
    %v4932 = vpop.xlane.xlu0 %4931
    %v4933 = vadd.f32 %v4854, %v4855
    %v4934 = vadd.f32 %v4933, %v4856
    %v4935 = vadd.f32 %v4934, %v4857
    %4936 = vadd.xlane.f32.xlu0 %v4935
    %v4937 = vpop.xlane.xlu0 %4936
    %v4938 = vadd.f32 %v4862, %v3301
    %v4939 = vadd.f32 %v4867, %v3301
    %v4940 = vadd.f32 %v4872, %v3301
    %v4941 = vadd.f32 %v4877, %v3301
    %v4942 = vadd.f32 %v4882, %v3301
    %v4943 = vadd.f32 %v4887, %v3301
    %v4944 = vadd.f32 %v4892, %v3301
    %v4945 = vadd.f32 %v4897, %v3301
    %v4946 = vadd.f32 %v4902, %v3301
    %v4947 = vadd.f32 %v4907, %v3301
    %v4948 = vadd.f32 %v4912, %v3301
    %v4949 = vadd.f32 %v4917, %v3301
    %v4950 = vadd.f32 %v4922, %v3301
    %v4951 = vadd.f32 %v4927, %v3301
    %v4952 = vadd.f32 %v4932, %v3301
    %v4953 = vadd.f32 %v4937, %v3301
    %v4970 = vperm.slane %v4938, %v3335
    %v4971 = vperm.slane %v4939, %v3337
    %v4972 = vsel %vm3339, %v4971, %v4970
    %v4973 = vperm.slane %v4940, %v3341
    %v4974 = vsel %vm3343, %v4973, %v4972
    %v4975 = vperm.slane %v4941, %v3345
    %v4976 = vsel %vm3347, %v4975, %v4974
    %v4977 = vperm.slane %v4942, %v3349
    %v4978 = vsel %vm3351, %v4977, %v4976
    %v4979 = vperm.slane %v4943, %v3353
    %v4980 = vsel %vm3355, %v4979, %v4978
    %v4981 = vperm.slane %v4944, %v3357
    %v4982 = vsel %vm3359, %v4981, %v4980
    %v4983 = vperm.slane %v4945, %v3361
    %v4984 = vsel %vm3363, %v4983, %v4982
    %v4985 = vperm.slane %v4946, %v3335
    %v4986 = vperm.slane %v4947, %v3337
    %v4987 = vsel %vm3339, %v4986, %v4985
    %v4988 = vperm.slane %v4948, %v3341
    %v4989 = vsel %vm3343, %v4988, %v4987
    %v4990 = vperm.slane %v4949, %v3345
    %v4991 = vsel %vm3347, %v4990, %v4989
    %v4992 = vperm.slane %v4950, %v3349
    %v4993 = vsel %vm3351, %v4992, %v4991
    %v4994 = vperm.slane %v4951, %v3353
    %v4995 = vsel %vm3355, %v4994, %v4993
    %v4996 = vperm.slane %v4952, %v3357
    %v4997 = vsel %vm3359, %v4996, %v4995
    %v4998 = vperm.slane %v4953, %v3361
    %v4999 = vsel %vm3363, %v4998, %v4997
    %v5000 = vsel %vm2997, %v4999, %v4984
    %v5002 = vsel %vm3382, %v5000, -inf
    %5003 = vmax.xlane.f32.xlu0 %v5002
    %v5004 = vpop.xlane.xlu0 %5003
    %v5006 = vperm.slane %v5004, 0
    %v5007 = vperm.slane %v5004, 1
    %v5010 = vsub.f32 %v4938, %v5006
    %v5011 = vsub.f32 %v4939, %v5006
    %v5012 = vsub.f32 %v4940, %v5006
    %v5013 = vsub.f32 %v4941, %v5006
    %v5014 = vsub.f32 %v4942, %v5006
    %v5015 = vsub.f32 %v4943, %v5006
    %v5016 = vsub.f32 %v4944, %v5006
    %v5017 = vsub.f32 %v4945, %v5006
    %v5018 = vsub.f32 %v4946, %v5007
    %v5019 = vsub.f32 %v4947, %v5007
    %v5020 = vsub.f32 %v4948, %v5007
    %v5021 = vsub.f32 %v4949, %v5007
    %v5022 = vsub.f32 %v4950, %v5007
    %v5023 = vsub.f32 %v4951, %v5007
    %v5024 = vsub.f32 %v4952, %v5007
    %v5025 = vsub.f32 %v4953, %v5007
    %v5026 = vmul.f32 %v5010, 1.442695
    %v5027 = vpow.pop %v5026
    %v5028 = vmul.f32 %v5011, 1.442695
    %v5029 = vpow.pop %v5028
    %v5030 = vmul.f32 %v5012, 1.442695
    %v5031 = vpow.pop %v5030
    %v5032 = vmul.f32 %v5013, 1.442695
    %v5033 = vpow.pop %v5032
    %v5034 = vmul.f32 %v5014, 1.442695
    %v5035 = vpow.pop %v5034
    %v5036 = vmul.f32 %v5015, 1.442695
    %v5037 = vpow.pop %v5036
    %v5038 = vmul.f32 %v5016, 1.442695
    %v5039 = vpow.pop %v5038
    %v5040 = vmul.f32 %v5017, 1.442695
    %v5041 = vpow.pop %v5040
    %v5042 = vmul.f32 %v5018, 1.442695
    %v5043 = vpow.pop %v5042
    %v5044 = vmul.f32 %v5019, 1.442695
    %v5045 = vpow.pop %v5044
    %v5046 = vmul.f32 %v5020, 1.442695
    %v5047 = vpow.pop %v5046
    %v5048 = vmul.f32 %v5021, 1.442695
    %v5049 = vpow.pop %v5048
    %v5050 = vmul.f32 %v5022, 1.442695
    %v5051 = vpow.pop %v5050
    %v5052 = vmul.f32 %v5023, 1.442695
    %v5053 = vpow.pop %v5052
    %v5054 = vmul.f32 %v5024, 1.442695
    %v5055 = vpow.pop %v5054
    %v5056 = vmul.f32 %v5025, 1.442695
    %v5057 = vpow.pop %v5056
    %5074 = vset.pattern.permute.xlu0 0
    %5075 = vperm.xlu0 %5074, %v5027
    %v5076 = vpop.permute.xlu0 %5075
    %5077 = vset.pattern.permute.xlu0 0
    %5078 = vperm.xlu0 %5077, %v5029
    %v5079 = vpop.permute.xlu0 %5078
    %5080 = vset.pattern.permute.xlu0 0
    %5081 = vperm.xlu0 %5080, %v5031
    %v5082 = vpop.permute.xlu0 %5081
    %5083 = vset.pattern.permute.xlu0 0
    %5084 = vperm.xlu0 %5083, %v5033
    %v5085 = vpop.permute.xlu0 %5084
    %5086 = vset.pattern.permute.xlu0 0
    %5087 = vperm.xlu0 %5086, %v5035
    %v5088 = vpop.permute.xlu0 %5087
    %5089 = vset.pattern.permute.xlu0 0
    %5090 = vperm.xlu0 %5089, %v5037
    %v5091 = vpop.permute.xlu0 %5090
    %5092 = vset.pattern.permute.xlu0 0
    %5093 = vperm.xlu0 %5092, %v5039
    %v5094 = vpop.permute.xlu0 %5093
    %5095 = vset.pattern.permute.xlu0 0
    %5096 = vperm.xlu0 %5095, %v5041
    %v5097 = vpop.permute.xlu0 %5096
    %5098 = vset.pattern.permute.xlu0 0
    %5099 = vperm.xlu0 %5098, %v5043
    %v5100 = vpop.permute.xlu0 %5099
    %5101 = vset.pattern.permute.xlu0 0
    %5102 = vperm.xlu0 %5101, %v5045
    %v5103 = vpop.permute.xlu0 %5102
    %5104 = vset.pattern.permute.xlu0 0
    %5105 = vperm.xlu0 %5104, %v5047
    %v5106 = vpop.permute.xlu0 %5105
    %5107 = vset.pattern.permute.xlu0 0
    %5108 = vperm.xlu0 %5107, %v5049
    %v5109 = vpop.permute.xlu0 %5108
    %5110 = vset.pattern.permute.xlu0 0
    %5111 = vperm.xlu0 %5110, %v5051
    %v5112 = vpop.permute.xlu0 %5111
    %5113 = vset.pattern.permute.xlu0 0
    %5114 = vperm.xlu0 %5113, %v5053
    %v5115 = vpop.permute.xlu0 %5114
    %5116 = vset.pattern.permute.xlu0 0
    %5117 = vperm.xlu0 %5116, %v5055
    %v5118 = vpop.permute.xlu0 %5117
    %5119 = vset.pattern.permute.xlu0 0
    %5120 = vperm.xlu0 %5119, %v5057
    %v5121 = vpop.permute.xlu0 %5120
    %v5122 = vperm.slane %v5076, %v3335
    %v5123 = vperm.slane %v5079, %v3337
    %v5124 = vsel %vm3339, %v5123, %v5122
    %v5125 = vperm.slane %v5082, %v3341
    %v5126 = vsel %vm3343, %v5125, %v5124
    %v5127 = vperm.slane %v5085, %v3345
    %v5128 = vsel %vm3347, %v5127, %v5126
    %v5129 = vperm.slane %v5088, %v3349
    %v5130 = vsel %vm3351, %v5129, %v5128
    %v5131 = vperm.slane %v5091, %v3353
    %v5132 = vsel %vm3355, %v5131, %v5130
    %v5133 = vperm.slane %v5094, %v3357
    %v5134 = vsel %vm3359, %v5133, %v5132
    %v5135 = vperm.slane %v5097, %v3361
    %v5136 = vsel %vm3363, %v5135, %v5134
    %v5137 = vperm.slane %v5100, %v3335
    %v5138 = vperm.slane %v5103, %v3337
    %v5139 = vsel %vm3339, %v5138, %v5137
    %v5140 = vperm.slane %v5106, %v3341
    %v5141 = vsel %vm3343, %v5140, %v5139
    %v5142 = vperm.slane %v5109, %v3345
    %v5143 = vsel %vm3347, %v5142, %v5141
    %v5144 = vperm.slane %v5112, %v3349
    %v5145 = vsel %vm3351, %v5144, %v5143
    %v5146 = vperm.slane %v5115, %v3353
    %v5147 = vsel %vm3355, %v5146, %v5145
    %v5148 = vperm.slane %v5118, %v3357
    %v5149 = vsel %vm3359, %v5148, %v5147
    %v5150 = vperm.slane %v5121, %v3361
    %v5151 = vsel %vm3363, %v5150, %v5149
    %v5152 = vsel %vm2997, %v5151, %v5136
    %v5154 = vsel %vm3382, %v5152, 0.0
    %5155 = vadd.xlane.f32.xlu0 %v5154
    %v5156 = vpop.xlane.xlu0 %5155
    %v5157 = vrcp.pop %v5156
    %v5159 = vperm.slane %v5157, 0
    %v5160 = vperm.slane %v5157, 1
    %v5163 = vmul.f32 %v5027, %v5159
    %v5164 = vmul.f32 %v5029, %v5159
    %v5165 = vmul.f32 %v5031, %v5159
    %v5166 = vmul.f32 %v5033, %v5159
    %v5167 = vmul.f32 %v5035, %v5159
    %v5168 = vmul.f32 %v5037, %v5159
    %v5169 = vmul.f32 %v5039, %v5159
    %v5170 = vmul.f32 %v5041, %v5159
    %v5171 = vmul.f32 %v5043, %v5160
    %v5172 = vmul.f32 %v5045, %v5160
    %v5173 = vmul.f32 %v5047, %v5160
    %v5174 = vmul.f32 %v5049, %v5160
    %v5175 = vmul.f32 %v5051, %v5160
    %v5176 = vmul.f32 %v5053, %v5160
    %v5177 = vmul.f32 %v5055, %v5160
    %v5178 = vmul.f32 %v5057, %v5160
    %5187 = vset.pattern.permute.xlu0 0
    %5188 = vperm.xlu0 %5187, %v5163
    %v5189 = vpop.permute.xlu0 %5188
    %5190 = vset.pattern.permute.xlu0 0
    %5191 = vperm.xlu0 %5190, %v5164
    %v5192 = vpop.permute.xlu0 %5191
    %5193 = vset.pattern.permute.xlu0 0
    %5194 = vperm.xlu0 %5193, %v5165
    %v5195 = vpop.permute.xlu0 %5194
    %5196 = vset.pattern.permute.xlu0 0
    %5197 = vperm.xlu0 %5196, %v5166
    %v5198 = vpop.permute.xlu0 %5197
    %5199 = vset.pattern.permute.xlu0 0
    %5200 = vperm.xlu0 %5199, %v5167
    %v5201 = vpop.permute.xlu0 %5200
    %5202 = vset.pattern.permute.xlu0 0
    %5203 = vperm.xlu0 %5202, %v5168
    %v5204 = vpop.permute.xlu0 %5203
    %5205 = vset.pattern.permute.xlu0 0
    %5206 = vperm.xlu0 %5205, %v5169
    %v5207 = vpop.permute.xlu0 %5206
    %5208 = vset.pattern.permute.xlu0 0
    %5209 = vperm.xlu0 %5208, %v5170
    %v5210 = vpop.permute.xlu0 %5209
    %v5211 = vperm.slane %v5189, %v3335
    %v5212 = vperm.slane %v5192, %v3337
    %v5213 = vsel %vm3339, %v5212, %v5211
    %v5214 = vperm.slane %v5195, %v3341
    %v5215 = vsel %vm3343, %v5214, %v5213
    %v5216 = vperm.slane %v5198, %v3345
    %v5217 = vsel %vm3347, %v5216, %v5215
    %v5218 = vperm.slane %v5201, %v3349
    %v5219 = vsel %vm3351, %v5218, %v5217
    %v5220 = vperm.slane %v5204, %v3353
    %v5221 = vsel %vm3355, %v5220, %v5219
    %v5222 = vperm.slane %v5207, %v3357
    %v5223 = vsel %vm3359, %v5222, %v5221
    %v5224 = vperm.slane %v5210, %v3361
    %v5225 = vsel %vm3363, %v5224, %v5223
    %v5226 = vsel %vm3607, %v5225, 0
    %5228 = vmatpush.msra.mxu0 0.0
    %5229 = vmatpush.msra.mxu0 0.0
    %5230 = vmatpush.msra.mxu0 0.0
    %5231 = vmatpush.msra.mxu0 0.0
    %5232 = vmatpush.msra.mxu0 0.0
    %5233 = vmatpush.msra.mxu0 0.0
    %5234 = vmatpush.msra.mxu0 0.0
    %5235 = vmatpush.msra.mxu0 0.0
    %5236 = vmatpush.msra.mxu0 %v1897
    %5237 = vmatpush.msra.mxu0 %v1896
    %5238 = vmatpush.msra.mxu0 %v1895
    %5239 = vmatpush.msra.mxu0 %v1894
    %5240 = vmatpush.msra.mxu0 %v1893
    %5241 = vmatpush.msra.mxu0 %v1892
    %5242 = vmatpush.msra.mxu0 %v1891
    %5243 = vmatpush.msra.mxu0 %v1890
    %5244 = vmatmul.f32.gmra.mxu0 %v5226
    %v5245 = vpop.f32.mrf.mxu0
    %v5246 = vadd.f32 0.0, %v5245
    %5247 = vdwg.mxu0
    %5256 = vset.pattern.permute.xlu0 0
    %5257 = vperm.xlu0 %5256, %v5171
    %v5258 = vpop.permute.xlu0 %5257
    %5259 = vset.pattern.permute.xlu0 0
    %5260 = vperm.xlu0 %5259, %v5172
    %v5261 = vpop.permute.xlu0 %5260
    %5262 = vset.pattern.permute.xlu0 0
    %5263 = vperm.xlu0 %5262, %v5173
    %v5264 = vpop.permute.xlu0 %5263
    %5265 = vset.pattern.permute.xlu0 0
    %5266 = vperm.xlu0 %5265, %v5174
    %v5267 = vpop.permute.xlu0 %5266
    %5268 = vset.pattern.permute.xlu0 0
    %5269 = vperm.xlu0 %5268, %v5175
    %v5270 = vpop.permute.xlu0 %5269
    %5271 = vset.pattern.permute.xlu0 0
    %5272 = vperm.xlu0 %5271, %v5176
    %v5273 = vpop.permute.xlu0 %5272
    %5274 = vset.pattern.permute.xlu0 0
    %5275 = vperm.xlu0 %5274, %v5177
    %v5276 = vpop.permute.xlu0 %5275
    %5277 = vset.pattern.permute.xlu0 0
    %5278 = vperm.xlu0 %5277, %v5178
    %v5279 = vpop.permute.xlu0 %5278
    %v5280 = vperm.slane %v5258, %v3335
    %v5281 = vperm.slane %v5261, %v3337
    %v5282 = vsel %vm3339, %v5281, %v5280
    %v5283 = vperm.slane %v5264, %v3341
    %v5284 = vsel %vm3343, %v5283, %v5282
    %v5285 = vperm.slane %v5267, %v3345
    %v5286 = vsel %vm3347, %v5285, %v5284
    %v5287 = vperm.slane %v5270, %v3349
    %v5288 = vsel %vm3351, %v5287, %v5286
    %v5289 = vperm.slane %v5273, %v3353
    %v5290 = vsel %vm3355, %v5289, %v5288
    %v5291 = vperm.slane %v5276, %v3357
    %v5292 = vsel %vm3359, %v5291, %v5290
    %v5293 = vperm.slane %v5279, %v3361
    %v5294 = vsel %vm3363, %v5293, %v5292
    %v5295 = vsel %vm3607, %v5294, 0
    %5297 = vmatpush.msra.mxu0 0.0
    %5298 = vmatpush.msra.mxu0 0.0
    %5299 = vmatpush.msra.mxu0 0.0
    %5300 = vmatpush.msra.mxu0 0.0
    %5301 = vmatpush.msra.mxu0 0.0
    %5302 = vmatpush.msra.mxu0 0.0
    %5303 = vmatpush.msra.mxu0 0.0
    %5304 = vmatpush.msra.mxu0 0.0
    %5305 = vmatpush.msra.mxu0 %v1905
    %5306 = vmatpush.msra.mxu0 %v1904
    %5307 = vmatpush.msra.mxu0 %v1903
    %5308 = vmatpush.msra.mxu0 %v1902
    %5309 = vmatpush.msra.mxu0 %v1901
    %5310 = vmatpush.msra.mxu0 %v1900
    %5311 = vmatpush.msra.mxu0 %v1899
    %5312 = vmatpush.msra.mxu0 %v1898
    %5313 = vmatmul.f32.gmra.mxu0 %v5295
    %v5314 = vpop.f32.mrf.mxu0
    %v5315 = vadd.f32 0.0, %v5314
    %5316 = vdwg.mxu0
    %v5317 = vadd.f32 %v5246, %v4512
    %v5318 = vadd.f32 %v5315, %v4513
    %v5319 = vpack.c.bf16 %v5317, %v5317
    %v5320 = vpack.c.bf16 %v5318, %v5318
    %v5321 = vld [vmem:[%s17] sm:$0xff]
    %v5322 = vld [vmem:[%s17 + $0x8] sm:$0xff]
    %v5323 = vld [vmem:[%s17 + $0x10] sm:$0xff]
    %v5324 = vld [vmem:[%s17 + $0x18] sm:$0xff]
    %v5325 = vld [vmem:[%s17 + $0x20] sm:$0xff]
    %v5326 = vld [vmem:[%s17 + $0x28] sm:$0xff]
    %v5327 = vld [vmem:[%s17 + $0x30] sm:$0xff]
    %v5328 = vld [vmem:[%s17 + $0x38] sm:$0xff]
    %v5329 = vld [vmem:[%s17 + $0x40] sm:$0xff]
    %v5330 = vld [vmem:[%s17 + $0x48] sm:$0xff]
    %v5331 = vld [vmem:[%s17 + $0x50] sm:$0xff]
    %v5332 = vld [vmem:[%s17 + $0x58] sm:$0xff]
    %v5333 = vld [vmem:[%s17 + $0x60] sm:$0xff]
    %v5334 = vld [vmem:[%s17 + $0x68] sm:$0xff]
    %v5335 = vld [vmem:[%s17 + $0x70] sm:$0xff]
    %v5336 = vld [vmem:[%s17 + $0x78] sm:$0xff]
    %v5337 = vld [vmem:[%s18] sm:$0xff]
    %v5339 = vperm.slane %v5337, 0
    %v5340 = vperm.slane %v5337, 1
    %v5341 = vperm.slane %v5337, 2
    %v5342 = vperm.slane %v5337, 3
    %v5343 = vperm.slane %v5337, 4
    %v5344 = vperm.slane %v5337, 5
    %v5345 = vperm.slane %v5337, 6
    %v5346 = vperm.slane %v5337, 7
    %v5357 = vunpack.c.l.b16 %v5319
    %v5358 = vunpack.c.l.b16 %v5320
    %v5359 = vrot.slane %v5358, 7
    %v5360 = vsel %vm2997, %v5359, %v5357
    %v5361 = vpack.c.b16 %v5360, %v5360
    %v5378 = vunpack.c.l.b16 %v5321
    %v5379 = vunpack.c.h.b16 %v5321
    %v5380 = vunpack.c.l.b16 %v5322
    %v5381 = vunpack.c.h.b16 %v5322
    %v5382 = vunpack.c.l.b16 %v5323
    %v5383 = vunpack.c.h.b16 %v5323
    %v5384 = vunpack.c.l.b16 %v5324
    %v5385 = vunpack.c.h.b16 %v5324
    %v5386 = vunpack.c.l.b16 %v5325
    %v5387 = vunpack.c.h.b16 %v5325
    %v5388 = vunpack.c.l.b16 %v5326
    %v5389 = vunpack.c.h.b16 %v5326
    %v5390 = vunpack.c.l.b16 %v5327
    %v5391 = vunpack.c.h.b16 %v5327
    %v5392 = vunpack.c.l.b16 %v5328
    %v5393 = vunpack.c.h.b16 %v5328
    %v5394 = vunpack.c.l.b16 %v5329
    %v5395 = vunpack.c.h.b16 %v5329
    %v5396 = vunpack.c.l.b16 %v5330
    %v5397 = vunpack.c.h.b16 %v5330
    %v5398 = vunpack.c.l.b16 %v5331
    %v5399 = vunpack.c.h.b16 %v5331
    %v5400 = vunpack.c.l.b16 %v5332
    %v5401 = vunpack.c.h.b16 %v5332
    %v5402 = vunpack.c.l.b16 %v5333
    %v5403 = vunpack.c.h.b16 %v5333
    %v5404 = vunpack.c.l.b16 %v5334
    %v5405 = vunpack.c.h.b16 %v5334
    %v5406 = vunpack.c.l.b16 %v5335
    %v5407 = vunpack.c.h.b16 %v5335
    %v5408 = vunpack.c.l.b16 %v5336
    %v5409 = vunpack.c.h.b16 %v5336
    %v5410 = vpack.c.b16 %v5386, %v5378
    %v5411 = vpack.c.b16 %v5387, %v5379
    %v5412 = vpack.c.b16 %v5388, %v5380
    %v5413 = vpack.c.b16 %v5389, %v5381
    %v5414 = vpack.c.b16 %v5390, %v5382
    %v5415 = vpack.c.b16 %v5391, %v5383
    %v5416 = vpack.c.b16 %v5392, %v5384
    %v5417 = vpack.c.b16 %v5393, %v5385
    %v5418 = vpack.c.b16 %v5402, %v5394
    %v5419 = vpack.c.b16 %v5403, %v5395
    %v5420 = vpack.c.b16 %v5404, %v5396
    %v5421 = vpack.c.b16 %v5405, %v5397
    %v5422 = vpack.c.b16 %v5406, %v5398
    %v5423 = vpack.c.b16 %v5407, %v5399
    %v5424 = vpack.c.b16 %v5408, %v5400
    %v5425 = vpack.c.b16 %v5409, %v5401
    %v5443 = vsel %vm936, %v5361, 0
    %5445 = vmatpush.bf16.msra.mxu0 0
    %5446 = vmatpush.bf16.msra.mxu0 0
    %5447 = vmatpush.bf16.msra.mxu0 0
    %5448 = vmatpush.bf16.msra.mxu0 0
    %5449 = vmatpush.bf16.msra.mxu0 0
    %5450 = vmatpush.bf16.msra.mxu0 0
    %5451 = vmatpush.bf16.msra.mxu0 %v5418
    %5452 = vmatpush.bf16.msra.mxu0 %v5410
    %5453 = vmatmul.bf16.gmra.mxu0 %v5443
    %v5454 = vpop.f32.mrf.mxu0
    %v5455 = vadd.f32 %v5339, %v5454
    %v5456 = vpop.f32.mrf.mxu0
    %5457 = vdwg.mxu0
    %5458 = vmatpush.bf16.msra.mxu0 0
    %5459 = vmatpush.bf16.msra.mxu0 0
    %5460 = vmatpush.bf16.msra.mxu0 0
    %5461 = vmatpush.bf16.msra.mxu0 0
    %5462 = vmatpush.bf16.msra.mxu0 0
    %5463 = vmatpush.bf16.msra.mxu0 0
    %5464 = vmatpush.bf16.msra.mxu0 %v5419
    %5465 = vmatpush.bf16.msra.mxu0 %v5411
    %5466 = vmatmul.bf16.gmra.mxu0 %v5443
    %v5467 = vpop.f32.mrf.mxu0
    %v5468 = vadd.f32 %v5340, %v5467
    %v5469 = vpop.f32.mrf.mxu0
    %5470 = vdwg.mxu0
    %5471 = vmatpush.bf16.msra.mxu0 0
    %5472 = vmatpush.bf16.msra.mxu0 0
    %5473 = vmatpush.bf16.msra.mxu0 0
    %5474 = vmatpush.bf16.msra.mxu0 0
    %5475 = vmatpush.bf16.msra.mxu0 0
    %5476 = vmatpush.bf16.msra.mxu0 0
    %5477 = vmatpush.bf16.msra.mxu0 %v5420
    %5478 = vmatpush.bf16.msra.mxu0 %v5412
    %5479 = vmatmul.bf16.gmra.mxu0 %v5443
    %v5480 = vpop.f32.mrf.mxu0
    %v5481 = vadd.f32 %v5341, %v5480
    %v5482 = vpop.f32.mrf.mxu0
    %5483 = vdwg.mxu0
    %5484 = vmatpush.bf16.msra.mxu0 0
    %5485 = vmatpush.bf16.msra.mxu0 0
    %5486 = vmatpush.bf16.msra.mxu0 0
    %5487 = vmatpush.bf16.msra.mxu0 0
    %5488 = vmatpush.bf16.msra.mxu0 0
    %5489 = vmatpush.bf16.msra.mxu0 0
    %5490 = vmatpush.bf16.msra.mxu0 %v5421
    %5491 = vmatpush.bf16.msra.mxu0 %v5413
    %5492 = vmatmul.bf16.gmra.mxu0 %v5443
    %v5493 = vpop.f32.mrf.mxu0
    %v5494 = vadd.f32 %v5342, %v5493
    %v5495 = vpop.f32.mrf.mxu0
    %5496 = vdwg.mxu0
    %5497 = vmatpush.bf16.msra.mxu0 0
    %5498 = vmatpush.bf16.msra.mxu0 0
    %5499 = vmatpush.bf16.msra.mxu0 0
    %5500 = vmatpush.bf16.msra.mxu0 0
    %5501 = vmatpush.bf16.msra.mxu0 0
    %5502 = vmatpush.bf16.msra.mxu0 0
    %5503 = vmatpush.bf16.msra.mxu0 %v5422
    %5504 = vmatpush.bf16.msra.mxu0 %v5414
    %5505 = vmatmul.bf16.gmra.mxu0 %v5443
    %v5506 = vpop.f32.mrf.mxu0
    %v5507 = vadd.f32 %v5343, %v5506
    %v5508 = vpop.f32.mrf.mxu0
    %5509 = vdwg.mxu0
    %5510 = vmatpush.bf16.msra.mxu0 0
    %5511 = vmatpush.bf16.msra.mxu0 0
    %5512 = vmatpush.bf16.msra.mxu0 0
    %5513 = vmatpush.bf16.msra.mxu0 0
    %5514 = vmatpush.bf16.msra.mxu0 0
    %5515 = vmatpush.bf16.msra.mxu0 0
    %5516 = vmatpush.bf16.msra.mxu0 %v5423
    %5517 = vmatpush.bf16.msra.mxu0 %v5415
    %5518 = vmatmul.bf16.gmra.mxu0 %v5443
    %v5519 = vpop.f32.mrf.mxu0
    %v5520 = vadd.f32 %v5344, %v5519
    %v5521 = vpop.f32.mrf.mxu0
    %5522 = vdwg.mxu0
    %5523 = vmatpush.bf16.msra.mxu0 0
    %5524 = vmatpush.bf16.msra.mxu0 0
    %5525 = vmatpush.bf16.msra.mxu0 0
    %5526 = vmatpush.bf16.msra.mxu0 0
    %5527 = vmatpush.bf16.msra.mxu0 0
    %5528 = vmatpush.bf16.msra.mxu0 0
    %5529 = vmatpush.bf16.msra.mxu0 %v5424
    %5530 = vmatpush.bf16.msra.mxu0 %v5416
    %5531 = vmatmul.bf16.gmra.mxu0 %v5443
    %v5532 = vpop.f32.mrf.mxu0
    %v5533 = vadd.f32 %v5345, %v5532
    %v5534 = vpop.f32.mrf.mxu0
    %5535 = vdwg.mxu0
    %5536 = vmatpush.bf16.msra.mxu0 0
    %5537 = vmatpush.bf16.msra.mxu0 0
    %5538 = vmatpush.bf16.msra.mxu0 0
    %5539 = vmatpush.bf16.msra.mxu0 0
    %5540 = vmatpush.bf16.msra.mxu0 0
    %5541 = vmatpush.bf16.msra.mxu0 0
    %5542 = vmatpush.bf16.msra.mxu0 %v5425
    %5543 = vmatpush.bf16.msra.mxu0 %v5417
    %5544 = vmatmul.bf16.gmra.mxu0 %v5443
    %v5545 = vpop.f32.mrf.mxu0
    %v5546 = vadd.f32 %v5346, %v5545
    %v5547 = vpop.f32.mrf.mxu0
    %5548 = vdwg.mxu0
    %v5549 = vmax.f32 %v5455, 0.0
    %v5550 = vmax.f32 %v5468, 0.0
    %v5551 = vmax.f32 %v5481, 0.0
    %v5552 = vmax.f32 %v5494, 0.0
    %v5553 = vmax.f32 %v5507, 0.0
    %v5554 = vmax.f32 %v5520, 0.0
    %v5555 = vmax.f32 %v5533, 0.0
    %v5556 = vmax.f32 %v5546, 0.0
    %v5557 = vld [vmem:[%s19] sm:$0xff]
    %v5558 = vld [vmem:[%s19 + $0x8] sm:$0xff]
    %v5559 = vld [vmem:[%s19 + $0x10] sm:$0xff]
    %v5560 = vld [vmem:[%s19 + $0x18] sm:$0xff]
    %v5561 = vld [vmem:[%s19 + $0x20] sm:$0xff]
    %v5562 = vld [vmem:[%s19 + $0x28] sm:$0xff]
    %v5563 = vld [vmem:[%s19 + $0x30] sm:$0xff]
    %v5564 = vld [vmem:[%s19 + $0x38] sm:$0xff]
    %v5565 = vld [vmem:[%s19 + $0x40] sm:$0xff]
    %v5566 = vld [vmem:[%s19 + $0x48] sm:$0xff]
    %v5567 = vld [vmem:[%s19 + $0x50] sm:$0xff]
    %v5568 = vld [vmem:[%s19 + $0x58] sm:$0xff]
    %v5569 = vld [vmem:[%s19 + $0x60] sm:$0xff]
    %v5570 = vld [vmem:[%s19 + $0x68] sm:$0xff]
    %v5571 = vld [vmem:[%s19 + $0x70] sm:$0xff]
    %v5572 = vld [vmem:[%s19 + $0x78] sm:$0xff]
    %v5573 = vld [vmem:[%s19 + $0x80] sm:$0xff]
    %v5574 = vld [vmem:[%s19 + $0x88] sm:$0xff]
    %v5575 = vld [vmem:[%s19 + $0x90] sm:$0xff]
    %v5576 = vld [vmem:[%s19 + $0x98] sm:$0xff]
    %v5577 = vld [vmem:[%s19 + $0xa0] sm:$0xff]
    %v5578 = vld [vmem:[%s19 + $0xa8] sm:$0xff]
    %v5579 = vld [vmem:[%s19 + $0xb0] sm:$0xff]
    %v5580 = vld [vmem:[%s19 + $0xb8] sm:$0xff]
    %v5581 = vld [vmem:[%s19 + $0xc0] sm:$0xff]
    %v5582 = vld [vmem:[%s19 + $0xc8] sm:$0xff]
    %v5583 = vld [vmem:[%s19 + $0xd0] sm:$0xff]
    %v5584 = vld [vmem:[%s19 + $0xd8] sm:$0xff]
    %v5585 = vld [vmem:[%s19 + $0xe0] sm:$0xff]
    %v5586 = vld [vmem:[%s19 + $0xe8] sm:$0xff]
    %v5587 = vld [vmem:[%s19 + $0xf0] sm:$0xff]
    %v5588 = vld [vmem:[%s19 + $0xf8] sm:$0xff]
    %v5589 = vld [vmem:[%s19 + $0x100] sm:$0xff]
    %v5590 = vld [vmem:[%s19 + $0x108] sm:$0xff]
    %v5591 = vld [vmem:[%s19 + $0x110] sm:$0xff]
    %v5592 = vld [vmem:[%s19 + $0x118] sm:$0xff]
    %v5593 = vld [vmem:[%s19 + $0x120] sm:$0xff]
    %v5594 = vld [vmem:[%s19 + $0x128] sm:$0xff]
    %v5595 = vld [vmem:[%s19 + $0x130] sm:$0xff]
    %v5596 = vld [vmem:[%s19 + $0x138] sm:$0xff]
    %v5597 = vld [vmem:[%s19 + $0x140] sm:$0xff]
    %v5598 = vld [vmem:[%s19 + $0x148] sm:$0xff]
    %v5599 = vld [vmem:[%s19 + $0x150] sm:$0xff]
    %v5600 = vld [vmem:[%s19 + $0x158] sm:$0xff]
    %v5601 = vld [vmem:[%s19 + $0x160] sm:$0xff]
    %v5602 = vld [vmem:[%s19 + $0x168] sm:$0xff]
    %v5603 = vld [vmem:[%s19 + $0x170] sm:$0xff]
    %v5604 = vld [vmem:[%s19 + $0x178] sm:$0xff]
    %v5605 = vld [vmem:[%s19 + $0x180] sm:$0xff]
    %v5606 = vld [vmem:[%s19 + $0x188] sm:$0xff]
    %v5607 = vld [vmem:[%s19 + $0x190] sm:$0xff]
    %v5608 = vld [vmem:[%s19 + $0x198] sm:$0xff]
    %v5609 = vld [vmem:[%s19 + $0x1a0] sm:$0xff]
    %v5610 = vld [vmem:[%s19 + $0x1a8] sm:$0xff]
    %v5611 = vld [vmem:[%s19 + $0x1b0] sm:$0xff]
    %v5612 = vld [vmem:[%s19 + $0x1b8] sm:$0xff]
    %v5613 = vld [vmem:[%s19 + $0x1c0] sm:$0xff]
    %v5614 = vld [vmem:[%s19 + $0x1c8] sm:$0xff]
    %v5615 = vld [vmem:[%s19 + $0x1d0] sm:$0xff]
    %v5616 = vld [vmem:[%s19 + $0x1d8] sm:$0xff]
    %v5617 = vld [vmem:[%s19 + $0x1e0] sm:$0xff]
    %v5618 = vld [vmem:[%s19 + $0x1e8] sm:$0xff]
    %v5619 = vld [vmem:[%s19 + $0x1f0] sm:$0xff]
    %v5620 = vld [vmem:[%s19 + $0x1f8] sm:$0xff]
    %v5621 = vld [vmem:[%s19 + $0x200] sm:$0xff]
    %v5622 = vld [vmem:[%s19 + $0x208] sm:$0xff]
    %v5623 = vld [vmem:[%s19 + $0x210] sm:$0xff]
    %v5624 = vld [vmem:[%s19 + $0x218] sm:$0xff]
    %v5625 = vld [vmem:[%s19 + $0x220] sm:$0xff]
    %v5626 = vld [vmem:[%s19 + $0x228] sm:$0xff]
    %v5627 = vld [vmem:[%s19 + $0x230] sm:$0xff]
    %v5628 = vld [vmem:[%s19 + $0x238] sm:$0xff]
    %v5629 = vld [vmem:[%s19 + $0x240] sm:$0xff]
    %v5630 = vld [vmem:[%s19 + $0x248] sm:$0xff]
    %v5631 = vld [vmem:[%s19 + $0x250] sm:$0xff]
    %v5632 = vld [vmem:[%s19 + $0x258] sm:$0xff]
    %v5633 = vld [vmem:[%s19 + $0x260] sm:$0xff]
    %v5634 = vld [vmem:[%s19 + $0x268] sm:$0xff]
    %v5635 = vld [vmem:[%s19 + $0x270] sm:$0xff]
    %v5636 = vld [vmem:[%s19 + $0x278] sm:$0xff]
    %v5637 = vld [vmem:[%s19 + $0x280] sm:$0xff]
    %v5638 = vld [vmem:[%s19 + $0x288] sm:$0xff]
    %v5639 = vld [vmem:[%s19 + $0x290] sm:$0xff]
    %v5640 = vld [vmem:[%s19 + $0x298] sm:$0xff]
    %v5641 = vld [vmem:[%s19 + $0x2a0] sm:$0xff]
    %v5642 = vld [vmem:[%s19 + $0x2a8] sm:$0xff]
    %v5643 = vld [vmem:[%s19 + $0x2b0] sm:$0xff]
    %v5644 = vld [vmem:[%s19 + $0x2b8] sm:$0xff]
    %v5645 = vld [vmem:[%s19 + $0x2c0] sm:$0xff]
    %v5646 = vld [vmem:[%s19 + $0x2c8] sm:$0xff]
    %v5647 = vld [vmem:[%s19 + $0x2d0] sm:$0xff]
    %v5648 = vld [vmem:[%s19 + $0x2d8] sm:$0xff]
    %v5649 = vld [vmem:[%s19 + $0x2e0] sm:$0xff]
    %v5650 = vld [vmem:[%s19 + $0x2e8] sm:$0xff]
    %v5651 = vld [vmem:[%s19 + $0x2f0] sm:$0xff]
    %v5652 = vld [vmem:[%s19 + $0x2f8] sm:$0xff]
    %v5653 = vld [vmem:[%s19 + $0x300] sm:$0xff]
    %v5654 = vld [vmem:[%s19 + $0x308] sm:$0xff]
    %v5655 = vld [vmem:[%s19 + $0x310] sm:$0xff]
    %v5656 = vld [vmem:[%s19 + $0x318] sm:$0xff]
    %v5657 = vld [vmem:[%s19 + $0x320] sm:$0xff]
    %v5658 = vld [vmem:[%s19 + $0x328] sm:$0xff]
    %v5659 = vld [vmem:[%s19 + $0x330] sm:$0xff]
    %v5660 = vld [vmem:[%s19 + $0x338] sm:$0xff]
    %v5661 = vld [vmem:[%s19 + $0x340] sm:$0xff]
    %v5662 = vld [vmem:[%s19 + $0x348] sm:$0xff]
    %v5663 = vld [vmem:[%s19 + $0x350] sm:$0xff]
    %v5664 = vld [vmem:[%s19 + $0x358] sm:$0xff]
    %v5665 = vld [vmem:[%s19 + $0x360] sm:$0xff]
    %v5666 = vld [vmem:[%s19 + $0x368] sm:$0xff]
    %v5667 = vld [vmem:[%s19 + $0x370] sm:$0xff]
    %v5668 = vld [vmem:[%s19 + $0x378] sm:$0xff]
    %v5669 = vld [vmem:[%s19 + $0x380] sm:$0xff]
    %v5670 = vld [vmem:[%s19 + $0x388] sm:$0xff]
    %v5671 = vld [vmem:[%s19 + $0x390] sm:$0xff]
    %v5672 = vld [vmem:[%s19 + $0x398] sm:$0xff]
    %v5673 = vld [vmem:[%s19 + $0x3a0] sm:$0xff]
    %v5674 = vld [vmem:[%s19 + $0x3a8] sm:$0xff]
    %v5675 = vld [vmem:[%s19 + $0x3b0] sm:$0xff]
    %v5676 = vld [vmem:[%s19 + $0x3b8] sm:$0xff]
    %v5677 = vld [vmem:[%s19 + $0x3c0] sm:$0xff]
    %v5678 = vld [vmem:[%s19 + $0x3c8] sm:$0xff]
    %v5679 = vld [vmem:[%s19 + $0x3d0] sm:$0xff]
    %v5680 = vld [vmem:[%s19 + $0x3d8] sm:$0xff]
    %v5681 = vld [vmem:[%s19 + $0x3e0] sm:$0xff]
    %v5682 = vld [vmem:[%s19 + $0x3e8] sm:$0xff]
    %v5683 = vld [vmem:[%s19 + $0x3f0] sm:$0xff]
    %v5684 = vld [vmem:[%s19 + $0x3f8] sm:$0xff]
    %v5685 = vld [vmem:[%s20] sm:$0x1]
    %v5687 = vperm.slane %v5685, 0
    %5689 = vmatpush.msra.mxu0 %v5572
    %5690 = vmatpush.msra.mxu0 %v5571
    %5691 = vmatpush.msra.mxu0 %v5570
    %5692 = vmatpush.msra.mxu0 %v5569
    %5693 = vmatpush.msra.mxu0 %v5568
    %5694 = vmatpush.msra.mxu0 %v5567
    %5695 = vmatpush.msra.mxu0 %v5566
    %5696 = vmatpush.msra.mxu0 %v5565
    %5697 = vmatpush.msra.mxu0 %v5564
    %5698 = vmatpush.msra.mxu0 %v5563
    %5699 = vmatpush.msra.mxu0 %v5562
    %5700 = vmatpush.msra.mxu0 %v5561
    %5701 = vmatpush.msra.mxu0 %v5560
    %5702 = vmatpush.msra.mxu0 %v5559
    %5703 = vmatpush.msra.mxu0 %v5558
    %5704 = vmatpush.msra.mxu0 %v5557
    %5705 = vmatmul.f32.gmra.mxu0 %v5549
    %v5706 = vpop.f32.mrf.mxu0
    %v5707 = vadd.f32 %v5687, %v5706
    %5708 = vdwg.mxu0
    %5709 = vmatpush.msra.mxu0 %v5588
    %5710 = vmatpush.msra.mxu0 %v5587
    %5711 = vmatpush.msra.mxu0 %v5586
    %5712 = vmatpush.msra.mxu0 %v5585
    %5713 = vmatpush.msra.mxu0 %v5584
    %5714 = vmatpush.msra.mxu0 %v5583
    %5715 = vmatpush.msra.mxu0 %v5582
    %5716 = vmatpush.msra.mxu0 %v5581
    %5717 = vmatpush.msra.mxu0 %v5580
    %5718 = vmatpush.msra.mxu0 %v5579
    %5719 = vmatpush.msra.mxu0 %v5578
    %5720 = vmatpush.msra.mxu0 %v5577
    %5721 = vmatpush.msra.mxu0 %v5576
    %5722 = vmatpush.msra.mxu0 %v5575
    %5723 = vmatpush.msra.mxu0 %v5574
    %5724 = vmatpush.msra.mxu0 %v5573
    %5725 = vmatmul.f32.gmra.mxu0 %v5550
    %v5726 = vpop.f32.mrf.mxu0
    %v5727 = vadd.f32 %v5707, %v5726
    %5728 = vdwg.mxu0
    %5729 = vmatpush.msra.mxu0 %v5604
    %5730 = vmatpush.msra.mxu0 %v5603
    %5731 = vmatpush.msra.mxu0 %v5602
    %5732 = vmatpush.msra.mxu0 %v5601
    %5733 = vmatpush.msra.mxu0 %v5600
    %5734 = vmatpush.msra.mxu0 %v5599
    %5735 = vmatpush.msra.mxu0 %v5598
    %5736 = vmatpush.msra.mxu0 %v5597
    %5737 = vmatpush.msra.mxu0 %v5596
    %5738 = vmatpush.msra.mxu0 %v5595
    %5739 = vmatpush.msra.mxu0 %v5594
    %5740 = vmatpush.msra.mxu0 %v5593
    %5741 = vmatpush.msra.mxu0 %v5592
    %5742 = vmatpush.msra.mxu0 %v5591
    %5743 = vmatpush.msra.mxu0 %v5590
    %5744 = vmatpush.msra.mxu0 %v5589
    %5745 = vmatmul.f32.gmra.mxu0 %v5551
    %v5746 = vpop.f32.mrf.mxu0
    %v5747 = vadd.f32 %v5727, %v5746
    %5748 = vdwg.mxu0
    %5749 = vmatpush.msra.mxu0 %v5620
    %5750 = vmatpush.msra.mxu0 %v5619
    %5751 = vmatpush.msra.mxu0 %v5618
    %5752 = vmatpush.msra.mxu0 %v5617
    %5753 = vmatpush.msra.mxu0 %v5616
    %5754 = vmatpush.msra.mxu0 %v5615
    %5755 = vmatpush.msra.mxu0 %v5614
    %5756 = vmatpush.msra.mxu0 %v5613
    %5757 = vmatpush.msra.mxu0 %v5612
    %5758 = vmatpush.msra.mxu0 %v5611
    %5759 = vmatpush.msra.mxu0 %v5610
    %5760 = vmatpush.msra.mxu0 %v5609
    %5761 = vmatpush.msra.mxu0 %v5608
    %5762 = vmatpush.msra.mxu0 %v5607
    %5763 = vmatpush.msra.mxu0 %v5606
    %5764 = vmatpush.msra.mxu0 %v5605
    %5765 = vmatmul.f32.gmra.mxu0 %v5552
    %v5766 = vpop.f32.mrf.mxu0
    %v5767 = vadd.f32 %v5747, %v5766
    %5768 = vdwg.mxu0
    %5769 = vmatpush.msra.mxu0 %v5636
    %5770 = vmatpush.msra.mxu0 %v5635
    %5771 = vmatpush.msra.mxu0 %v5634
    %5772 = vmatpush.msra.mxu0 %v5633
    %5773 = vmatpush.msra.mxu0 %v5632
    %5774 = vmatpush.msra.mxu0 %v5631
    %5775 = vmatpush.msra.mxu0 %v5630
    %5776 = vmatpush.msra.mxu0 %v5629
    %5777 = vmatpush.msra.mxu0 %v5628
    %5778 = vmatpush.msra.mxu0 %v5627
    %5779 = vmatpush.msra.mxu0 %v5626
    %5780 = vmatpush.msra.mxu0 %v5625
    %5781 = vmatpush.msra.mxu0 %v5624
    %5782 = vmatpush.msra.mxu0 %v5623
    %5783 = vmatpush.msra.mxu0 %v5622
    %5784 = vmatpush.msra.mxu0 %v5621
    %5785 = vmatmul.f32.gmra.mxu0 %v5553
    %v5786 = vpop.f32.mrf.mxu0
    %v5787 = vadd.f32 %v5767, %v5786
    %5788 = vdwg.mxu0
    %5789 = vmatpush.msra.mxu0 %v5652
    %5790 = vmatpush.msra.mxu0 %v5651
    %5791 = vmatpush.msra.mxu0 %v5650
    %5792 = vmatpush.msra.mxu0 %v5649
    %5793 = vmatpush.msra.mxu0 %v5648
    %5794 = vmatpush.msra.mxu0 %v5647
    %5795 = vmatpush.msra.mxu0 %v5646
    %5796 = vmatpush.msra.mxu0 %v5645
    %5797 = vmatpush.msra.mxu0 %v5644
    %5798 = vmatpush.msra.mxu0 %v5643
    %5799 = vmatpush.msra.mxu0 %v5642
    %5800 = vmatpush.msra.mxu0 %v5641
    %5801 = vmatpush.msra.mxu0 %v5640
    %5802 = vmatpush.msra.mxu0 %v5639
    %5803 = vmatpush.msra.mxu0 %v5638
    %5804 = vmatpush.msra.mxu0 %v5637
    %5805 = vmatmul.f32.gmra.mxu0 %v5554
    %v5806 = vpop.f32.mrf.mxu0
    %v5807 = vadd.f32 %v5787, %v5806
    %5808 = vdwg.mxu0
    %5809 = vmatpush.msra.mxu0 %v5668
    %5810 = vmatpush.msra.mxu0 %v5667
    %5811 = vmatpush.msra.mxu0 %v5666
    %5812 = vmatpush.msra.mxu0 %v5665
    %5813 = vmatpush.msra.mxu0 %v5664
    %5814 = vmatpush.msra.mxu0 %v5663
    %5815 = vmatpush.msra.mxu0 %v5662
    %5816 = vmatpush.msra.mxu0 %v5661
    %5817 = vmatpush.msra.mxu0 %v5660
    %5818 = vmatpush.msra.mxu0 %v5659
    %5819 = vmatpush.msra.mxu0 %v5658
    %5820 = vmatpush.msra.mxu0 %v5657
    %5821 = vmatpush.msra.mxu0 %v5656
    %5822 = vmatpush.msra.mxu0 %v5655
    %5823 = vmatpush.msra.mxu0 %v5654
    %5824 = vmatpush.msra.mxu0 %v5653
    %5825 = vmatmul.f32.gmra.mxu0 %v5555
    %v5826 = vpop.f32.mrf.mxu0
    %v5827 = vadd.f32 %v5807, %v5826
    %5828 = vdwg.mxu0
    %5829 = vmatpush.msra.mxu0 %v5684
    %5830 = vmatpush.msra.mxu0 %v5683
    %5831 = vmatpush.msra.mxu0 %v5682
    %5832 = vmatpush.msra.mxu0 %v5681
    %5833 = vmatpush.msra.mxu0 %v5680
    %5834 = vmatpush.msra.mxu0 %v5679
    %5835 = vmatpush.msra.mxu0 %v5678
    %5836 = vmatpush.msra.mxu0 %v5677
    %5837 = vmatpush.msra.mxu0 %v5676
    %5838 = vmatpush.msra.mxu0 %v5675
    %5839 = vmatpush.msra.mxu0 %v5674
    %5840 = vmatpush.msra.mxu0 %v5673
    %5841 = vmatpush.msra.mxu0 %v5672
    %5842 = vmatpush.msra.mxu0 %v5671
    %5843 = vmatpush.msra.mxu0 %v5670
    %5844 = vmatpush.msra.mxu0 %v5669
    %5845 = vmatmul.f32.gmra.mxu0 %v5556
    %v5846 = vpop.f32.mrf.mxu0
    %v5847 = vadd.f32 %v5827, %v5846
    %5848 = vdwg.mxu0
    %vm5849 = vcmask 58368
    %5850 = vst.msk [vmem:[#allocation3] sm:$0x3] %vm5849, %v5847
    // Predicated region
    $region86: #{san_forward.1} parent=1 // pred_check
      _
    $region87: #{san_forward.1} parent=1 // pred_check_branch
      %5852 = sbr.rel (0) target = $region89
    $region88: #{san_forward.1} parent=1 // pred_region
      %5854 = vsyncadd [#allocation4], 0
      %s5856 = sshll.u32 [#allocation3], 4
      %s5857 = int_to_ptr.vmem [resolvable:$true] %s5856
      %s5858 = sshll.u32 %s21, 4
      %s5859 = int_to_ptr.hbm [resolvable:$true] %s5858
      %5861 = dma.vmem_to_hbm [thread:$0]  %s5857, 32, %s5859, [#allocation4]
    $region89: #{san_forward.1} parent=1 // pred_fallthru
      _
    // Predicated region
    $region90: #{san_forward.1} parent=1 // pred_check
      _
    $region91: #{san_forward.1} parent=1 // pred_check_branch
      %5863 = sbr.rel (0) target = $region93
    $region92: #{san_forward.1} parent=1 // pred_region
      %5865 = dma.done [#allocation4], 32
    $region93: #{san_forward.1} parent=1 // pred_fallthru
      _
    %5866 = vsyncpa [#allocation4], 1

</llo_original>
